<compile_context>
chip_gen: v7x
topology: tpu7x:2x2x1
jax: 0.10.0
libtpu: 0.0.40
codegen_flags: <defaults>
</compile_context>

<pallas_src>
import numpy as np
import jax
import jax.numpy as jnp
from jax.experimental import pallas as pl
from jax.experimental.pallas import tpu as pltpu

# ---------------- configuration (mirrors AdaptiveSpectrumLayer.__init__) ----
INPUT_SIZE    = 4       # F : feature count (layer-norm normalized_shape)
HISTORY_SIZE  = 16      # H : time-axis length
HIDDEN_DIM    = 32
SAMPLING_RATE = 1.0
DROPOUT_RATE  = 0.1     # inactive in eval-mode forward
N_FREQ = HISTORY_SIZE // 2 + 1           # frequency_threshold=None keeps all bins
N_FOURIER_FEATURES = 4                   # magnitude, sin(angle), cos(angle), freq
FFTFREQ = tuple(k * SAMPLING_RATE / HISTORY_SIZE for k in range(N_FREQ))
LN_EPS = 1e-5

P          = 2                               # batch items packed per kernel row
K          = N_FREQ * INPUT_SIZE             # 36  (freq, feature) pairs per item
ROW_WIDTH  = P * HISTORY_SIZE * INPUT_SIZE   # 128 lanes -> dense stores
W_RI       = P * K                           # 72  re (or im) lanes per row
BLOCK_ROWS = 64                              # rows per grid step (= 128 items)


# ------------------------------- kernel -------------------------------------
def _asl_kernel(x_ref, dft_ref, wp_ref, bp_ref, wg_ref, bg_ref,
                idft_ref, avg_ref, gam_ref, bet_ref, o_ref):
    x = x_ref[...]                                               # (BR, 128)

    # rfft (ortho) of all P*BR items in one matmul; [re | im] along lanes.
    reim = jnp.dot(x, dft_ref[...], preferred_element_type=jnp.float32)
    re, im = reim[:, :W_RI], reim[:, W_RI:]

    # magnitude / sin / cos of the phase with a single rsqrt (EUP slot).
    s = re * re + im * im
    pos = s > 0.0
    inv = jnp.where(pos, jax.lax.rsqrt(jnp.where(pos, s, 1.0)), 0.0)
    mag = s * inv
    sin_a = im * inv
    cos_a = jnp.where(pos, re * inv, 1.0)      # angle(0)=0 -> cos=1, sin=0

    # per-frequency Linear(4 -> hidden)+ReLU, then the flattened gate linear,
    # each as one contraction over the packed lane axis.
    ff = jnp.concatenate([mag, sin_a, cos_a], axis=1)            # (BR, 3*P*K)
    proj = jnp.maximum(
        jnp.dot(ff, wp_ref[...], preferred_element_type=jnp.float32)
        + bp_ref[...], 0.0)                                      # (BR, P*K*HID)
    z = (jnp.dot(proj, wg_ref[...], preferred_element_type=jnp.float32)
         + bg_ref[...])                                          # (BR, P*K)
    w = jax.nn.sigmoid(z * jax.nn.sigmoid(z))                    # fft weights

    # weighted spectrum + irfft (ortho) in one matmul.
    reim_w = reim * jnp.concatenate([w, w], axis=1)
    recon = jnp.dot(reim_w, idft_ref[...], preferred_element_type=jnp.float32)

    # LayerNorm over the F features of (recon + x).  AVG is block-diagonal per
    # (item, timestep), so statistics never mix across packed items.
    y = recon + x
    mean = jnp.dot(y, avg_ref[...], preferred_element_type=jnp.float32)
    d = y - mean
    var = jnp.dot(d * d, avg_ref[...], preferred_element_type=jnp.float32)
    o_ref[...] = d * jax.lax.rsqrt(var + LN_EPS) * gam_ref[...] + bet_ref[...]


# ------------------------------- wrapper ------------------------------------
def adaptive_spectrum_layer(x, consts, *, block_rows=BLOCK_ROWS):
    """x: (B, H, F) float32 (PyTorch layout). Returns (B, H, F)."""
    B = x.shape[0]
    items_per_block = P * block_rows
    Bp = ((B + items_per_block - 1) // items_per_block) * items_per_block
    xp = jnp.pad(x, ((0, Bp - B), (0, 0), (0, 0))) if Bp != B else x
    rows = Bp // P
    xr = xp.reshape(rows, ROW_WIDTH)             # free row-major repack

    def full(a):
        return pl.BlockSpec(a.shape, lambda b, nd=a.ndim: (0,) * nd)

    out = pl.pallas_call(
        _asl_kernel,
        out_shape=jax.ShapeDtypeStruct((rows, ROW_WIDTH), jnp.float32),
        grid=(rows // block_rows,),
        in_specs=[pl.BlockSpec((block_rows, ROW_WIDTH), lambda b: (b, 0))]
                 + [full(c) for c in consts],
        out_specs=pl.BlockSpec((block_rows, ROW_WIDTH), lambda b: (b, 0)),
        compiler_params=pltpu.CompilerParams(dimension_semantics=("parallel",)),
    )(xr, *consts)

    out = out.reshape(Bp, HISTORY_SIZE, INPUT_SIZE)
    return out[:B] if Bp != B else out


# --------------------- parameters & fused constant matrices -----------------
def make_params(key):
    """Deterministic synthetic weights, in PyTorch Linear layouts."""
    kp, kpb, kg, kgb, kgm, kbt = jax.random.split(key, 6)
    return dict(
        Wp=0.3 * jax.random.normal(kp, (HIDDEN_DIM, N_FOURIER_FEATURES), jnp.float32),
        bp=0.1 * jax.random.normal(kpb, (HIDDEN_DIM,), jnp.float32),
        Wg=0.05 * jax.random.normal(kg, (N_FREQ, N_FREQ * HIDDEN_DIM), jnp.float32),
        bg=0.1 * jax.random.normal(kgb, (N_FREQ,), jnp.float32),
        gamma=1.0 + 0.1 * jax.random.normal(kgm, (INPUT_SIZE,), jnp.float32),
        beta=0.1 * jax.random.normal(kbt, (INPUT_SIZE,), jnp.float32),
    )


def build_kernel_constants(p):
    """Host-side fused/block-diagonal matrices for the lane-packed layout."""
    Wp = np.asarray(p["Wp"], np.float64)       # (HID, 4)
    bp = np.asarray(p["bp"], np.float64)       # (HID,)
    Wg = np.asarray(p["Wg"], np.float64)       # (NF, NF*HID)
    bg = np.asarray(p["bg"], np.float64)       # (NF,)
    gamma = np.asarray(p["gamma"], np.float64)
    beta = np.asarray(p["beta"], np.float64)
    freqs = np.asarray(FFTFREQ, np.float64)

    H, F, NF, HID = HISTORY_SIZE, INPUT_SIZE, N_FREQ, HIDDEN_DIM
    eyeP, eyeF, eyeK = np.eye(P), np.eye(F), np.eye(K)

    # --- DFT matrices (rfft / irfft, norm='ortho') ---------------------------
    ang = 2.0 * np.pi * np.outer(np.arange(H), np.arange(NF)) / H    # (H, NF)
    s = 1.0 / np.sqrt(H)
    cft = np.cos(ang) * s                       # re = x @ cft
    sft = -np.sin(ang) * s                      # im = x @ sft
    wk = np.full(NF, 2.0)
    wk[0] = 1.0
    if H % 2 == 0:
        wk[-1] = 1.0                            # DC / Nyquist counted once
    cit = (wk[None, :] * np.cos(ang) * s).T     # (NF, H)
    sit = (-(wk[None, :]) * np.sin(ang) * s).T  # (NF, H)

    # rows (p,h,f) -> cols [re | im], each (q,n,g); feature/pack passthrough.
    dft_re = np.einsum('pq,hn,fg->phfqng', eyeP, cft, eyeF).reshape(P * H * F, P * K)
    dft_im = np.einsum('pq,hn,fg->phfqng', eyeP, sft, eyeF).reshape(P * H * F, P * K)
    DFT_RI = np.concatenate([dft_re, dft_im], axis=1)            # (P*H*F, 2*P*K)

    idft_re = np.einsum('pq,nh,fg->pnfqhg', eyeP, cit, eyeF).reshape(P * K, P * H * F)
    idft_im = np.einsum('pq,nh,fg->pnfqhg', eyeP, sit, eyeF).reshape(P * K, P * H * F)
    IDFT = np.concatenate([idft_re, idft_im], axis=0)            # (2*P*K, P*H*F)

    # --- per-frequency Linear(4 -> hidden) as one block matmul --------------
    # ff cols: c*(P*K) + p*K + k   ->   proj cols: p*K*HID + k*HID + h
    wp3 = Wp[:, :3]                                              # mag/sin/cos weights
    WP_BIG = np.einsum('hc,pq,kl->cpkqlh', wp3, eyeP, eyeK).reshape(3 * P * K, P * K * HID)
    bias_nh = bp[None, :] + freqs[:, None] * Wp[:, 3][None, :]   # freq feature folded in
    BP_BIG = np.tile(np.repeat(bias_nh, F, axis=0).reshape(-1), P)[None, :]

    # --- gate Linear(NF*HID -> NF), applied per feature f --------------------
    # torch flatten 'b n f h -> b 1 f (h n)':  input index = h*NF + n
    G = np.transpose(Wg.reshape(NF, HID, NF), (2, 1, 0))         # G[n, h, m]
    WG_BIG = np.einsum('pq,fg,nhm->pnfhqmg', eyeP, eyeF, G).reshape(P * K * HID, P * K)
    BG_BIG = np.tile(np.repeat(bg, F), P)[None, :]               # (1, P*K)

    # --- LayerNorm(F) mean/var via block-diagonal averaging matmul -----------
    AVG = np.einsum('pq,hk,fg->phfqkg', eyeP, np.eye(H),
                    np.full((F, F), 1.0 / F)).reshape(P * H * F, P * H * F)
    GAM = np.tile(gamma, P * H)[None, :]                         # (1, P*H*F)
    BET = np.tile(beta, P * H)[None, :]

    return tuple(jnp.asarray(m, dtype=jnp.float32) for m in
                 (DFT_RI, WP_BIG, BP_BIG, WG_BIG, BG_BIG, IDFT, AVG, GAM, BET))


# ------------------------- plain-JAX reference ------------------------------
def reference_forward(x, p):
    B, H, F = x.shape
    fft = jnp.fft.rfft(x, axis=1, norm="ortho")[:, :N_FREQ, :]          # (B, NF, F)
    mag, ang = jnp.abs(fft), jnp.angle(fft)
    ff = jnp.stack([mag, jnp.sin(ang), jnp.cos(ang)], axis=-1)          # (B, NF, F, 3)
    freqs = jnp.asarray(FFTFREQ, jnp.float32)
    ff = jnp.concatenate(
        [ff, jnp.broadcast_to(freqs[None, :, None, None], (B, N_FREQ, F, 1))], axis=-1)
    proj = jax.nn.relu(jnp.einsum("bnfc,hc->bnfh", ff, p["Wp"]) + p["bp"])
    flat = jnp.transpose(proj, (0, 2, 3, 1)).reshape(B, 1, F, HIDDEN_DIM * N_FREQ)
    z = jnp.einsum("bofk,mk->bofm", flat, p["Wg"]) + p["bg"]
    g = z * jax.nn.sigmoid(z)
    weights = jax.nn.sigmoid(g)                                         # (B, 1, F, NF)
    w = jnp.transpose(weights[:, 0], (0, 2, 1))                         # (B, NF, F)
    recon = jnp.fft.irfft(fft * w, n=H, axis=1, norm="ortho")           # (B, H, F)
    y = recon + x
    mean = jnp.mean(y, axis=-1, keepdims=True)
    var = jnp.mean((y - mean) ** 2, axis=-1, keepdims=True)
    return (y - mean) / jnp.sqrt(var + LN_EPS) * p["gamma"] + p["beta"]


# --------------------------------- main --------------------------------------
if __name__ == "__main__":
    key = jax.random.PRNGKey(0)
    kx, kp = jax.random.split(key)
    B = 256                                     # -> 2 grid steps of 128 items each
    x = jax.random.normal(kx, (B, HISTORY_SIZE, INPUT_SIZE), jnp.float32)

    p = make_params(kp)
    consts = build_kernel_constants(p)

    out = jax.block_until_ready(adaptive_spectrum_layer(x, consts))
    ref = jax.block_until_ready(reference_forward(x, p))

    err = np.max(np.abs(np.asarray(out) - np.asarray(ref)))
    if not np.allclose(np.asarray(out), np.asarray(ref), atol=2e-3, rtol=2e-3):
        raise AssertionError(f"Pallas kernel mismatch vs reference, max abs err = {err}")
    print("KERNEL_OK")
</pallas_src>

<mosaic_0001>
module attributes {stable_mosaic.version = 11 : i64} {
  func.func @_asl_kernel(%arg0: i32, %arg1: memref<64x128xf32, #tpu.memory_space<vmem>>, %arg2: memref<128x144xf32, #tpu.memory_space<vmem>>, %arg3: memref<216x2304xf32, #tpu.memory_space<vmem>>, %arg4: memref<1x2304xf32, #tpu.memory_space<vmem>>, %arg5: memref<2304x72xf32, #tpu.memory_space<vmem>>, %arg6: memref<1x72xf32, #tpu.memory_space<vmem>>, %arg7: memref<144x128xf32, #tpu.memory_space<vmem>>, %arg8: memref<128x128xf32, #tpu.memory_space<vmem>>, %arg9: memref<1x128xf32, #tpu.memory_space<vmem>>, %arg10: memref<1x128xf32, #tpu.memory_space<vmem>>, %arg11: memref<64x128xf32, #tpu.memory_space<vmem>>) attributes {dimension_semantics = [#tpu.dimension_semantics<parallel>], iteration_bounds = array<i64: 2>, scalar_prefetch = 0 : i64, scratch_operands = 0 : i64, tpu.core_type = #tpu.core_type<tc>, window_params = [{transform_indices = @transform_0, window_bounds = array<i64: 64, 128>}, {pipeline_mode = #tpu.pipeline_mode<synchronous>, transform_indices = @transform_1, window_bounds = array<i64: 128, 144>}, {pipeline_mode = #tpu.pipeline_mode<synchronous>, transform_indices = @transform_2, window_bounds = array<i64: 216, 2304>}, {pipeline_mode = #tpu.pipeline_mode<synchronous>, transform_indices = @transform_3, window_bounds = array<i64: 1, 2304>}, {pipeline_mode = #tpu.pipeline_mode<synchronous>, transform_indices = @transform_4, window_bounds = array<i64: 2304, 72>}, {pipeline_mode = #tpu.pipeline_mode<synchronous>, transform_indices = @transform_5, window_bounds = array<i64: 1, 72>}, {pipeline_mode = #tpu.pipeline_mode<synchronous>, transform_indices = @transform_6, window_bounds = array<i64: 144, 128>}, {pipeline_mode = #tpu.pipeline_mode<synchronous>, transform_indices = @transform_7, window_bounds = array<i64: 128, 128>}, {pipeline_mode = #tpu.pipeline_mode<synchronous>, transform_indices = @transform_8, window_bounds = array<i64: 1, 128>}, {pipeline_mode = #tpu.pipeline_mode<synchronous>, transform_indices = @transform_9, window_bounds = array<i64: 1, 128>}, {transform_indices = @transform_10, window_bounds = array<i64: 64, 128>}]} {
    %c0 = arith.constant 0 : index
    %c0_0 = arith.constant 0 : index
    %0 = vector.load %arg1[%c0, %c0_0] : memref<64x128xf32, #tpu.memory_space<vmem>>, vector<64x128xf32>
    %c0_1 = arith.constant 0 : index
    %c0_2 = arith.constant 0 : index
    %1 = vector.load %arg2[%c0_1, %c0_2] : memref<128x144xf32, #tpu.memory_space<vmem>>, vector<128x144xf32>
    %cst = arith.constant dense<0.000000e+00> : vector<64x144xf32>
    %2 = tpu.matmul %0, %1, %cst {dimension_numbers = #tpu.dot_dimension_numbers<[1], [0], [0], [1], [0, 0, 1, 1], [], []>} : vector<64x128xf32>, vector<128x144xf32>, vector<64x144xf32> -> vector<64x144xf32>
    %3 = vector.extract_strided_slice %2 {offsets = [0, 0], sizes = [64, 72], strides = [1, 1]} : vector<64x144xf32> to vector<64x72xf32>
    %4 = vector.extract_strided_slice %2 {offsets = [0, 72], sizes = [64, 72], strides = [1, 1]} : vector<64x144xf32> to vector<64x72xf32>
    %5 = arith.mulf %3, %3 : vector<64x72xf32>
    %6 = arith.mulf %4, %4 : vector<64x72xf32>
    %7 = arith.addf %5, %6 : vector<64x72xf32>
    %cst_3 = arith.constant 0.000000e+00 : f32
    %8 = vector.broadcast %cst_3 : f32 to vector<64x72xf32>
    %9 = arith.cmpf ogt, %7, %8 : vector<64x72xf32>
    %cst_4 = arith.constant 1.000000e+00 : f32
    %10 = vector.broadcast %cst_4 : f32 to vector<64x72xf32>
    %11 = arith.select %9, %7, %10 : vector<64x72xi1>, vector<64x72xf32>
    %12 = math.rsqrt %11 : vector<64x72xf32>
    %cst_5 = arith.constant 0.000000e+00 : f32
    %13 = vector.broadcast %cst_5 : f32 to vector<64x72xf32>
    %14 = arith.select %9, %12, %13 : vector<64x72xi1>, vector<64x72xf32>
    %15 = arith.mulf %7, %14 : vector<64x72xf32>
    %16 = arith.mulf %4, %14 : vector<64x72xf32>
    %17 = arith.mulf %3, %14 : vector<64x72xf32>
    %cst_6 = arith.constant 1.000000e+00 : f32
    %18 = vector.broadcast %cst_6 : f32 to vector<64x72xf32>
    %19 = arith.select %9, %17, %18 : vector<64x72xi1>, vector<64x72xf32>
    %20 = tpu.concatenate %15, %16, %19 in 1 : vector<64x72xf32>, vector<64x72xf32>, vector<64x72xf32> -> vector<64x216xf32>
    %c0_7 = arith.constant 0 : index
    %c0_8 = arith.constant 0 : index
    %21 = vector.load %arg3[%c0_7, %c0_8] : memref<216x2304xf32, #tpu.memory_space<vmem>>, vector<216x2304xf32>
    %cst_9 = arith.constant dense<0.000000e+00> : vector<64x2304xf32>
    %22 = tpu.matmul %20, %21, %cst_9 {dimension_numbers = #tpu.dot_dimension_numbers<[1], [0], [0], [1], [0, 0, 1, 1], [], []>} : vector<64x216xf32>, vector<216x2304xf32>, vector<64x2304xf32> -> vector<64x2304xf32>
    %c0_10 = arith.constant 0 : index
    %c0_11 = arith.constant 0 : index
    %23 = vector.load %arg4[%c0_10, %c0_11] : memref<1x2304xf32, #tpu.memory_space<vmem>>, vector<1x2304xf32>
    %24 = vector.broadcast %23 : vector<1x2304xf32> to vector<64x2304xf32>
    %25 = arith.addf %22, %24 : vector<64x2304xf32>
    %cst_12 = arith.constant 0.000000e+00 : f32
    %26 = vector.broadcast %cst_12 : f32 to vector<64x2304xf32>
    %27 = arith.maximumf %25, %26 : vector<64x2304xf32>
    %c0_13 = arith.constant 0 : index
    %c0_14 = arith.constant 0 : index
    %28 = vector.load %arg5[%c0_13, %c0_14] : memref<2304x72xf32, #tpu.memory_space<vmem>>, vector<2304x72xf32>
    %cst_15 = arith.constant dense<0.000000e+00> : vector<64x72xf32>
    %29 = tpu.matmul %27, %28, %cst_15 {dimension_numbers = #tpu.dot_dimension_numbers<[1], [0], [0], [1], [0, 0, 1, 1], [], []>} : vector<64x2304xf32>, vector<2304x72xf32>, vector<64x72xf32> -> vector<64x72xf32>
    %c0_16 = arith.constant 0 : index
    %c0_17 = arith.constant 0 : index
    %30 = vector.load %arg6[%c0_16, %c0_17] : memref<1x72xf32, #tpu.memory_space<vmem>>, vector<1x72xf32>
    %31 = vector.broadcast %30 : vector<1x72xf32> to vector<64x72xf32>
    %32 = arith.addf %29, %31 : vector<64x72xf32>
    %33 = arith.negf %32 : vector<64x72xf32>
    %34 = math.exp %33 : vector<64x72xf32>
    %cst_18 = arith.constant 1.000000e+00 : f32
    %35 = vector.broadcast %cst_18 : f32 to vector<64x72xf32>
    %36 = arith.addf %35, %34 : vector<64x72xf32>
    %37 = arith.divf %35, %36 : vector<64x72xf32>
    %38 = arith.mulf %32, %37 : vector<64x72xf32>
    %39 = arith.negf %38 : vector<64x72xf32>
    %40 = math.exp %39 : vector<64x72xf32>
    %cst_19 = arith.constant 1.000000e+00 : f32
    %41 = vector.broadcast %cst_19 : f32 to vector<64x72xf32>
    %42 = arith.addf %41, %40 : vector<64x72xf32>
    %43 = arith.divf %41, %42 : vector<64x72xf32>
    %44 = tpu.concatenate %43, %43 in 1 : vector<64x72xf32>, vector<64x72xf32> -> vector<64x144xf32>
    %45 = arith.mulf %2, %44 : vector<64x144xf32>
    %c0_20 = arith.constant 0 : index
    %c0_21 = arith.constant 0 : index
    %46 = vector.load %arg7[%c0_20, %c0_21] : memref<144x128xf32, #tpu.memory_space<vmem>>, vector<144x128xf32>
    %cst_22 = arith.constant dense<0.000000e+00> : vector<64x128xf32>
    %47 = tpu.matmul %45, %46, %cst_22 {dimension_numbers = #tpu.dot_dimension_numbers<[1], [0], [0], [1], [0, 0, 1, 1], [], []>} : vector<64x144xf32>, vector<144x128xf32>, vector<64x128xf32> -> vector<64x128xf32>
    %48 = arith.addf %47, %0 : vector<64x128xf32>
    %c0_23 = arith.constant 0 : index
    %c0_24 = arith.constant 0 : index
    %49 = vector.load %arg8[%c0_23, %c0_24] : memref<128x128xf32, #tpu.memory_space<vmem>>, vector<128x128xf32>
    %cst_25 = arith.constant dense<0.000000e+00> : vector<64x128xf32>
    %50 = tpu.matmul %48, %49, %cst_25 {dimension_numbers = #tpu.dot_dimension_numbers<[1], [0], [0], [1], [0, 0, 1, 1], [], []>} : vector<64x128xf32>, vector<128x128xf32>, vector<64x128xf32> -> vector<64x128xf32>
    %51 = arith.subf %48, %50 : vector<64x128xf32>
    %52 = arith.mulf %51, %51 : vector<64x128xf32>
    %c0_26 = arith.constant 0 : index
    %c0_27 = arith.constant 0 : index
    %53 = vector.load %arg8[%c0_26, %c0_27] : memref<128x128xf32, #tpu.memory_space<vmem>>, vector<128x128xf32>
    %cst_28 = arith.constant dense<0.000000e+00> : vector<64x128xf32>
    %54 = tpu.matmul %52, %53, %cst_28 {dimension_numbers = #tpu.dot_dimension_numbers<[1], [0], [0], [1], [0, 0, 1, 1], [], []>} : vector<64x128xf32>, vector<128x128xf32>, vector<64x128xf32> -> vector<64x128xf32>
    %cst_29 = arith.constant 9.99999974E-6 : f32
    %55 = vector.broadcast %cst_29 : f32 to vector<64x128xf32>
    %56 = arith.addf %54, %55 : vector<64x128xf32>
    %57 = math.rsqrt %56 : vector<64x128xf32>
    %58 = arith.mulf %51, %57 : vector<64x128xf32>
    %c0_30 = arith.constant 0 : index
    %c0_31 = arith.constant 0 : index
    %59 = vector.load %arg9[%c0_30, %c0_31] : memref<1x128xf32, #tpu.memory_space<vmem>>, vector<1x128xf32>
    %60 = vector.broadcast %59 : vector<1x128xf32> to vector<64x128xf32>
    %61 = arith.mulf %58, %60 : vector<64x128xf32>
    %c0_32 = arith.constant 0 : index
    %c0_33 = arith.constant 0 : index
    %62 = vector.load %arg10[%c0_32, %c0_33] : memref<1x128xf32, #tpu.memory_space<vmem>>, vector<1x128xf32>
    %63 = vector.broadcast %62 : vector<1x128xf32> to vector<64x128xf32>
    %64 = arith.addf %61, %63 : vector<64x128xf32>
    %c0_34 = arith.constant 0 : index
    %c0_35 = arith.constant 0 : index
    %65 = vector.load %arg11[%c0_34, %c0_35] : memref<64x128xf32, #tpu.memory_space<vmem>>, vector<64x128xf32>
    tpu.vector_store %arg11[%c0_34, %c0_35], %64 {strides = array<i32>} : memref<64x128xf32, #tpu.memory_space<vmem>>, vector<64x128xf32>,
    return
  }
  func.func @transform_0(%arg0: i32) -> (i32, i32) {
    %c0_i32 = arith.constant 0 : i32
    %c0_i32_0 = arith.constant 0 : i32
    return %arg0, %c0_i32 : i32, i32
  }
  func.func @transform_1(%arg0: i32) -> (i32, i32) {
    %c0_i32 = arith.constant 0 : i32
    %c0_i32_0 = arith.constant 0 : i32
    %c0_i32_1 = arith.constant 0 : i32
    return %c0_i32, %c0_i32_0 : i32, i32
  }
  func.func @transform_2(%arg0: i32) -> (i32, i32) {
    %c0_i32 = arith.constant 0 : i32
    %c0_i32_0 = arith.constant 0 : i32
    %c0_i32_1 = arith.constant 0 : i32
    return %c0_i32, %c0_i32_0 : i32, i32
  }
  func.func @transform_3(%arg0: i32) -> (i32, i32) {
    %c0_i32 = arith.constant 0 : i32
    %c0_i32_0 = arith.constant 0 : i32
    %c0_i32_1 = arith.constant 0 : i32
    return %c0_i32, %c0_i32_0 : i32, i32
  }
  func.func @transform_4(%arg0: i32) -> (i32, i32) {
    %c0_i32 = arith.constant 0 : i32
    %c0_i32_0 = arith.constant 0 : i32
    %c0_i32_1 = arith.constant 0 : i32
    return %c0_i32, %c0_i32_0 : i32, i32
  }
  func.func @transform_5(%arg0: i32) -> (i32, i32) {
    %c0_i32 = arith.constant 0 : i32
    %c0_i32_0 = arith.constant 0 : i32
    %c0_i32_1 = arith.constant 0 : i32
    return %c0_i32, %c0_i32_0 : i32, i32
  }
  func.func @transform_6(%arg0: i32) -> (i32, i32) {
    %c0_i32 = arith.constant 0 : i32
    %c0_i32_0 = arith.constant 0 : i32
    %c0_i32_1 = arith.constant 0 : i32
    return %c0_i32, %c0_i32_0 : i32, i32
  }
  func.func @transform_7(%arg0: i32) -> (i32, i32) {
    %c0_i32 = arith.constant 0 : i32
    %c0_i32_0 = arith.constant 0 : i32
    %c0_i32_1 = arith.constant 0 : i32
    return %c0_i32, %c0_i32_0 : i32, i32
  }
  func.func @transform_8(%arg0: i32) -> (i32, i32) {
    %c0_i32 = arith.constant 0 : i32
    %c0_i32_0 = arith.constant 0 : i32
    %c0_i32_1 = arith.constant 0 : i32
    return %c0_i32, %c0_i32_0 : i32, i32
  }
  func.func @transform_9(%arg0: i32) -> (i32, i32) {
    %c0_i32 = arith.constant 0 : i32
    %c0_i32_0 = arith.constant 0 : i32
    %c0_i32_1 = arith.constant 0 : i32
    return %c0_i32, %c0_i32_0 : i32, i32
  }
  func.func @transform_10(%arg0: i32) -> (i32, i32) {
    %c0_i32 = arith.constant 0 : i32
    %c0_i32_0 = arith.constant 0 : i32
    return %arg0, %c0_i32 : i32, i32
  }
}

</mosaic_0001>

<llo_original>
// kernel: tpu_custom_call.1
$region0: #{tpu_custom_call.1}
  #allocation0 [shape = 'u32[]', space=smem, size = 0x4, offset = 0x4, fixed_abs, tag = 'smem constant byte address 0x4 - core index']
  #allocation1 [shape = 'u32[144,128]{1,0:T(1,128)}', space=vmem, size = 0x12000, scoped, tag = 'internal scratch']
  %s0 = inlined_call_operand.hbm [shape: f32[128,128], index: 0, kind: input, shape index: {}]
  %s1 = inlined_call_operand.vmem [shape: f32[128,144], index: 1, kind: input, shape index: {}]
  %s2 = inlined_call_operand.vmem [shape: f32[216,2304], index: 2, kind: input, shape index: {}]
  %s3 = inlined_call_operand.hbm [shape: f32[1,2304], index: 3, kind: input, shape index: {}]
  %s4 = inlined_call_operand.vmem [shape: f32[2304,72], index: 4, kind: input, shape index: {}]
  %s5 = inlined_call_operand.vmem [shape: f32[1,72], index: 5, kind: input, shape index: {}]
  %s6 = inlined_call_operand.hbm [shape: f32[144,128], index: 6, kind: input, shape index: {}]
  %s7 = inlined_call_operand.vmem [shape: f32[128,128], index: 7, kind: input, shape index: {}]
  %s8 = inlined_call_operand.vmem [shape: f32[1,128], index: 8, kind: input, shape index: {}]
  %s9 = inlined_call_operand.vmem [shape: f32[1,128], index: 9, kind: input, shape index: {}]
  %s10 = inlined_call_operand.hbm [shape: f32[128,128], index: 10, kind: output, shape index: {}]
  %s11 = sld [smem:[#allocation0]]
  $region85: #{tpu_custom_call.1} parent=0
    _
  %s13 = ssub.s32 1, %s11
  %s14 = scalar_select 0, %s13, %s11
  $region1: #{tpu_custom_call.1} parent=0
    #allocation2 [shape = 'u8[65536]{0}', space=vmem, size = 0x10000, scoped, tag = 'input window, operand 0']
    #allocation3 [shape = 's32[2]{0}', space=sflag, size = 0x8, scoped, tag = 'scoped memory for tpu_custom_call.1']
    #allocation4 [shape = 's32[2]{0}', space=sflag, size = 0x8, scoped, tag = 'scoped memory for tpu_custom_call.1']
    #allocation5 [shape = 'u8[9216]{0}', space=vmem, size = 0x2400, scoped, tag = 'input window, operand 3, single buffered']
    #allocation6 [shape = 's32[1]{0}', space=sflag, size = 0x4, scoped, tag = 'scoped memory for tpu_custom_call.1']
    #allocation7 [shape = 'u8[73728]{0}', space=vmem, size = 0x12000, scoped, tag = 'input window, operand 6, single buffered']
    #allocation8 [shape = 'u8[65536]{0}', space=vmem, size = 0x10000, scoped, tag = 'output window, operand 0']
    %15 = vsyncpa [#allocation3], 0
    %s16 = scalar_lea.sflag [#allocation3], 1
    %17 = vsyncpa %s16, 0
    %18 = vsyncpa [#allocation6], 0
    %19 = vsyncpa [#allocation4], 0
    %s20 = scalar_lea.sflag [#allocation4], 1
    %21 = vsyncpa %s20, 0
    loop: start=0, step=1, limit=4
    $region2: #{tpu_custom_call.1} parent=1 // loop_pre_header
      _
    $region3: #{tpu_custom_call.1} parent=1 // loop_header
      %s23 = sphi 0, %s27
      %p24 = scmp.ge.s32.totalorder %s23, 4
      %s33 = sphi 0, %s35
      %s36 = sphi 0, %s33
      %s37 = sphi 0, %s36
      %s53 = sphi 0, %s37
      %s57 = sphi 0, %s57
      %s59 = sphi 0, %s57
      %s60 = sphi 0, %s59
      %s74 = sphi 0, %s60
      %s78 = sphi 0, %s78
      %s80 = sphi 0, %s78
      %s81 = sphi 0, %s80
      %s95 = sphi 0, %s81
      %s99 = sphi 0, %s99
      %s101 = sphi 0, %s99
      %s102 = sphi 0, %s101
      %s116 = sphi 0, %s102
      %s120 = sphi 0, %s120
      %s122 = sphi 0, %s120
      %s123 = sphi 0, %s122
      %s137 = sphi 0, %s123
      %s141 = sphi 0, %s141
      %s143 = sphi 0, %s141
      %s144 = sphi 0, %s143
      %s158 = sphi 0, %s144
      %s162 = sphi 0, %s162
      %s164 = sphi 0, %s162
      %s165 = sphi 0, %s164
      %s179 = sphi 0, %s165
      %s183 = sphi 0, %s183
      %s185 = sphi 0, %s183
      %s186 = sphi 0, %s185
      %s200 = sphi 0, %s186
      %s204 = sphi 0, %s204
      %s206 = sphi 0, %s204
      %s207 = sphi 0, %s206
      %s221 = sphi 0, %s207
      %s225 = sphi 0, %s225
      %s227 = sphi 0, %s225
      %s228 = sphi 0, %s227
      %s242 = sphi 0, %s228
      %s248 = sphi 0, %s250
      %s251 = sphi 0, %s248
      %s252 = sphi 0, %s251
      %s268 = sphi 0, %s252
    $region4: #{tpu_custom_call.1} parent=1 // loop_header_branch
      %26 = sbr.rel (%p24) target = $region8
    $region5: #{tpu_custom_call.1} parent=1 // loop_body
      %s28 = ssub.s32 %s23, 1
      %s29 = ssub.s32 %s23, 2
      %s30 = sadd.s32 %s23, 1
      %s31 = ssub.s32 %s23, %s30
      %p32 = scmp.eq.s32.totalorder %s31, 0
      %s34 = sadd.s32 %s33, 1
      %s35 = scalar_select %p32, %s33, %s34
      %p38 = pneg %p32
      %p39 = scmp.eq.s32.totalorder %s23, 1
      %p40 = por %p38, %p39
      %p41 = scmp.ne.s32.totalorder %s33, %s36
      %p42 = scmp.eq.s32.totalorder %s23, 0
      %p43 = por %p41, %p42
      %p44 = scmp.ne.s32.totalorder %s33, %s36
      %p45 = scmp.eq.s32.totalorder %s28, 1
      %p46 = por %p44, %p45
      %p47 = scmp.ne.s32.totalorder %s36, %s37
      %p48 = scmp.eq.s32.totalorder %s28, 0
      %p49 = por %p47, %p48
      %p50 = scmp.ne.s32.totalorder %s36, %s37
      %p51 = scmp.eq.s32.totalorder %s29, 1
      %p52 = por %p50, %p51
      %p54 = scmp.ne.s32.totalorder %s37, %s53
      %p55 = scmp.eq.s32.totalorder %s29, 0
      %p56 = por %p54, %p55
      %s58 = sadd.s32 %s57, 1
      %p61 = scmp.eq.s32.totalorder %s23, 1
      %p62 = scmp.ne.s32.totalorder %s57, %s59
      %p63 = scmp.eq.s32.totalorder %s23, 0
      %p64 = por %p62, %p63
      %p65 = scmp.ne.s32.totalorder %s57, %s59
      %p66 = scmp.eq.s32.totalorder %s28, 1
      %p67 = por %p65, %p66
      %p68 = scmp.ne.s32.totalorder %s59, %s60
      %p69 = scmp.eq.s32.totalorder %s28, 0
      %p70 = por %p68, %p69
      %p71 = scmp.ne.s32.totalorder %s59, %s60
      %p72 = scmp.eq.s32.totalorder %s29, 1
      %p73 = por %p71, %p72
      %p75 = scmp.ne.s32.totalorder %s60, %s74
      %p76 = scmp.eq.s32.totalorder %s29, 0
      %p77 = por %p75, %p76
      %s79 = sadd.s32 %s78, 1
      %p82 = scmp.eq.s32.totalorder %s23, 1
      %p83 = scmp.ne.s32.totalorder %s78, %s80
      %p84 = scmp.eq.s32.totalorder %s23, 0
      %p85 = por %p83, %p84
      %p86 = scmp.ne.s32.totalorder %s78, %s80
      %p87 = scmp.eq.s32.totalorder %s28, 1
      %p88 = por %p86, %p87
      %p89 = scmp.ne.s32.totalorder %s80, %s81
      %p90 = scmp.eq.s32.totalorder %s28, 0
      %p91 = por %p89, %p90
      %p92 = scmp.ne.s32.totalorder %s80, %s81
      %p93 = scmp.eq.s32.totalorder %s29, 1
      %p94 = por %p92, %p93
      %p96 = scmp.ne.s32.totalorder %s81, %s95
      %p97 = scmp.eq.s32.totalorder %s29, 0
      %p98 = por %p96, %p97
      %s100 = sadd.s32 %s99, 1
      %p103 = scmp.eq.s32.totalorder %s23, 1
      %p104 = scmp.ne.s32.totalorder %s99, %s101
      %p105 = scmp.eq.s32.totalorder %s23, 0
      %p106 = por %p104, %p105
      %p107 = scmp.ne.s32.totalorder %s99, %s101
      %p108 = scmp.eq.s32.totalorder %s28, 1
      %p109 = por %p107, %p108
      %p110 = scmp.ne.s32.totalorder %s101, %s102
      %p111 = scmp.eq.s32.totalorder %s28, 0
      %p112 = por %p110, %p111
      %p113 = scmp.ne.s32.totalorder %s101, %s102
      %p114 = scmp.eq.s32.totalorder %s29, 1
      %p115 = por %p113, %p114
      %p117 = scmp.ne.s32.totalorder %s102, %s116
      %p118 = scmp.eq.s32.totalorder %s29, 0
      %p119 = por %p117, %p118
      %s121 = sadd.s32 %s120, 1
      %p124 = scmp.eq.s32.totalorder %s23, 1
      %p125 = scmp.ne.s32.totalorder %s120, %s122
      %p126 = scmp.eq.s32.totalorder %s23, 0
      %p127 = por %p125, %p126
      %p128 = scmp.ne.s32.totalorder %s120, %s122
      %p129 = scmp.eq.s32.totalorder %s28, 1
      %p130 = por %p128, %p129
      %p131 = scmp.ne.s32.totalorder %s122, %s123
      %p132 = scmp.eq.s32.totalorder %s28, 0
      %p133 = por %p131, %p132
      %p134 = scmp.ne.s32.totalorder %s122, %s123
      %p135 = scmp.eq.s32.totalorder %s29, 1
      %p136 = por %p134, %p135
      %p138 = scmp.ne.s32.totalorder %s123, %s137
      %p139 = scmp.eq.s32.totalorder %s29, 0
      %p140 = por %p138, %p139
      %s142 = sadd.s32 %s141, 1
      %p145 = scmp.eq.s32.totalorder %s23, 1
      %p146 = scmp.ne.s32.totalorder %s141, %s143
      %p147 = scmp.eq.s32.totalorder %s23, 0
      %p148 = por %p146, %p147
      %p149 = scmp.ne.s32.totalorder %s141, %s143
      %p150 = scmp.eq.s32.totalorder %s28, 1
      %p151 = por %p149, %p150
      %p152 = scmp.ne.s32.totalorder %s143, %s144
      %p153 = scmp.eq.s32.totalorder %s28, 0
      %p154 = por %p152, %p153
      %p155 = scmp.ne.s32.totalorder %s143, %s144
      %p156 = scmp.eq.s32.totalorder %s29, 1
      %p157 = por %p155, %p156
      %p159 = scmp.ne.s32.totalorder %s144, %s158
      %p160 = scmp.eq.s32.totalorder %s29, 0
      %p161 = por %p159, %p160
      %s163 = sadd.s32 %s162, 1
      %p166 = scmp.eq.s32.totalorder %s23, 1
      %p167 = scmp.ne.s32.totalorder %s162, %s164
      %p168 = scmp.eq.s32.totalorder %s23, 0
      %p169 = por %p167, %p168
      %p170 = scmp.ne.s32.totalorder %s162, %s164
      %p171 = scmp.eq.s32.totalorder %s28, 1
      %p172 = por %p170, %p171
      %p173 = scmp.ne.s32.totalorder %s164, %s165
      %p174 = scmp.eq.s32.totalorder %s28, 0
      %p175 = por %p173, %p174
      %p176 = scmp.ne.s32.totalorder %s164, %s165
      %p177 = scmp.eq.s32.totalorder %s29, 1
      %p178 = por %p176, %p177
      %p180 = scmp.ne.s32.totalorder %s165, %s179
      %p181 = scmp.eq.s32.totalorder %s29, 0
      %p182 = por %p180, %p181
      %s184 = sadd.s32 %s183, 1
      %p187 = scmp.eq.s32.totalorder %s23, 1
      %p188 = scmp.ne.s32.totalorder %s183, %s185
      %p189 = scmp.eq.s32.totalorder %s23, 0
      %p190 = por %p188, %p189
      %p191 = scmp.ne.s32.totalorder %s183, %s185
      %p192 = scmp.eq.s32.totalorder %s28, 1
      %p193 = por %p191, %p192
      %p194 = scmp.ne.s32.totalorder %s185, %s186
      %p195 = scmp.eq.s32.totalorder %s28, 0
      %p196 = por %p194, %p195
      %p197 = scmp.ne.s32.totalorder %s185, %s186
      %p198 = scmp.eq.s32.totalorder %s29, 1
      %p199 = por %p197, %p198
      %p201 = scmp.ne.s32.totalorder %s186, %s200
      %p202 = scmp.eq.s32.totalorder %s29, 0
      %p203 = por %p201, %p202
      %s205 = sadd.s32 %s204, 1
      %p208 = scmp.eq.s32.totalorder %s23, 1
      %p209 = scmp.ne.s32.totalorder %s204, %s206
      %p210 = scmp.eq.s32.totalorder %s23, 0
      %p211 = por %p209, %p210
      %p212 = scmp.ne.s32.totalorder %s204, %s206
      %p213 = scmp.eq.s32.totalorder %s28, 1
      %p214 = por %p212, %p213
      %p215 = scmp.ne.s32.totalorder %s206, %s207
      %p216 = scmp.eq.s32.totalorder %s28, 0
      %p217 = por %p215, %p216
      %p218 = scmp.ne.s32.totalorder %s206, %s207
      %p219 = scmp.eq.s32.totalorder %s29, 1
      %p220 = por %p218, %p219
      %p222 = scmp.ne.s32.totalorder %s207, %s221
      %p223 = scmp.eq.s32.totalorder %s29, 0
      %p224 = por %p222, %p223
      %s226 = sadd.s32 %s225, 1
      %p229 = scmp.eq.s32.totalorder %s23, 1
      %p230 = scmp.ne.s32.totalorder %s225, %s227
      %p231 = scmp.eq.s32.totalorder %s23, 0
      %p232 = por %p230, %p231
      %p233 = scmp.ne.s32.totalorder %s225, %s227
      %p234 = scmp.eq.s32.totalorder %s28, 1
      %p235 = por %p233, %p234
      %p236 = scmp.ne.s32.totalorder %s227, %s228
      %p237 = scmp.eq.s32.totalorder %s28, 0
      %p238 = por %p236, %p237
      %p239 = scmp.ne.s32.totalorder %s227, %s228
      %p240 = scmp.eq.s32.totalorder %s29, 1
      %p241 = por %p239, %p240
      %p243 = scmp.ne.s32.totalorder %s228, %s242
      %p244 = scmp.eq.s32.totalorder %s29, 0
      %p245 = por %p243, %p244
      %s246 = ssub.s32 %s23, %s30
      %p247 = scmp.eq.s32.totalorder %s246, 0
      %s249 = sadd.s32 %s248, 1
      %s250 = scalar_select %p247, %s248, %s249
      %p253 = pneg %p247
      %p254 = scmp.eq.s32.totalorder %s23, 1
      %p255 = por %p253, %p254
      %p256 = scmp.ne.s32.totalorder %s248, %s251
      %p257 = scmp.eq.s32.totalorder %s23, 0
      %p258 = por %p256, %p257
      %p259 = scmp.ne.s32.totalorder %s248, %s251
      %p260 = scmp.eq.s32.totalorder %s28, 1
      %p261 = por %p259, %p260
      %p262 = scmp.ne.s32.totalorder %s251, %s252
      %p263 = scmp.eq.s32.totalorder %s28, 0
      %p264 = por %p262, %p263
      %p265 = scmp.ne.s32.totalorder %s251, %s252
      %p266 = scmp.eq.s32.totalorder %s29, 1
      %p267 = por %p265, %p266
      %p269 = scmp.ne.s32.totalorder %s252, %s268
      %p270 = scmp.eq.s32.totalorder %s29, 0
      %p271 = por %p269, %p270
      %p272 = scmp.le.s32.totalorder 1, %s23
      %p273 = scmp.lt.s32.totalorder %s23, 3
      %p274 = pnand %p272, %p273
      %p275 = pneg %p274
      // Predicated region
      $region9: #{tpu_custom_call.1} parent=5 // pred_check
        _
      $region10: #{tpu_custom_call.1} parent=5 // pred_check_branch
        %277 = sbr.rel (%p274) target = $region12
      $region11: #{tpu_custom_call.1} parent=5 // pred_region
        %s278 = ssub.s32 %s23, 1
        // Predicated region
        $region13: #{tpu_custom_call.1} parent=11 // pred_check
          %p279 = pneg %p70
        $region14: #{tpu_custom_call.1} parent=11 // pred_check_branch
          %281 = sbr.rel (%p279) target = $region16
        $region15: #{tpu_custom_call.1} parent=11 // pred_region
          _
        $region16: #{tpu_custom_call.1} parent=11 // pred_fallthru
          _
        // Predicated region
        $region17: #{tpu_custom_call.1} parent=11 // pred_check
          %p282 = pneg %p91
        $region18: #{tpu_custom_call.1} parent=11 // pred_check_branch
          %284 = sbr.rel (%p282) target = $region20
        $region19: #{tpu_custom_call.1} parent=11 // pred_region
          _
        $region20: #{tpu_custom_call.1} parent=11 // pred_fallthru
          _
        // Predicated region
        $region21: #{tpu_custom_call.1} parent=11 // pred_check
          %p285 = pneg %p112
        $region22: #{tpu_custom_call.1} parent=11 // pred_check_branch
          %287 = sbr.rel (%p285) target = $region24
        $region23: #{tpu_custom_call.1} parent=11 // pred_region
          %s289 = ssub.s32 288, 288
          %290 = vsyncadd [#allocation6], %s289
          %s292 = sshll.u32 [#allocation5], 4
          %s293 = int_to_ptr.vmem [resolvable:$true] %s292
          %295 = dma.hbm_to_vmem [thread:$0]  %s3, 288, %s293, [#allocation6]
        $region24: #{tpu_custom_call.1} parent=11 // pred_fallthru
          _
        // Predicated region
        $region25: #{tpu_custom_call.1} parent=11 // pred_check
          %p296 = pneg %p133
        $region26: #{tpu_custom_call.1} parent=11 // pred_check_branch
          %298 = sbr.rel (%p296) target = $region28
        $region27: #{tpu_custom_call.1} parent=11 // pred_region
          _
        $region28: #{tpu_custom_call.1} parent=11 // pred_fallthru
          _
        // Predicated region
        $region29: #{tpu_custom_call.1} parent=11 // pred_check
          %p299 = pneg %p154
        $region30: #{tpu_custom_call.1} parent=11 // pred_check_branch
          %301 = sbr.rel (%p299) target = $region32
        $region31: #{tpu_custom_call.1} parent=11 // pred_region
          _
        $region32: #{tpu_custom_call.1} parent=11 // pred_fallthru
          _
        // Predicated region
        $region33: #{tpu_custom_call.1} parent=11 // pred_check
          %p302 = pneg %p175
        $region34: #{tpu_custom_call.1} parent=11 // pred_check_branch
          %304 = sbr.rel (%p302) target = $region36
        $region35: #{tpu_custom_call.1} parent=11 // pred_region
          %s306 = ssub.s32 2304, 2304
          %307 = vsyncadd [#allocation6], %s306
          %s308 = sshll.u32 [#allocation7], 4
          %s309 = int_to_ptr.vmem [resolvable:$true] %s308
          %314 = dma.hbm_to_vmem [thread:$0]  %s6, 2304, %s309, [#allocation6], 128, 128, 8
        $region36: #{tpu_custom_call.1} parent=11 // pred_fallthru
          _
        // Predicated region
        $region37: #{tpu_custom_call.1} parent=11 // pred_check
          %p315 = pneg %p196
        $region38: #{tpu_custom_call.1} parent=11 // pred_check_branch
          %317 = sbr.rel (%p315) target = $region40
        $region39: #{tpu_custom_call.1} parent=11 // pred_region
          _
        $region40: #{tpu_custom_call.1} parent=11 // pred_fallthru
          _
        // Predicated region
        $region41: #{tpu_custom_call.1} parent=11 // pred_check
          %p318 = pneg %p217
        $region42: #{tpu_custom_call.1} parent=11 // pred_check_branch
          %320 = sbr.rel (%p318) target = $region44
        $region43: #{tpu_custom_call.1} parent=11 // pred_region
          _
        $region44: #{tpu_custom_call.1} parent=11 // pred_fallthru
          _
        // Predicated region
        $region45: #{tpu_custom_call.1} parent=11 // pred_check
          %p321 = pneg %p238
        $region46: #{tpu_custom_call.1} parent=11 // pred_check_branch
          %323 = sbr.rel (%p321) target = $region48
        $region47: #{tpu_custom_call.1} parent=11 // pred_region
          _
        $region48: #{tpu_custom_call.1} parent=11 // pred_fallthru
          _
      $region12: #{tpu_custom_call.1} parent=5 // pred_fallthru
        _
      %p324 = scmp.lt.s32.totalorder %s23, 2
      // Predicated region
      $region49: #{tpu_custom_call.1} parent=5 // pred_check
        %p325 = pneg %p324
      $region50: #{tpu_custom_call.1} parent=5 // pred_check_branch
        %327 = sbr.rel (%p325) target = $region52
      $region51: #{tpu_custom_call.1} parent=5 // pred_region
        // Predicated region
        $region53: #{tpu_custom_call.1} parent=51 // pred_check
          %p328 = pneg %p43
        $region54: #{tpu_custom_call.1} parent=51 // pred_check_branch
          %330 = sbr.rel (%p328) target = $region56
        $region55: #{tpu_custom_call.1} parent=51 // pred_region
          %s331 = sand.u32 %s33, 1
          %s332 = scalar_lea.sflag [#allocation3], %s331
          %s333 = sand.u32 %s33, 1
          %s334 = smul.addr %s333, 64
          %s335 = scalar_lea.vmem [#allocation2], %s334
          %s336 = smul.u32 8, %s23
          %s338 = ssub.s32 1024, 1024
          %339 = vsyncadd %s332, %s338
          %s340 = smul.addr %s336, 128
          %s341 = scalar_lea.hbm %s0, %s340
          %s342 = sshll.u32 %s335, 4
          %s343 = int_to_ptr.vmem [resolvable:$true] %s342
          %348 = dma.hbm_to_vmem [thread:$0]  %s341, 1024, %s343, %s332, 128, 128, 8
        $region56: #{tpu_custom_call.1} parent=51 // pred_fallthru
          _
      $region52: #{tpu_custom_call.1} parent=5 // pred_fallthru
        _
      %p349 = scmp.le.s32.totalorder 1, %s23
      %p350 = scmp.lt.s32.totalorder %s23, 3
      %p351 = pnand %p349, %p350
      %p352 = pneg %p351
      // Predicated region
      $region57: #{tpu_custom_call.1} parent=5 // pred_check
        _
      $region58: #{tpu_custom_call.1} parent=5 // pred_check_branch
        %354 = sbr.rel (%p351) target = $region60
      $region59: #{tpu_custom_call.1} parent=5 // pred_region
        %s355 = ssub.s32 %s23, 1
        %s356 = sand.u32 %s36, 1
        %s357 = scalar_lea.sflag [#allocation3], %s356
        %s358 = sand.u32 %s36, 1
        %s359 = smul.addr %s358, 64
        %s360 = scalar_lea.vmem [#allocation2], %s359
        // Predicated region
        $region61: #{tpu_custom_call.1} parent=59 // pred_check
          %p361 = pneg %p49
        $region62: #{tpu_custom_call.1} parent=59 // pred_check_branch
          %363 = sbr.rel (%p361) target = $region64
        $region63: #{tpu_custom_call.1} parent=59 // pred_region
          %364 = dma.done %s357, 1024
        $region64: #{tpu_custom_call.1} parent=59 // pred_fallthru
          _
        // Predicated region
        $region65: #{tpu_custom_call.1} parent=59 // pred_check
          %p365 = pneg %p112
        $region66: #{tpu_custom_call.1} parent=59 // pred_check_branch
          %367 = sbr.rel (%p365) target = $region68
        $region67: #{tpu_custom_call.1} parent=59 // pred_region
          %368 = dma.done [#allocation6], 288
        $region68: #{tpu_custom_call.1} parent=59 // pred_fallthru
          _
        // Predicated region
        $region69: #{tpu_custom_call.1} parent=59 // pred_check
          %p369 = pneg %p175
        $region70: #{tpu_custom_call.1} parent=59 // pred_check_branch
          %371 = sbr.rel (%p369) target = $region72
        $region71: #{tpu_custom_call.1} parent=59 // pred_region
          %372 = dma.done [#allocation6], 2304
        $region72: #{tpu_custom_call.1} parent=59 // pred_fallthru
          _
        %s373 = sand.u32 %s36, 1
        %s374 = scalar_lea.sflag [#allocation3], %s373
        %s375 = sand.u32 %s36, 1
        %s376 = smul.addr %s375, 64
        %s377 = scalar_lea.vmem [#allocation2], %s376
        %p378 = pneg %p49
        %p379 = pneg %p46
        %p380 = pneg %p70
        %p381 = pneg %p67
        %p382 = pneg %p91
        %p383 = pneg %p88
        %p384 = pneg %p112
        %p385 = pneg %p109
        %p386 = pneg %p133
        %p387 = pneg %p130
        %p388 = pneg %p154
        %p389 = pneg %p151
        %p390 = pneg %p175
        %p391 = pneg %p172
        %p392 = pneg %p196
        %p393 = pneg %p193
        %p394 = pneg %p217
        %p395 = pneg %p214
        %p396 = pneg %p238
        %p397 = pneg %p235
        %p398 = pneg %p264
        %p399 = pneg %p261
        %s400 = sand.u32 %s251, 1
        %s401 = scalar_lea.sflag [#allocation4], %s400
        %s402 = sand.u32 %s251, 1
        %s403 = smul.addr %s402, 64
        %s404 = scalar_lea.vmem [#allocation8], %s403
        %s405 = smul.u32 8, %s28
        %s406 = smul.u32 8, %s28
        %v407 = vld [vmem:[%s360] sm:$0xff]
        %v408 = vld [vmem:[%s360 + $0x8] sm:$0xff]
        %v409 = vld [vmem:[%s360 + $0x10] sm:$0xff]
        %v410 = vld [vmem:[%s360 + $0x18] sm:$0xff]
        %v411 = vld [vmem:[%s360 + $0x20] sm:$0xff]
        %v412 = vld [vmem:[%s360 + $0x28] sm:$0xff]
        %v413 = vld [vmem:[%s360 + $0x30] sm:$0xff]
        %v414 = vld [vmem:[%s360 + $0x38] sm:$0xff]
        %v415 = vld [vmem:[%s1] sm:$0xff]
        %v416 = vld [vmem:[%s1 + $0x8] sm:$0xff]
        %v417 = vld [vmem:[%s1 + $0x10] sm:$0xff]
        %v418 = vld [vmem:[%s1 + $0x18] sm:$0xff]
        %v419 = vld [vmem:[%s1 + $0x20] sm:$0xff]
        %v420 = vld [vmem:[%s1 + $0x28] sm:$0xff]
        %v421 = vld [vmem:[%s1 + $0x30] sm:$0xff]
        %v422 = vld [vmem:[%s1 + $0x38] sm:$0xff]
        %v423 = vld [vmem:[%s1 + $0x40] sm:$0xff]
        %v424 = vld [vmem:[%s1 + $0x48] sm:$0xff]
        %v425 = vld [vmem:[%s1 + $0x50] sm:$0xff]
        %v426 = vld [vmem:[%s1 + $0x58] sm:$0xff]
        %v427 = vld [vmem:[%s1 + $0x60] sm:$0xff]
        %v428 = vld [vmem:[%s1 + $0x68] sm:$0xff]
        %v429 = vld [vmem:[%s1 + $0x70] sm:$0xff]
        %v430 = vld [vmem:[%s1 + $0x78] sm:$0xff]
        %v431 = vld [vmem:[%s1 + $0x80] sm:$0xff]
        %v432 = vld [vmem:[%s1 + $0x88] sm:$0xff]
        %v433 = vld [vmem:[%s1 + $0x90] sm:$0xff]
        %v434 = vld [vmem:[%s1 + $0x98] sm:$0xff]
        %v435 = vld [vmem:[%s1 + $0xa0] sm:$0xff]
        %v436 = vld [vmem:[%s1 + $0xa8] sm:$0xff]
        %v437 = vld [vmem:[%s1 + $0xb0] sm:$0xff]
        %v438 = vld [vmem:[%s1 + $0xb8] sm:$0xff]
        %v439 = vld [vmem:[%s1 + $0xc0] sm:$0xff]
        %v440 = vld [vmem:[%s1 + $0xc8] sm:$0xff]
        %v441 = vld [vmem:[%s1 + $0xd0] sm:$0xff]
        %v442 = vld [vmem:[%s1 + $0xd8] sm:$0xff]
        %v443 = vld [vmem:[%s1 + $0xe0] sm:$0xff]
        %v444 = vld [vmem:[%s1 + $0xe8] sm:$0xff]
        %v445 = vld [vmem:[%s1 + $0xf0] sm:$0xff]
        %v446 = vld [vmem:[%s1 + $0xf8] sm:$0xff]
        %447 = vmatprep.subr.mxu0 %v416
        %448 = vmatpush1.msra.mxu0 %v415
        %449 = vmatprep.subr.mxu0 %v418
        %450 = vmatpush1.msra.mxu0 %v417
        %451 = vmatprep.subr.mxu0 %v420
        %452 = vmatpush1.msra.mxu0 %v419
        %453 = vmatprep.subr.mxu0 %v422
        %454 = vmatpush1.msra.mxu0 %v421
        %455 = vmatprep.subr.mxu0 %v424
        %456 = vmatpush1.msra.mxu0 %v423
        %457 = vmatprep.subr.mxu0 %v426
        %458 = vmatpush1.msra.mxu0 %v425
        %459 = vmatprep.subr.mxu0 %v428
        %460 = vmatpush1.msra.mxu0 %v427
        %461 = vmatprep.subr.mxu0 %v430
        %462 = vmatpush1.msra.mxu0 %v429
        %463 = vmatprep.subr.mxu0 %v432
        %464 = vmatpush1.msra.mxu0 %v431
        %465 = vmatprep.subr.mxu0 %v434
        %466 = vmatpush1.msra.mxu0 %v433
        %467 = vmatprep.subr.mxu0 %v436
        %468 = vmatpush1.msra.mxu0 %v435
        %469 = vmatprep.subr.mxu0 %v438
        %470 = vmatpush1.msra.mxu0 %v437
        %471 = vmatprep.subr.mxu0 %v440
        %472 = vmatpush1.msra.mxu0 %v439
        %473 = vmatprep.subr.mxu0 %v442
        %474 = vmatpush1.msra.mxu0 %v441
        %475 = vmatprep.subr.mxu0 %v444
        %476 = vmatpush1.msra.mxu0 %v443
        %477 = vmatprep.subr.mxu0 %v446
        %478 = vmatpush1.msra.mxu0 %v445
        %479 = vmatprep.subr.mxu0 0.0
        %480 = vmatpush1.msra.mxu0 0.0
        %481 = vmatprep.subr.mxu0 0.0
        %482 = vmatpush1.msra.mxu0 0.0
        %483 = vmatprep.subr.mxu0 0.0
        %484 = vmatpush1.msra.mxu0 0.0
        %485 = vmatprep.subr.mxu0 0.0
        %486 = vmatpush1.msra.mxu0 0.0
        %487 = vmatprep.subr.mxu0 0.0
        %488 = vmatpush1.msra.mxu0 0.0
        %489 = vmatprep.subr.mxu0 0.0
        %490 = vmatpush1.msra.mxu0 0.0
        %491 = vmatprep.subr.mxu0 0.0
        %492 = vmatpush1.msra.mxu0 0.0
        %493 = vmatprep.subr.mxu0 0.0
        %494 = vmatpush1.msra.mxu0 0.0
        %495 = vmatprep.subr.mxu0 0.0
        %496 = vmatpush1.msra.mxu0 0.0
        %497 = vmatprep.subr.mxu0 0.0
        %498 = vmatpush1.msra.mxu0 0.0
        %499 = vmatprep.subr.mxu0 0.0
        %500 = vmatpush1.msra.mxu0 0.0
        %501 = vmatprep.subr.mxu0 0.0
        %502 = vmatpush1.msra.mxu0 0.0
        %503 = vmatprep.subr.mxu0 0.0
        %504 = vmatpush1.msra.mxu0 0.0
        %505 = vmatprep.subr.mxu0 0.0
        %506 = vmatpush1.msra.mxu0 0.0
        %507 = vmatprep.subr.mxu0 0.0
        %508 = vmatpush1.msra.mxu0 0.0
        %509 = vmatprep.subr.mxu0 0.0
        %510 = vmatpush1.msra.mxu0 0.0
        %511 = vmatprep.mubr.f32.mxu0 0.0
        %512 = vmatmul.mubr.f32.gmra.mrb[0].mxu0 %v407
        %v513 = vpop.f32.mrb[0].mxu0
        %v514 = vadd.f32 0.0, %v513
        %v515 = vpop.f32.mrb[0].mxu0
        %v516 = vadd.f32 0.0, %v515
        %517 = vmatprep.mubr.f32.mxu0 0.0
        %518 = vmatmul.mubr.f32.gmra.mrb[0].mxu0 %v408
        %v519 = vpop.f32.mrb[0].mxu0
        %v520 = vadd.f32 0.0, %v519
        %v521 = vpop.f32.mrb[0].mxu0
        %v522 = vadd.f32 0.0, %v521
        %523 = vmatprep.mubr.f32.mxu0 0.0
        %524 = vmatmul.mubr.f32.gmra.mrb[0].mxu0 %v409
        %v525 = vpop.f32.mrb[0].mxu0
        %v526 = vadd.f32 0.0, %v525
        %v527 = vpop.f32.mrb[0].mxu0
        %v528 = vadd.f32 0.0, %v527
        %529 = vmatprep.mubr.f32.mxu0 0.0
        %530 = vmatmul.mubr.f32.gmra.mrb[0].mxu0 %v410
        %v531 = vpop.f32.mrb[0].mxu0
        %v532 = vadd.f32 0.0, %v531
        %v533 = vpop.f32.mrb[0].mxu0
        %v534 = vadd.f32 0.0, %v533
        %535 = vmatprep.mubr.f32.mxu0 0.0
        %536 = vmatmul.mubr.f32.gmra.mrb[0].mxu0 %v411
        %v537 = vpop.f32.mrb[0].mxu0
        %v538 = vadd.f32 0.0, %v537
        %v539 = vpop.f32.mrb[0].mxu0
        %v540 = vadd.f32 0.0, %v539
        %541 = vmatprep.mubr.f32.mxu0 0.0
        %542 = vmatmul.mubr.f32.gmra.mrb[0].mxu0 %v412
        %v543 = vpop.f32.mrb[0].mxu0
        %v544 = vadd.f32 0.0, %v543
        %v545 = vpop.f32.mrb[0].mxu0
        %v546 = vadd.f32 0.0, %v545
        %547 = vmatprep.mubr.f32.mxu0 0.0
        %548 = vmatmul.mubr.f32.gmra.mrb[0].mxu0 %v413
        %v549 = vpop.f32.mrb[0].mxu0
        %v550 = vadd.f32 0.0, %v549
        %v551 = vpop.f32.mrb[0].mxu0
        %v552 = vadd.f32 0.0, %v551
        %553 = vmatprep.mubr.f32.mxu0 0.0
        %554 = vmatmul.mubr.f32.gmra.mrb[0].mxu0 %v414
        %v555 = vpop.f32.mrb[0].mxu0
        %v556 = vadd.f32 0.0, %v555
        %v557 = vpop.f32.mrb[0].mxu0
        %v558 = vadd.f32 0.0, %v557
        %559 = vdwg.mxu0
        %v560 = vmul.f32 %v514, %v514
        %v561 = vmul.f32 %v520, %v520
        %v562 = vmul.f32 %v526, %v526
        %v563 = vmul.f32 %v532, %v532
        %v564 = vmul.f32 %v538, %v538
        %v565 = vmul.f32 %v544, %v544
        %v566 = vmul.f32 %v550, %v550
        %v567 = vmul.f32 %v556, %v556
        %v568 = vmul.f32 %v516, %v516
        %v569 = vmul.f32 %v522, %v522
        %v570 = vmul.f32 %v528, %v528
        %v571 = vmul.f32 %v534, %v534
        %v572 = vmul.f32 %v540, %v540
        %v573 = vmul.f32 %v546, %v546
        %v574 = vmul.f32 %v552, %v552
        %v575 = vmul.f32 %v558, %v558
        %592 = vrot.lane.b32.xlu0 %v560, 56
        %v593 = vpop.permute.xlu0 %592
        %594 = vrot.lane.b32.xlu0 %v568, 56
        %v595 = vpop.permute.xlu0 %594
        %596 = vrot.lane.b32.xlu0 %v561, 56
        %v597 = vpop.permute.xlu0 %596
        %598 = vrot.lane.b32.xlu0 %v569, 56
        %v599 = vpop.permute.xlu0 %598
        %600 = vrot.lane.b32.xlu0 %v562, 56
        %v601 = vpop.permute.xlu0 %600
        %602 = vrot.lane.b32.xlu0 %v570, 56
        %v603 = vpop.permute.xlu0 %602
        %604 = vrot.lane.b32.xlu0 %v563, 56
        %v605 = vpop.permute.xlu0 %604
        %606 = vrot.lane.b32.xlu0 %v571, 56
        %v607 = vpop.permute.xlu0 %606
        %608 = vrot.lane.b32.xlu0 %v564, 56
        %v609 = vpop.permute.xlu0 %608
        %610 = vrot.lane.b32.xlu0 %v572, 56
        %v611 = vpop.permute.xlu0 %610
        %612 = vrot.lane.b32.xlu0 %v565, 56
        %v613 = vpop.permute.xlu0 %612
        %614 = vrot.lane.b32.xlu0 %v573, 56
        %v615 = vpop.permute.xlu0 %614
        %616 = vrot.lane.b32.xlu0 %v566, 56
        %v617 = vpop.permute.xlu0 %616
        %618 = vrot.lane.b32.xlu0 %v574, 56
        %v619 = vpop.permute.xlu0 %618
        %620 = vrot.lane.b32.xlu0 %v567, 56
        %v621 = vpop.permute.xlu0 %620
        %622 = vrot.lane.b32.xlu0 %v575, 56
        %v623 = vpop.permute.xlu0 %622
        %vm624 = vcmask 457728
        %v625 = vsel %vm624, %v593, %v595
        %v626 = vsel %vm624, %v597, %v599
        %v627 = vsel %vm624, %v601, %v603
        %v628 = vsel %vm624, %v605, %v607
        %v629 = vsel %vm624, %v609, %v611
        %v630 = vsel %vm624, %v613, %v615
        %v631 = vsel %vm624, %v617, %v619
        %v632 = vsel %vm624, %v621, %v623
        %v641 = vadd.f32 %v560, %v625
        %v642 = vadd.f32 %v561, %v626
        %v643 = vadd.f32 %v562, %v627
        %v644 = vadd.f32 %v563, %v628
        %v645 = vadd.f32 %v564, %v629
        %v646 = vadd.f32 %v565, %v630
        %v647 = vadd.f32 %v566, %v631
        %v648 = vadd.f32 %v567, %v632
        %vm649 = vcmp.gt.f32.partialorder %v641, 0.0
        %vm650 = vcmp.gt.f32.partialorder %v642, 0.0
        %vm651 = vcmp.gt.f32.partialorder %v643, 0.0
        %vm652 = vcmp.gt.f32.partialorder %v644, 0.0
        %vm653 = vcmp.gt.f32.partialorder %v645, 0.0
        %vm654 = vcmp.gt.f32.partialorder %v646, 0.0
        %vm655 = vcmp.gt.f32.partialorder %v647, 0.0
        %vm656 = vcmp.gt.f32.partialorder %v648, 0.0
        %v657 = vsel %vm649, %v641, 1.0
        %v658 = vsel %vm650, %v642, 1.0
        %v659 = vsel %vm651, %v643, 1.0
        %v660 = vsel %vm652, %v644, 1.0
        %v661 = vsel %vm653, %v645, 1.0
        %v662 = vsel %vm654, %v646, 1.0
        %v663 = vsel %vm655, %v647, 1.0
        %v664 = vsel %vm656, %v648, 1.0
        %v665 = vrsqrt.pop %v657
        %v666 = vrsqrt.pop %v658
        %v667 = vrsqrt.pop %v659
        %v668 = vrsqrt.pop %v660
        %v669 = vrsqrt.pop %v661
        %v670 = vrsqrt.pop %v662
        %v671 = vrsqrt.pop %v663
        %v672 = vrsqrt.pop %v664
        %v673 = vsel %vm649, %v665, 0.0
        %v674 = vsel %vm650, %v666, 0.0
        %v675 = vsel %vm651, %v667, 0.0
        %v676 = vsel %vm652, %v668, 0.0
        %v677 = vsel %vm653, %v669, 0.0
        %v678 = vsel %vm654, %v670, 0.0
        %v679 = vsel %vm655, %v671, 0.0
        %v680 = vsel %vm656, %v672, 0.0
        %v681 = vmul.f32 %v641, %v673
        %v682 = vmul.f32 %v642, %v674
        %v683 = vmul.f32 %v643, %v675
        %v684 = vmul.f32 %v644, %v676
        %v685 = vmul.f32 %v645, %v677
        %v686 = vmul.f32 %v646, %v678
        %v687 = vmul.f32 %v647, %v679
        %v688 = vmul.f32 %v648, %v680
        %697 = vrot.lane.b32.xlu0 %v673, 72
        %v698 = vpop.permute.xlu0 %697
        %699 = vrot.lane.b32.xlu0 %v674, 72
        %v700 = vpop.permute.xlu0 %699
        %701 = vrot.lane.b32.xlu0 %v675, 72
        %v702 = vpop.permute.xlu0 %701
        %703 = vrot.lane.b32.xlu0 %v676, 72
        %v704 = vpop.permute.xlu0 %703
        %705 = vrot.lane.b32.xlu0 %v677, 72
        %v706 = vpop.permute.xlu0 %705
        %707 = vrot.lane.b32.xlu0 %v678, 72
        %v708 = vpop.permute.xlu0 %707
        %709 = vrot.lane.b32.xlu0 %v679, 72
        %v710 = vpop.permute.xlu0 %709
        %711 = vrot.lane.b32.xlu0 %v680, 72
        %v712 = vpop.permute.xlu0 %711
        %v721 = vmul.f32 %v514, %v698
        %v722 = vmul.f32 %v516, %v698
        %v723 = vmul.f32 %v520, %v700
        %v724 = vmul.f32 %v522, %v700
        %v725 = vmul.f32 %v526, %v702
        %v726 = vmul.f32 %v528, %v702
        %v727 = vmul.f32 %v532, %v704
        %v728 = vmul.f32 %v534, %v704
        %v729 = vmul.f32 %v538, %v706
        %v730 = vmul.f32 %v540, %v706
        %v731 = vmul.f32 %v544, %v708
        %v732 = vmul.f32 %v546, %v708
        %v733 = vmul.f32 %v550, %v710
        %v734 = vmul.f32 %v552, %v710
        %v735 = vmul.f32 %v556, %v712
        %v736 = vmul.f32 %v558, %v712
        %v737 = vmul.f32 %v514, %v673
        %v738 = vmul.f32 %v520, %v674
        %v739 = vmul.f32 %v526, %v675
        %v740 = vmul.f32 %v532, %v676
        %v741 = vmul.f32 %v538, %v677
        %v742 = vmul.f32 %v544, %v678
        %v743 = vmul.f32 %v550, %v679
        %v744 = vmul.f32 %v556, %v680
        %v745 = vsel %vm649, %v737, 1.0
        %v746 = vsel %vm650, %v738, 1.0
        %v747 = vsel %vm651, %v739, 1.0
        %v748 = vsel %vm652, %v740, 1.0
        %v749 = vsel %vm653, %v741, 1.0
        %v750 = vsel %vm654, %v742, 1.0
        %v751 = vsel %vm655, %v743, 1.0
        %v752 = vsel %vm656, %v744, 1.0
        %761 = vrot.lane.b32.xlu0 %v745, 16
        %v762 = vpop.permute.xlu0 %761
        %763 = vrot.lane.b32.xlu0 %v746, 16
        %v764 = vpop.permute.xlu0 %763
        %765 = vrot.lane.b32.xlu0 %v747, 16
        %v766 = vpop.permute.xlu0 %765
        %767 = vrot.lane.b32.xlu0 %v748, 16
        %v768 = vpop.permute.xlu0 %767
        %769 = vrot.lane.b32.xlu0 %v749, 16
        %v770 = vpop.permute.xlu0 %769
        %771 = vrot.lane.b32.xlu0 %v750, 16
        %v772 = vpop.permute.xlu0 %771
        %773 = vrot.lane.b32.xlu0 %v751, 16
        %v774 = vpop.permute.xlu0 %773
        %775 = vrot.lane.b32.xlu0 %v752, 16
        %v776 = vpop.permute.xlu0 %775
        %vm785 = vcmask 588800
        %v786 = vsel %vm785, %v681, %v721
        %v787 = vsel %vm785, %v682, %v723
        %v788 = vsel %vm785, %v683, %v725
        %v789 = vsel %vm785, %v684, %v727
        %v790 = vsel %vm785, %v685, %v729
        %v791 = vsel %vm785, %v686, %v731
        %v792 = vsel %vm785, %v687, %v733
        %v793 = vsel %vm785, %v688, %v735
        %vm794 = vcmask 130048
        %v795 = vsel %vm794, %v722, %v762
        %v796 = vsel %vm794, %v724, %v764
        %v797 = vsel %vm794, %v726, %v766
        %v798 = vsel %vm794, %v728, %v768
        %v799 = vsel %vm794, %v730, %v770
        %v800 = vsel %vm794, %v732, %v772
        %v801 = vsel %vm794, %v734, %v774
        %v802 = vsel %vm794, %v736, %v776
        %v803 = vld [vmem:[%s2] sm:$0xff]
        %v804 = vld [vmem:[%s2 + $0x8] sm:$0xff]
        %v805 = vld [vmem:[%s2 + $0x10] sm:$0xff]
        %v806 = vld [vmem:[%s2 + $0x18] sm:$0xff]
        %v807 = vld [vmem:[%s2 + $0x20] sm:$0xff]
        %v808 = vld [vmem:[%s2 + $0x28] sm:$0xff]
        %v809 = vld [vmem:[%s2 + $0x30] sm:$0xff]
        %v810 = vld [vmem:[%s2 + $0x38] sm:$0xff]
        %v811 = vld [vmem:[%s2 + $0x40] sm:$0xff]
        %v812 = vld [vmem:[%s2 + $0x48] sm:$0xff]
        %v813 = vld [vmem:[%s2 + $0x50] sm:$0xff]
        %v814 = vld [vmem:[%s2 + $0x58] sm:$0xff]
        %v815 = vld [vmem:[%s2 + $0x60] sm:$0xff]
        %v816 = vld [vmem:[%s2 + $0x68] sm:$0xff]
        %v817 = vld [vmem:[%s2 + $0x70] sm:$0xff]
        %v818 = vld [vmem:[%s2 + $0x78] sm:$0xff]
        %v819 = vld [vmem:[%s2 + $0x80] sm:$0xff]
        %v820 = vld [vmem:[%s2 + $0x88] sm:$0xff]
        %v821 = vld [vmem:[%s2 + $0x90] sm:$0xff]
        %v822 = vld [vmem:[%s2 + $0x98] sm:$0xff]
        %v823 = vld [vmem:[%s2 + $0xa0] sm:$0xff]
        %v824 = vld [vmem:[%s2 + $0xa8] sm:$0xff]
        %v825 = vld [vmem:[%s2 + $0xb0] sm:$0xff]
        %v826 = vld [vmem:[%s2 + $0xb8] sm:$0xff]
        %v827 = vld [vmem:[%s2 + $0xc0] sm:$0xff]
        %v828 = vld [vmem:[%s2 + $0xc8] sm:$0xff]
        %v829 = vld [vmem:[%s2 + $0xd0] sm:$0xff]
        %v830 = vld [vmem:[%s2 + $0xd8] sm:$0xff]
        %v831 = vld [vmem:[%s2 + $0xe0] sm:$0xff]
        %v832 = vld [vmem:[%s2 + $0xe8] sm:$0xff]
        %v833 = vld [vmem:[%s2 + $0xf0] sm:$0xff]
        %v834 = vld [vmem:[%s2 + $0xf8] sm:$0xff]
        %v835 = vld [vmem:[%s2 + $0x100] sm:$0xff]
        %v836 = vld [vmem:[%s2 + $0x108] sm:$0xff]
        %v837 = vld [vmem:[%s2 + $0x110] sm:$0xff]
        %v838 = vld [vmem:[%s2 + $0x118] sm:$0xff]
        %v839 = vld [vmem:[%s2 + $0x120] sm:$0xff]
        %v840 = vld [vmem:[%s2 + $0x128] sm:$0xff]
        %v841 = vld [vmem:[%s2 + $0x130] sm:$0xff]
        %v842 = vld [vmem:[%s2 + $0x138] sm:$0xff]
        %v843 = vld [vmem:[%s2 + $0x140] sm:$0xff]
        %v844 = vld [vmem:[%s2 + $0x148] sm:$0xff]
        %v845 = vld [vmem:[%s2 + $0x150] sm:$0xff]
        %v846 = vld [vmem:[%s2 + $0x158] sm:$0xff]
        %v847 = vld [vmem:[%s2 + $0x160] sm:$0xff]
        %v848 = vld [vmem:[%s2 + $0x168] sm:$0xff]
        %v849 = vld [vmem:[%s2 + $0x170] sm:$0xff]
        %v850 = vld [vmem:[%s2 + $0x178] sm:$0xff]
        %v851 = vld [vmem:[%s2 + $0x180] sm:$0xff]
        %v852 = vld [vmem:[%s2 + $0x188] sm:$0xff]
        %v853 = vld [vmem:[%s2 + $0x190] sm:$0xff]
        %v854 = vld [vmem:[%s2 + $0x198] sm:$0xff]
        %v855 = vld [vmem:[%s2 + $0x1a0] sm:$0xff]
        %v856 = vld [vmem:[%s2 + $0x1a8] sm:$0xff]
        %v857 = vld [vmem:[%s2 + $0x1b0] sm:$0xff]
        %v858 = vld [vmem:[%s2 + $0x1b8] sm:$0xff]
        %v859 = vld [vmem:[%s2 + $0x1c0] sm:$0xff]
        %v860 = vld [vmem:[%s2 + $0x1c8] sm:$0xff]
        %v861 = vld [vmem:[%s2 + $0x1d0] sm:$0xff]
        %v862 = vld [vmem:[%s2 + $0x1d8] sm:$0xff]
        %v863 = vld [vmem:[%s2 + $0x1e0] sm:$0xff]
        %v864 = vld [vmem:[%s2 + $0x1e8] sm:$0xff]
        %v865 = vld [vmem:[%s2 + $0x1f0] sm:$0xff]
        %v866 = vld [vmem:[%s2 + $0x1f8] sm:$0xff]
        %v867 = vld [vmem:[%s2 + $0x200] sm:$0xff]
        %v868 = vld [vmem:[%s2 + $0x208] sm:$0xff]
        %v869 = vld [vmem:[%s2 + $0x210] sm:$0xff]
        %v870 = vld [vmem:[%s2 + $0x218] sm:$0xff]
        %v871 = vld [vmem:[%s2 + $0x220] sm:$0xff]
        %v872 = vld [vmem:[%s2 + $0x228] sm:$0xff]
        %v873 = vld [vmem:[%s2 + $0x230] sm:$0xff]
        %v874 = vld [vmem:[%s2 + $0x238] sm:$0xff]
        %v875 = vld [vmem:[%s2 + $0x240] sm:$0xff]
        %v876 = vld [vmem:[%s2 + $0x248] sm:$0xff]
        %v877 = vld [vmem:[%s2 + $0x250] sm:$0xff]
        %v878 = vld [vmem:[%s2 + $0x258] sm:$0xff]
        %v879 = vld [vmem:[%s2 + $0x260] sm:$0xff]
        %v880 = vld [vmem:[%s2 + $0x268] sm:$0xff]
        %v881 = vld [vmem:[%s2 + $0x270] sm:$0xff]
        %v882 = vld [vmem:[%s2 + $0x278] sm:$0xff]
        %v883 = vld [vmem:[%s2 + $0x280] sm:$0xff]
        %v884 = vld [vmem:[%s2 + $0x288] sm:$0xff]
        %v885 = vld [vmem:[%s2 + $0x290] sm:$0xff]
        %v886 = vld [vmem:[%s2 + $0x298] sm:$0xff]
        %v887 = vld [vmem:[%s2 + $0x2a0] sm:$0xff]
        %v888 = vld [vmem:[%s2 + $0x2a8] sm:$0xff]
        %v889 = vld [vmem:[%s2 + $0x2b0] sm:$0xff]
        %v890 = vld [vmem:[%s2 + $0x2b8] sm:$0xff]
        %v891 = vld [vmem:[%s2 + $0x2c0] sm:$0xff]
        %v892 = vld [vmem:[%s2 + $0x2c8] sm:$0xff]
        %v893 = vld [vmem:[%s2 + $0x2d0] sm:$0xff]
        %v894 = vld [vmem:[%s2 + $0x2d8] sm:$0xff]
        %v895 = vld [vmem:[%s2 + $0x2e0] sm:$0xff]
        %v896 = vld [vmem:[%s2 + $0x2e8] sm:$0xff]
        %v897 = vld [vmem:[%s2 + $0x2f0] sm:$0xff]
        %v898 = vld [vmem:[%s2 + $0x2f8] sm:$0xff]
        %v899 = vld [vmem:[%s2 + $0x300] sm:$0xff]
        %v900 = vld [vmem:[%s2 + $0x308] sm:$0xff]
        %v901 = vld [vmem:[%s2 + $0x310] sm:$0xff]
        %v902 = vld [vmem:[%s2 + $0x318] sm:$0xff]
        %v903 = vld [vmem:[%s2 + $0x320] sm:$0xff]
        %v904 = vld [vmem:[%s2 + $0x328] sm:$0xff]
        %v905 = vld [vmem:[%s2 + $0x330] sm:$0xff]
        %v906 = vld [vmem:[%s2 + $0x338] sm:$0xff]
        %v907 = vld [vmem:[%s2 + $0x340] sm:$0xff]
        %v908 = vld [vmem:[%s2 + $0x348] sm:$0xff]
        %v909 = vld [vmem:[%s2 + $0x350] sm:$0xff]
        %v910 = vld [vmem:[%s2 + $0x358] sm:$0xff]
        %v911 = vld [vmem:[%s2 + $0x360] sm:$0xff]
        %v912 = vld [vmem:[%s2 + $0x368] sm:$0xff]
        %v913 = vld [vmem:[%s2 + $0x370] sm:$0xff]
        %v914 = vld [vmem:[%s2 + $0x378] sm:$0xff]
        %v915 = vld [vmem:[%s2 + $0x380] sm:$0xff]
        %v916 = vld [vmem:[%s2 + $0x388] sm:$0xff]
        %v917 = vld [vmem:[%s2 + $0x390] sm:$0xff]
        %v918 = vld [vmem:[%s2 + $0x398] sm:$0xff]
        %v919 = vld [vmem:[%s2 + $0x3a0] sm:$0xff]
        %v920 = vld [vmem:[%s2 + $0x3a8] sm:$0xff]
        %v921 = vld [vmem:[%s2 + $0x3b0] sm:$0xff]
        %v922 = vld [vmem:[%s2 + $0x3b8] sm:$0xff]
        %v923 = vld [vmem:[%s2 + $0x3c0] sm:$0xff]
        %v924 = vld [vmem:[%s2 + $0x3c8] sm:$0xff]
        %v925 = vld [vmem:[%s2 + $0x3d0] sm:$0xff]
        %v926 = vld [vmem:[%s2 + $0x3d8] sm:$0xff]
        %v927 = vld [vmem:[%s2 + $0x3e0] sm:$0xff]
        %v928 = vld [vmem:[%s2 + $0x3e8] sm:$0xff]
        %v929 = vld [vmem:[%s2 + $0x3f0] sm:$0xff]
        %v930 = vld [vmem:[%s2 + $0x3f8] sm:$0xff]
        %v931 = vld [vmem:[%s2 + $0x400] sm:$0xff]
        %v932 = vld [vmem:[%s2 + $0x408] sm:$0xff]
        %v933 = vld [vmem:[%s2 + $0x410] sm:$0xff]
        %v934 = vld [vmem:[%s2 + $0x418] sm:$0xff]
        %v935 = vld [vmem:[%s2 + $0x420] sm:$0xff]
        %v936 = vld [vmem:[%s2 + $0x428] sm:$0xff]
        %v937 = vld [vmem:[%s2 + $0x430] sm:$0xff]
        %v938 = vld [vmem:[%s2 + $0x438] sm:$0xff]
        %v939 = vld [vmem:[%s2 + $0x440] sm:$0xff]
        %v940 = vld [vmem:[%s2 + $0x448] sm:$0xff]
        %v941 = vld [vmem:[%s2 + $0x450] sm:$0xff]
        %v942 = vld [vmem:[%s2 + $0x458] sm:$0xff]
        %v943 = vld [vmem:[%s2 + $0x460] sm:$0xff]
        %v944 = vld [vmem:[%s2 + $0x468] sm:$0xff]
        %v945 = vld [vmem:[%s2 + $0x470] sm:$0xff]
        %v946 = vld [vmem:[%s2 + $0x478] sm:$0xff]
        %v947 = vld [vmem:[%s2 + $0x480] sm:$0xff]
        %v948 = vld [vmem:[%s2 + $0x488] sm:$0xff]
        %v949 = vld [vmem:[%s2 + $0x490] sm:$0xff]
        %v950 = vld [vmem:[%s2 + $0x498] sm:$0xff]
        %v951 = vld [vmem:[%s2 + $0x4a0] sm:$0xff]
        %v952 = vld [vmem:[%s2 + $0x4a8] sm:$0xff]
        %v953 = vld [vmem:[%s2 + $0x4b0] sm:$0xff]
        %v954 = vld [vmem:[%s2 + $0x4b8] sm:$0xff]
        %v955 = vld [vmem:[%s2 + $0x4c0] sm:$0xff]
        %v956 = vld [vmem:[%s2 + $0x4c8] sm:$0xff]
        %v957 = vld [vmem:[%s2 + $0x4d0] sm:$0xff]
        %v958 = vld [vmem:[%s2 + $0x4d8] sm:$0xff]
        %v959 = vld [vmem:[%s2 + $0x4e0] sm:$0xff]
        %v960 = vld [vmem:[%s2 + $0x4e8] sm:$0xff]
        %v961 = vld [vmem:[%s2 + $0x4f0] sm:$0xff]
        %v962 = vld [vmem:[%s2 + $0x4f8] sm:$0xff]
        %v963 = vld [vmem:[%s2 + $0x500] sm:$0xff]
        %v964 = vld [vmem:[%s2 + $0x508] sm:$0xff]
        %v965 = vld [vmem:[%s2 + $0x510] sm:$0xff]
        %v966 = vld [vmem:[%s2 + $0x518] sm:$0xff]
        %v967 = vld [vmem:[%s2 + $0x520] sm:$0xff]
        %v968 = vld [vmem:[%s2 + $0x528] sm:$0xff]
        %v969 = vld [vmem:[%s2 + $0x530] sm:$0xff]
        %v970 = vld [vmem:[%s2 + $0x538] sm:$0xff]
        %v971 = vld [vmem:[%s2 + $0x540] sm:$0xff]
        %v972 = vld [vmem:[%s2 + $0x548] sm:$0xff]
        %v973 = vld [vmem:[%s2 + $0x550] sm:$0xff]
        %v974 = vld [vmem:[%s2 + $0x558] sm:$0xff]
        %v975 = vld [vmem:[%s2 + $0x560] sm:$0xff]
        %v976 = vld [vmem:[%s2 + $0x568] sm:$0xff]
        %v977 = vld [vmem:[%s2 + $0x570] sm:$0xff]
        %v978 = vld [vmem:[%s2 + $0x578] sm:$0xff]
        %v979 = vld [vmem:[%s2 + $0x580] sm:$0xff]
        %v980 = vld [vmem:[%s2 + $0x588] sm:$0xff]
        %v981 = vld [vmem:[%s2 + $0x590] sm:$0xff]
        %v982 = vld [vmem:[%s2 + $0x598] sm:$0xff]
        %v983 = vld [vmem:[%s2 + $0x5a0] sm:$0xff]
        %v984 = vld [vmem:[%s2 + $0x5a8] sm:$0xff]
        %v985 = vld [vmem:[%s2 + $0x5b0] sm:$0xff]
        %v986 = vld [vmem:[%s2 + $0x5b8] sm:$0xff]
        %v987 = vld [vmem:[%s2 + $0x5c0] sm:$0xff]
        %v988 = vld [vmem:[%s2 + $0x5c8] sm:$0xff]
        %v989 = vld [vmem:[%s2 + $0x5d0] sm:$0xff]
        %v990 = vld [vmem:[%s2 + $0x5d8] sm:$0xff]
        %v991 = vld [vmem:[%s2 + $0x5e0] sm:$0xff]
        %v992 = vld [vmem:[%s2 + $0x5e8] sm:$0xff]
        %v993 = vld [vmem:[%s2 + $0x5f0] sm:$0xff]
        %v994 = vld [vmem:[%s2 + $0x5f8] sm:$0xff]
        %v995 = vld [vmem:[%s2 + $0x600] sm:$0xff]
        %v996 = vld [vmem:[%s2 + $0x608] sm:$0xff]
        %v997 = vld [vmem:[%s2 + $0x610] sm:$0xff]
        %v998 = vld [vmem:[%s2 + $0x618] sm:$0xff]
        %v999 = vld [vmem:[%s2 + $0x620] sm:$0xff]
        %v1000 = vld [vmem:[%s2 + $0x628] sm:$0xff]
        %v1001 = vld [vmem:[%s2 + $0x630] sm:$0xff]
        %v1002 = vld [vmem:[%s2 + $0x638] sm:$0xff]
        %v1003 = vld [vmem:[%s2 + $0x640] sm:$0xff]
        %v1004 = vld [vmem:[%s2 + $0x648] sm:$0xff]
        %v1005 = vld [vmem:[%s2 + $0x650] sm:$0xff]
        %v1006 = vld [vmem:[%s2 + $0x658] sm:$0xff]
        %v1007 = vld [vmem:[%s2 + $0x660] sm:$0xff]
        %v1008 = vld [vmem:[%s2 + $0x668] sm:$0xff]
        %v1009 = vld [vmem:[%s2 + $0x670] sm:$0xff]
        %v1010 = vld [vmem:[%s2 + $0x678] sm:$0xff]
        %v1011 = vld [vmem:[%s2 + $0x680] sm:$0xff]
        %v1012 = vld [vmem:[%s2 + $0x688] sm:$0xff]
        %v1013 = vld [vmem:[%s2 + $0x690] sm:$0xff]
        %v1014 = vld [vmem:[%s2 + $0x698] sm:$0xff]
        %v1015 = vld [vmem:[%s2 + $0x6a0] sm:$0xff]
        %v1016 = vld [vmem:[%s2 + $0x6a8] sm:$0xff]
        %v1017 = vld [vmem:[%s2 + $0x6b0] sm:$0xff]
        %v1018 = vld [vmem:[%s2 + $0x6b8] sm:$0xff]
        %v1019 = vld [vmem:[%s2 + $0x6c0] sm:$0xff]
        %v1020 = vld [vmem:[%s2 + $0x6c8] sm:$0xff]
        %v1021 = vld [vmem:[%s2 + $0x6d0] sm:$0xff]
        %v1022 = vld [vmem:[%s2 + $0x6d8] sm:$0xff]
        %v1023 = vld [vmem:[%s2 + $0x6e0] sm:$0xff]
        %v1024 = vld [vmem:[%s2 + $0x6e8] sm:$0xff]
        %v1025 = vld [vmem:[%s2 + $0x6f0] sm:$0xff]
        %v1026 = vld [vmem:[%s2 + $0x6f8] sm:$0xff]
        %v1027 = vld [vmem:[%s2 + $0x700] sm:$0xff]
        %v1028 = vld [vmem:[%s2 + $0x708] sm:$0xff]
        %v1029 = vld [vmem:[%s2 + $0x710] sm:$0xff]
        %v1030 = vld [vmem:[%s2 + $0x718] sm:$0xff]
        %v1031 = vld [vmem:[%s2 + $0x720] sm:$0xff]
        %v1032 = vld [vmem:[%s2 + $0x728] sm:$0xff]
        %v1033 = vld [vmem:[%s2 + $0x730] sm:$0xff]
        %v1034 = vld [vmem:[%s2 + $0x738] sm:$0xff]
        %v1035 = vld [vmem:[%s2 + $0x740] sm:$0xff]
        %v1036 = vld [vmem:[%s2 + $0x748] sm:$0xff]
        %v1037 = vld [vmem:[%s2 + $0x750] sm:$0xff]
        %v1038 = vld [vmem:[%s2 + $0x758] sm:$0xff]
        %v1039 = vld [vmem:[%s2 + $0x760] sm:$0xff]
        %v1040 = vld [vmem:[%s2 + $0x768] sm:$0xff]
        %v1041 = vld [vmem:[%s2 + $0x770] sm:$0xff]
        %v1042 = vld [vmem:[%s2 + $0x778] sm:$0xff]
        %v1043 = vld [vmem:[%s2 + $0x780] sm:$0xff]
        %v1044 = vld [vmem:[%s2 + $0x788] sm:$0xff]
        %v1045 = vld [vmem:[%s2 + $0x790] sm:$0xff]
        %v1046 = vld [vmem:[%s2 + $0x798] sm:$0xff]
        %v1047 = vld [vmem:[%s2 + $0x7a0] sm:$0xff]
        %v1048 = vld [vmem:[%s2 + $0x7a8] sm:$0xff]
        %v1049 = vld [vmem:[%s2 + $0x7b0] sm:$0xff]
        %v1050 = vld [vmem:[%s2 + $0x7b8] sm:$0xff]
        %v1051 = vld [vmem:[%s2 + $0x7c0] sm:$0xff]
        %v1052 = vld [vmem:[%s2 + $0x7c8] sm:$0xff]
        %v1053 = vld [vmem:[%s2 + $0x7d0] sm:$0xff]
        %v1054 = vld [vmem:[%s2 + $0x7d8] sm:$0xff]
        %v1055 = vld [vmem:[%s2 + $0x7e0] sm:$0xff]
        %v1056 = vld [vmem:[%s2 + $0x7e8] sm:$0xff]
        %v1057 = vld [vmem:[%s2 + $0x7f0] sm:$0xff]
        %v1058 = vld [vmem:[%s2 + $0x7f8] sm:$0xff]
        %v1059 = vld [vmem:[%s2 + $0x800] sm:$0xff]
        %v1060 = vld [vmem:[%s2 + $0x808] sm:$0xff]
        %v1061 = vld [vmem:[%s2 + $0x810] sm:$0xff]
        %v1062 = vld [vmem:[%s2 + $0x818] sm:$0xff]
        %v1063 = vld [vmem:[%s2 + $0x820] sm:$0xff]
        %v1064 = vld [vmem:[%s2 + $0x828] sm:$0xff]
        %v1065 = vld [vmem:[%s2 + $0x830] sm:$0xff]
        %v1066 = vld [vmem:[%s2 + $0x838] sm:$0xff]
        %v1067 = vld [vmem:[%s2 + $0x840] sm:$0xff]
        %v1068 = vld [vmem:[%s2 + $0x848] sm:$0xff]
        %v1069 = vld [vmem:[%s2 + $0x850] sm:$0xff]
        %v1070 = vld [vmem:[%s2 + $0x858] sm:$0xff]
        %v1071 = vld [vmem:[%s2 + $0x860] sm:$0xff]
        %v1072 = vld [vmem:[%s2 + $0x868] sm:$0xff]
        %v1073 = vld [vmem:[%s2 + $0x870] sm:$0xff]
        %v1074 = vld [vmem:[%s2 + $0x878] sm:$0xff]
        %v1075 = vld [vmem:[%s2 + $0x880] sm:$0xff]
        %v1076 = vld [vmem:[%s2 + $0x888] sm:$0xff]
        %v1077 = vld [vmem:[%s2 + $0x890] sm:$0xff]
        %v1078 = vld [vmem:[%s2 + $0x898] sm:$0xff]
        %v1079 = vld [vmem:[%s2 + $0x8a0] sm:$0xff]
        %v1080 = vld [vmem:[%s2 + $0x8a8] sm:$0xff]
        %v1081 = vld [vmem:[%s2 + $0x8b0] sm:$0xff]
        %v1082 = vld [vmem:[%s2 + $0x8b8] sm:$0xff]
        %v1083 = vld [vmem:[%s2 + $0x8c0] sm:$0xff]
        %v1084 = vld [vmem:[%s2 + $0x8c8] sm:$0xff]
        %v1085 = vld [vmem:[%s2 + $0x8d0] sm:$0xff]
        %v1086 = vld [vmem:[%s2 + $0x8d8] sm:$0xff]
        %v1087 = vld [vmem:[%s2 + $0x8e0] sm:$0xff]
        %v1088 = vld [vmem:[%s2 + $0x8e8] sm:$0xff]
        %v1089 = vld [vmem:[%s2 + $0x8f0] sm:$0xff]
        %v1090 = vld [vmem:[%s2 + $0x8f8] sm:$0xff]
        %v1091 = vld [vmem:[%s2 + $0x900] sm:$0xff]
        %v1092 = vld [vmem:[%s2 + $0x908] sm:$0xff]
        %v1093 = vld [vmem:[%s2 + $0x910] sm:$0xff]
        %v1094 = vld [vmem:[%s2 + $0x918] sm:$0xff]
        %v1095 = vld [vmem:[%s2 + $0x920] sm:$0xff]
        %v1096 = vld [vmem:[%s2 + $0x928] sm:$0xff]
        %v1097 = vld [vmem:[%s2 + $0x930] sm:$0xff]
        %v1098 = vld [vmem:[%s2 + $0x938] sm:$0xff]
        %v1099 = vld [vmem:[%s2 + $0x940] sm:$0xff]
        %v1100 = vld [vmem:[%s2 + $0x948] sm:$0xff]
        %v1101 = vld [vmem:[%s2 + $0x950] sm:$0xff]
        %v1102 = vld [vmem:[%s2 + $0x958] sm:$0xff]
        %v1103 = vld [vmem:[%s2 + $0x960] sm:$0xff]
        %v1104 = vld [vmem:[%s2 + $0x968] sm:$0xff]
        %v1105 = vld [vmem:[%s2 + $0x970] sm:$0xff]
        %v1106 = vld [vmem:[%s2 + $0x978] sm:$0xff]
        %v1107 = vld [vmem:[%s2 + $0x980] sm:$0xff]
        %v1108 = vld [vmem:[%s2 + $0x988] sm:$0xff]
        %v1109 = vld [vmem:[%s2 + $0x990] sm:$0xff]
        %v1110 = vld [vmem:[%s2 + $0x998] sm:$0xff]
        %v1111 = vld [vmem:[%s2 + $0x9a0] sm:$0xff]
        %v1112 = vld [vmem:[%s2 + $0x9a8] sm:$0xff]
        %v1113 = vld [vmem:[%s2 + $0x9b0] sm:$0xff]
        %v1114 = vld [vmem:[%s2 + $0x9b8] sm:$0xff]
        %v1115 = vld [vmem:[%s2 + $0x9c0] sm:$0xff]
        %v1116 = vld [vmem:[%s2 + $0x9c8] sm:$0xff]
        %v1117 = vld [vmem:[%s2 + $0x9d0] sm:$0xff]
        %v1118 = vld [vmem:[%s2 + $0x9d8] sm:$0xff]
        %v1119 = vld [vmem:[%s2 + $0x9e0] sm:$0xff]
        %v1120 = vld [vmem:[%s2 + $0x9e8] sm:$0xff]
        %v1121 = vld [vmem:[%s2 + $0x9f0] sm:$0xff]
        %v1122 = vld [vmem:[%s2 + $0x9f8] sm:$0xff]
        %v1123 = vld [vmem:[%s2 + $0xa00] sm:$0xff]
        %v1124 = vld [vmem:[%s2 + $0xa08] sm:$0xff]
        %v1125 = vld [vmem:[%s2 + $0xa10] sm:$0xff]
        %v1126 = vld [vmem:[%s2 + $0xa18] sm:$0xff]
        %v1127 = vld [vmem:[%s2 + $0xa20] sm:$0xff]
        %v1128 = vld [vmem:[%s2 + $0xa28] sm:$0xff]
        %v1129 = vld [vmem:[%s2 + $0xa30] sm:$0xff]
        %v1130 = vld [vmem:[%s2 + $0xa38] sm:$0xff]
        %v1131 = vld [vmem:[%s2 + $0xa40] sm:$0xff]
        %v1132 = vld [vmem:[%s2 + $0xa48] sm:$0xff]
        %v1133 = vld [vmem:[%s2 + $0xa50] sm:$0xff]
        %v1134 = vld [vmem:[%s2 + $0xa58] sm:$0xff]
        %v1135 = vld [vmem:[%s2 + $0xa60] sm:$0xff]
        %v1136 = vld [vmem:[%s2 + $0xa68] sm:$0xff]
        %v1137 = vld [vmem:[%s2 + $0xa70] sm:$0xff]
        %v1138 = vld [vmem:[%s2 + $0xa78] sm:$0xff]
        %v1139 = vld [vmem:[%s2 + $0xa80] sm:$0xff]
        %v1140 = vld [vmem:[%s2 + $0xa88] sm:$0xff]
        %v1141 = vld [vmem:[%s2 + $0xa90] sm:$0xff]
        %v1142 = vld [vmem:[%s2 + $0xa98] sm:$0xff]
        %v1143 = vld [vmem:[%s2 + $0xaa0] sm:$0xff]
        %v1144 = vld [vmem:[%s2 + $0xaa8] sm:$0xff]
        %v1145 = vld [vmem:[%s2 + $0xab0] sm:$0xff]
        %v1146 = vld [vmem:[%s2 + $0xab8] sm:$0xff]
        %v1147 = vld [vmem:[%s2 + $0xac0] sm:$0xff]
        %v1148 = vld [vmem:[%s2 + $0xac8] sm:$0xff]
        %v1149 = vld [vmem:[%s2 + $0xad0] sm:$0xff]
        %v1150 = vld [vmem:[%s2 + $0xad8] sm:$0xff]
        %v1151 = vld [vmem:[%s2 + $0xae0] sm:$0xff]
        %v1152 = vld [vmem:[%s2 + $0xae8] sm:$0xff]
        %v1153 = vld [vmem:[%s2 + $0xaf0] sm:$0xff]
        %v1154 = vld [vmem:[%s2 + $0xaf8] sm:$0xff]
        %v1155 = vld [vmem:[%s2 + $0xb00] sm:$0xff]
        %v1156 = vld [vmem:[%s2 + $0xb08] sm:$0xff]
        %v1157 = vld [vmem:[%s2 + $0xb10] sm:$0xff]
        %v1158 = vld [vmem:[%s2 + $0xb18] sm:$0xff]
        %v1159 = vld [vmem:[%s2 + $0xb20] sm:$0xff]
        %v1160 = vld [vmem:[%s2 + $0xb28] sm:$0xff]
        %v1161 = vld [vmem:[%s2 + $0xb30] sm:$0xff]
        %v1162 = vld [vmem:[%s2 + $0xb38] sm:$0xff]
        %v1163 = vld [vmem:[%s2 + $0xb40] sm:$0xff]
        %v1164 = vld [vmem:[%s2 + $0xb48] sm:$0xff]
        %v1165 = vld [vmem:[%s2 + $0xb50] sm:$0xff]
        %v1166 = vld [vmem:[%s2 + $0xb58] sm:$0xff]
        %v1167 = vld [vmem:[%s2 + $0xb60] sm:$0xff]
        %v1168 = vld [vmem:[%s2 + $0xb68] sm:$0xff]
        %v1169 = vld [vmem:[%s2 + $0xb70] sm:$0xff]
        %v1170 = vld [vmem:[%s2 + $0xb78] sm:$0xff]
        %v1171 = vld [vmem:[%s2 + $0xb80] sm:$0xff]
        %v1172 = vld [vmem:[%s2 + $0xb88] sm:$0xff]
        %v1173 = vld [vmem:[%s2 + $0xb90] sm:$0xff]
        %v1174 = vld [vmem:[%s2 + $0xb98] sm:$0xff]
        %v1175 = vld [vmem:[%s2 + $0xba0] sm:$0xff]
        %v1176 = vld [vmem:[%s2 + $0xba8] sm:$0xff]
        %v1177 = vld [vmem:[%s2 + $0xbb0] sm:$0xff]
        %v1178 = vld [vmem:[%s2 + $0xbb8] sm:$0xff]
        %v1179 = vld [vmem:[%s2 + $0xbc0] sm:$0xff]
        %v1180 = vld [vmem:[%s2 + $0xbc8] sm:$0xff]
        %v1181 = vld [vmem:[%s2 + $0xbd0] sm:$0xff]
        %v1182 = vld [vmem:[%s2 + $0xbd8] sm:$0xff]
        %v1183 = vld [vmem:[%s2 + $0xbe0] sm:$0xff]
        %v1184 = vld [vmem:[%s2 + $0xbe8] sm:$0xff]
        %v1185 = vld [vmem:[%s2 + $0xbf0] sm:$0xff]
        %v1186 = vld [vmem:[%s2 + $0xbf8] sm:$0xff]
        %v1187 = vld [vmem:[%s2 + $0xc00] sm:$0xff]
        %v1188 = vld [vmem:[%s2 + $0xc08] sm:$0xff]
        %v1189 = vld [vmem:[%s2 + $0xc10] sm:$0xff]
        %v1190 = vld [vmem:[%s2 + $0xc18] sm:$0xff]
        %v1191 = vld [vmem:[%s2 + $0xc20] sm:$0xff]
        %v1192 = vld [vmem:[%s2 + $0xc28] sm:$0xff]
        %v1193 = vld [vmem:[%s2 + $0xc30] sm:$0xff]
        %v1194 = vld [vmem:[%s2 + $0xc38] sm:$0xff]
        %v1195 = vld [vmem:[%s2 + $0xc40] sm:$0xff]
        %v1196 = vld [vmem:[%s2 + $0xc48] sm:$0xff]
        %v1197 = vld [vmem:[%s2 + $0xc50] sm:$0xff]
        %v1198 = vld [vmem:[%s2 + $0xc58] sm:$0xff]
        %v1199 = vld [vmem:[%s2 + $0xc60] sm:$0xff]
        %v1200 = vld [vmem:[%s2 + $0xc68] sm:$0xff]
        %v1201 = vld [vmem:[%s2 + $0xc70] sm:$0xff]
        %v1202 = vld [vmem:[%s2 + $0xc78] sm:$0xff]
        %v1203 = vld [vmem:[%s2 + $0xc80] sm:$0xff]
        %v1204 = vld [vmem:[%s2 + $0xc88] sm:$0xff]
        %v1205 = vld [vmem:[%s2 + $0xc90] sm:$0xff]
        %v1206 = vld [vmem:[%s2 + $0xc98] sm:$0xff]
        %v1207 = vld [vmem:[%s2 + $0xca0] sm:$0xff]
        %v1208 = vld [vmem:[%s2 + $0xca8] sm:$0xff]
        %v1209 = vld [vmem:[%s2 + $0xcb0] sm:$0xff]
        %v1210 = vld [vmem:[%s2 + $0xcb8] sm:$0xff]
        %v1211 = vld [vmem:[%s2 + $0xcc0] sm:$0xff]
        %v1212 = vld [vmem:[%s2 + $0xcc8] sm:$0xff]
        %v1213 = vld [vmem:[%s2 + $0xcd0] sm:$0xff]
        %v1214 = vld [vmem:[%s2 + $0xcd8] sm:$0xff]
        %v1215 = vld [vmem:[%s2 + $0xce0] sm:$0xff]
        %v1216 = vld [vmem:[%s2 + $0xce8] sm:$0xff]
        %v1217 = vld [vmem:[%s2 + $0xcf0] sm:$0xff]
        %v1218 = vld [vmem:[%s2 + $0xcf8] sm:$0xff]
        %v1219 = vld [vmem:[%s2 + $0xd00] sm:$0xff]
        %v1220 = vld [vmem:[%s2 + $0xd08] sm:$0xff]
        %v1221 = vld [vmem:[%s2 + $0xd10] sm:$0xff]
        %v1222 = vld [vmem:[%s2 + $0xd18] sm:$0xff]
        %v1223 = vld [vmem:[%s2 + $0xd20] sm:$0xff]
        %v1224 = vld [vmem:[%s2 + $0xd28] sm:$0xff]
        %v1225 = vld [vmem:[%s2 + $0xd30] sm:$0xff]
        %v1226 = vld [vmem:[%s2 + $0xd38] sm:$0xff]
        %v1227 = vld [vmem:[%s2 + $0xd40] sm:$0xff]
        %v1228 = vld [vmem:[%s2 + $0xd48] sm:$0xff]
        %v1229 = vld [vmem:[%s2 + $0xd50] sm:$0xff]
        %v1230 = vld [vmem:[%s2 + $0xd58] sm:$0xff]
        %v1231 = vld [vmem:[%s2 + $0xd60] sm:$0xff]
        %v1232 = vld [vmem:[%s2 + $0xd68] sm:$0xff]
        %v1233 = vld [vmem:[%s2 + $0xd70] sm:$0xff]
        %v1234 = vld [vmem:[%s2 + $0xd78] sm:$0xff]
        %v1235 = vld [vmem:[%s2 + $0xd80] sm:$0xff]
        %v1236 = vld [vmem:[%s2 + $0xd88] sm:$0xff]
        %v1237 = vld [vmem:[%s2 + $0xd90] sm:$0xff]
        %v1238 = vld [vmem:[%s2 + $0xd98] sm:$0xff]
        %v1239 = vld [vmem:[%s2 + $0xda0] sm:$0xff]
        %v1240 = vld [vmem:[%s2 + $0xda8] sm:$0xff]
        %v1241 = vld [vmem:[%s2 + $0xdb0] sm:$0xff]
        %v1242 = vld [vmem:[%s2 + $0xdb8] sm:$0xff]
        %v1243 = vld [vmem:[%s2 + $0xdc0] sm:$0xff]
        %v1244 = vld [vmem:[%s2 + $0xdc8] sm:$0xff]
        %v1245 = vld [vmem:[%s2 + $0xdd0] sm:$0xff]
        %v1246 = vld [vmem:[%s2 + $0xdd8] sm:$0xff]
        %v1247 = vld [vmem:[%s2 + $0xde0] sm:$0xff]
        %v1248 = vld [vmem:[%s2 + $0xde8] sm:$0xff]
        %v1249 = vld [vmem:[%s2 + $0xdf0] sm:$0xff]
        %v1250 = vld [vmem:[%s2 + $0xdf8] sm:$0xff]
        %v1251 = vld [vmem:[%s2 + $0xe00] sm:$0xff]
        %v1252 = vld [vmem:[%s2 + $0xe08] sm:$0xff]
        %v1253 = vld [vmem:[%s2 + $0xe10] sm:$0xff]
        %v1254 = vld [vmem:[%s2 + $0xe18] sm:$0xff]
        %v1255 = vld [vmem:[%s2 + $0xe20] sm:$0xff]
        %v1256 = vld [vmem:[%s2 + $0xe28] sm:$0xff]
        %v1257 = vld [vmem:[%s2 + $0xe30] sm:$0xff]
        %v1258 = vld [vmem:[%s2 + $0xe38] sm:$0xff]
        %v1259 = vld [vmem:[%s2 + $0xe40] sm:$0xff]
        %v1260 = vld [vmem:[%s2 + $0xe48] sm:$0xff]
        %v1261 = vld [vmem:[%s2 + $0xe50] sm:$0xff]
        %v1262 = vld [vmem:[%s2 + $0xe58] sm:$0xff]
        %v1263 = vld [vmem:[%s2 + $0xe60] sm:$0xff]
        %v1264 = vld [vmem:[%s2 + $0xe68] sm:$0xff]
        %v1265 = vld [vmem:[%s2 + $0xe70] sm:$0xff]
        %v1266 = vld [vmem:[%s2 + $0xe78] sm:$0xff]
        %v1267 = vld [vmem:[%s2 + $0xe80] sm:$0xff]
        %v1268 = vld [vmem:[%s2 + $0xe88] sm:$0xff]
        %v1269 = vld [vmem:[%s2 + $0xe90] sm:$0xff]
        %v1270 = vld [vmem:[%s2 + $0xe98] sm:$0xff]
        %v1271 = vld [vmem:[%s2 + $0xea0] sm:$0xff]
        %v1272 = vld [vmem:[%s2 + $0xea8] sm:$0xff]
        %v1273 = vld [vmem:[%s2 + $0xeb0] sm:$0xff]
        %v1274 = vld [vmem:[%s2 + $0xeb8] sm:$0xff]
        %v1275 = vld [vmem:[%s2 + $0xec0] sm:$0xff]
        %v1276 = vld [vmem:[%s2 + $0xec8] sm:$0xff]
        %v1277 = vld [vmem:[%s2 + $0xed0] sm:$0xff]
        %v1278 = vld [vmem:[%s2 + $0xed8] sm:$0xff]
        %v1279 = vld [vmem:[%s2 + $0xee0] sm:$0xff]
        %v1280 = vld [vmem:[%s2 + $0xee8] sm:$0xff]
        %v1281 = vld [vmem:[%s2 + $0xef0] sm:$0xff]
        %v1282 = vld [vmem:[%s2 + $0xef8] sm:$0xff]
        %v1283 = vld [vmem:[%s2 + $0xf00] sm:$0xff]
        %v1284 = vld [vmem:[%s2 + $0xf08] sm:$0xff]
        %v1285 = vld [vmem:[%s2 + $0xf10] sm:$0xff]
        %v1286 = vld [vmem:[%s2 + $0xf18] sm:$0xff]
        %v1287 = vld [vmem:[%s2 + $0xf20] sm:$0xff]
        %v1288 = vld [vmem:[%s2 + $0xf28] sm:$0xff]
        %v1289 = vld [vmem:[#allocation5] sm:$0xff]
        %v1290 = vld [vmem:[#allocation5 + $0x8] sm:$0xff]
        %v1291 = vld [vmem:[#allocation5 + $0x10] sm:$0x3]
        %v1295 = vlaneseq
        %v1296 = vshrl.u32 %v1295, 7
        %v1297 = vsub.s32 0, %v1296
        %v1298 = vrot.slane %v1289, %v1297
        %v1299 = vlaneseq
        %v1300 = vshrl.u32 %v1299, 7
        %v1301 = vsub.s32 1, %v1300
        %v1302 = vrot.slane %v1289, %v1301
        %v1303 = vlaneseq
        %v1304 = vshrl.u32 %v1303, 7
        %v1305 = vsub.s32 2, %v1304
        %v1306 = vrot.slane %v1289, %v1305
        %v1307 = vlaneseq
        %v1308 = vshrl.u32 %v1307, 7
        %v1309 = vsub.s32 3, %v1308
        %v1310 = vrot.slane %v1289, %v1309
        %v1311 = vlaneseq
        %v1312 = vshrl.u32 %v1311, 7
        %v1313 = vsub.s32 4, %v1312
        %v1314 = vrot.slane %v1289, %v1313
        %v1315 = vlaneseq
        %v1316 = vshrl.u32 %v1315, 7
        %v1317 = vsub.s32 5, %v1316
        %v1318 = vrot.slane %v1289, %v1317
        %v1319 = vlaneseq
        %v1320 = vshrl.u32 %v1319, 7
        %v1321 = vsub.s32 6, %v1320
        %v1322 = vrot.slane %v1289, %v1321
        %v1323 = vlaneseq
        %v1324 = vshrl.u32 %v1323, 7
        %v1325 = vsub.s32 7, %v1324
        %v1326 = vrot.slane %v1289, %v1325
        %v1327 = vlaneseq
        %v1328 = vshrl.u32 %v1327, 7
        %v1329 = vsub.s32 0, %v1328
        %v1330 = vrot.slane %v1290, %v1329
        %v1331 = vlaneseq
        %v1332 = vshrl.u32 %v1331, 7
        %v1333 = vsub.s32 1, %v1332
        %v1334 = vrot.slane %v1290, %v1333
        %v1335 = vlaneseq
        %v1336 = vshrl.u32 %v1335, 7
        %v1337 = vsub.s32 2, %v1336
        %v1338 = vrot.slane %v1290, %v1337
        %v1339 = vlaneseq
        %v1340 = vshrl.u32 %v1339, 7
        %v1341 = vsub.s32 3, %v1340
        %v1342 = vrot.slane %v1290, %v1341
        %v1343 = vlaneseq
        %v1344 = vshrl.u32 %v1343, 7
        %v1345 = vsub.s32 4, %v1344
        %v1346 = vrot.slane %v1290, %v1345
        %v1347 = vlaneseq
        %v1348 = vshrl.u32 %v1347, 7
        %v1349 = vsub.s32 5, %v1348
        %v1350 = vrot.slane %v1290, %v1349
        %v1351 = vlaneseq
        %v1352 = vshrl.u32 %v1351, 7
        %v1353 = vsub.s32 6, %v1352
        %v1354 = vrot.slane %v1290, %v1353
        %v1355 = vlaneseq
        %v1356 = vshrl.u32 %v1355, 7
        %v1357 = vsub.s32 7, %v1356
        %v1358 = vrot.slane %v1290, %v1357
        %v1359 = vlaneseq
        %v1360 = vshrl.u32 %v1359, 7
        %v1361 = vsub.s32 0, %v1360
        %v1362 = vrot.slane %v1291, %v1361
        %v1363 = vlaneseq
        %v1364 = vshrl.u32 %v1363, 7
        %v1365 = vsub.s32 1, %v1364
        %v1366 = vrot.slane %v1291, %v1365
        %vm1385 = vcmask 719872
        %v1387 = vsel %vm1385, %v795, 0
        %v1390 = vsel %vm1385, %v796, 0
        %v1393 = vsel %vm1385, %v797, 0
        %v1396 = vsel %vm1385, %v798, 0
        %v1399 = vsel %vm1385, %v799, 0
        %v1402 = vsel %vm1385, %v800, 0
        %v1405 = vsel %vm1385, %v801, 0
        %v1408 = vsel %vm1385, %v802, 0
        %1410 = vmatprep.subr.mxu0 %v804
        %1411 = vmatpush1.msra.mxu0 %v803
        %1412 = vmatprep.subr.mxu0 %v822
        %1413 = vmatpush1.msra.mxu0 %v821
        %1414 = vmatprep.subr.mxu0 %v840
        %1415 = vmatpush1.msra.mxu0 %v839
        %1416 = vmatprep.subr.mxu0 %v858
        %1417 = vmatpush1.msra.mxu0 %v857
        %1418 = vmatprep.subr.mxu0 %v876
        %1419 = vmatpush1.msra.mxu0 %v875
        %1420 = vmatprep.subr.mxu0 %v894
        %1421 = vmatpush1.msra.mxu0 %v893
        %1422 = vmatprep.subr.mxu0 %v912
        %1423 = vmatpush1.msra.mxu0 %v911
        %1424 = vmatprep.subr.mxu0 %v930
        %1425 = vmatpush1.msra.mxu0 %v929
        %1426 = vmatprep.subr.mxu0 %v948
        %1427 = vmatpush1.msra.mxu0 %v947
        %1428 = vmatprep.subr.mxu0 %v966
        %1429 = vmatpush1.msra.mxu0 %v965
        %1430 = vmatprep.subr.mxu0 %v984
        %1431 = vmatpush1.msra.mxu0 %v983
        %1432 = vmatprep.subr.mxu0 %v1002
        %1433 = vmatpush1.msra.mxu0 %v1001
        %1434 = vmatprep.subr.mxu0 %v1020
        %1435 = vmatpush1.msra.mxu0 %v1019
        %1436 = vmatprep.subr.mxu0 %v1038
        %1437 = vmatpush1.msra.mxu0 %v1037
        %1438 = vmatprep.subr.mxu0 %v1056
        %1439 = vmatpush1.msra.mxu0 %v1055
        %1440 = vmatprep.subr.mxu0 %v1074
        %1441 = vmatpush1.msra.mxu0 %v1073
        %1442 = vmatprep.subr.mxu0 %v1092
        %1443 = vmatpush1.msra.mxu0 %v1091
        %1444 = vmatprep.subr.mxu0 %v1110
        %1445 = vmatpush1.msra.mxu0 %v1109
        %1446 = vmatprep.subr.mxu0 %v1128
        %1447 = vmatpush1.msra.mxu0 %v1127
        %1448 = vmatprep.subr.mxu0 %v1146
        %1449 = vmatpush1.msra.mxu0 %v1145
        %1450 = vmatprep.subr.mxu0 %v1164
        %1451 = vmatpush1.msra.mxu0 %v1163
        %1452 = vmatprep.subr.mxu0 %v1182
        %1453 = vmatpush1.msra.mxu0 %v1181
        %1454 = vmatprep.subr.mxu0 %v1200
        %1455 = vmatpush1.msra.mxu0 %v1199
        %1456 = vmatprep.subr.mxu0 %v1218
        %1457 = vmatpush1.msra.mxu0 %v1217
        %1458 = vmatprep.subr.mxu0 %v1236
        %1459 = vmatpush1.msra.mxu0 %v1235
        %1460 = vmatprep.subr.mxu0 %v1254
        %1461 = vmatpush1.msra.mxu0 %v1253
        %1462 = vmatprep.subr.mxu0 %v1272
        %1463 = vmatpush1.msra.mxu0 %v1271
        %1464 = vmatprep.subr.mxu0 0.0
        %1465 = vmatpush1.msra.mxu0 0.0
        %1466 = vmatprep.subr.mxu0 0.0
        %1467 = vmatpush1.msra.mxu0 0.0
        %1468 = vmatprep.subr.mxu0 0.0
        %1469 = vmatpush1.msra.mxu0 0.0
        %1470 = vmatprep.subr.mxu0 0.0
        %1471 = vmatpush1.msra.mxu0 0.0
        %1472 = vmatprep.subr.mxu0 0.0
        %1473 = vmatpush1.msra.mxu0 0.0
        %1474 = vmatprep.mubr.f32.mxu0 %v1387
        %1475 = vmatmul.mubr.f32.gmra.mrb[0].mxu0 %v786
        %v1476 = vpop.f32.mrb[0].mxu0
        %v1477 = vadd.f32 %v1298, %v1476
        %v1478 = vpop.f32.mrb[0].mxu0
        %v1479 = vadd.f32 %v1302, %v1478
        %1480 = vmatprep.mubr.f32.mxu0 %v1390
        %1481 = vmatmul.mubr.f32.gmra.mrb[0].mxu0 %v787
        %v1482 = vpop.f32.mrb[0].mxu0
        %v1483 = vadd.f32 %v1298, %v1482
        %v1484 = vpop.f32.mrb[0].mxu0
        %v1485 = vadd.f32 %v1302, %v1484
        %1486 = vmatprep.mubr.f32.mxu0 %v1393
        %1487 = vmatmul.mubr.f32.gmra.mrb[0].mxu0 %v788
        %v1488 = vpop.f32.mrb[0].mxu0
        %v1489 = vadd.f32 %v1298, %v1488
        %v1490 = vpop.f32.mrb[0].mxu0
        %v1491 = vadd.f32 %v1302, %v1490
        %1492 = vmatprep.mubr.f32.mxu0 %v1396
        %1493 = vmatmul.mubr.f32.gmra.mrb[0].mxu0 %v789
        %v1494 = vpop.f32.mrb[0].mxu0
        %v1495 = vadd.f32 %v1298, %v1494
        %v1496 = vpop.f32.mrb[0].mxu0
        %v1497 = vadd.f32 %v1302, %v1496
        %1498 = vmatprep.mubr.f32.mxu0 %v1399
        %1499 = vmatmul.mubr.f32.gmra.mrb[0].mxu0 %v790
        %v1500 = vpop.f32.mrb[0].mxu0
        %v1501 = vadd.f32 %v1298, %v1500
        %v1502 = vpop.f32.mrb[0].mxu0
        %v1503 = vadd.f32 %v1302, %v1502
        %1504 = vmatprep.mubr.f32.mxu0 %v1402
        %1505 = vmatmul.mubr.f32.gmra.mrb[0].mxu0 %v791
        %v1506 = vpop.f32.mrb[0].mxu0
        %v1507 = vadd.f32 %v1298, %v1506
        %v1508 = vpop.f32.mrb[0].mxu0
        %v1509 = vadd.f32 %v1302, %v1508
        %1510 = vmatprep.mubr.f32.mxu0 %v1405
        %1511 = vmatmul.mubr.f32.gmra.mrb[0].mxu0 %v792
        %v1512 = vpop.f32.mrb[0].mxu0
        %v1513 = vadd.f32 %v1298, %v1512
        %v1514 = vpop.f32.mrb[0].mxu0
        %v1515 = vadd.f32 %v1302, %v1514
        %1516 = vmatprep.mubr.f32.mxu0 %v1408
        %1517 = vmatmul.mubr.f32.gmra.mrb[0].mxu0 %v793
        %v1518 = vpop.f32.mrb[0].mxu0
        %v1519 = vadd.f32 %v1298, %v1518
        %v1520 = vpop.f32.mrb[0].mxu0
        %v1521 = vadd.f32 %v1302, %v1520
        %1522 = vdwg.mxu0
        %1523 = vmatprep.subr.mxu0 %v806
        %1524 = vmatpush1.msra.mxu0 %v805
        %1525 = vmatprep.subr.mxu0 %v824
        %1526 = vmatpush1.msra.mxu0 %v823
        %1527 = vmatprep.subr.mxu0 %v842
        %1528 = vmatpush1.msra.mxu0 %v841
        %1529 = vmatprep.subr.mxu0 %v860
        %1530 = vmatpush1.msra.mxu0 %v859
        %1531 = vmatprep.subr.mxu0 %v878
        %1532 = vmatpush1.msra.mxu0 %v877
        %1533 = vmatprep.subr.mxu0 %v896
        %1534 = vmatpush1.msra.mxu0 %v895
        %1535 = vmatprep.subr.mxu0 %v914
        %1536 = vmatpush1.msra.mxu0 %v913
        %1537 = vmatprep.subr.mxu0 %v932
        %1538 = vmatpush1.msra.mxu0 %v931
        %1539 = vmatprep.subr.mxu0 %v950
        %1540 = vmatpush1.msra.mxu0 %v949
        %1541 = vmatprep.subr.mxu0 %v968
        %1542 = vmatpush1.msra.mxu0 %v967
        %1543 = vmatprep.subr.mxu0 %v986
        %1544 = vmatpush1.msra.mxu0 %v985
        %1545 = vmatprep.subr.mxu0 %v1004
        %1546 = vmatpush1.msra.mxu0 %v1003
        %1547 = vmatprep.subr.mxu0 %v1022
        %1548 = vmatpush1.msra.mxu0 %v1021
        %1549 = vmatprep.subr.mxu0 %v1040
        %1550 = vmatpush1.msra.mxu0 %v1039
        %1551 = vmatprep.subr.mxu0 %v1058
        %1552 = vmatpush1.msra.mxu0 %v1057
        %1553 = vmatprep.subr.mxu0 %v1076
        %1554 = vmatpush1.msra.mxu0 %v1075
        %1555 = vmatprep.subr.mxu0 %v1094
        %1556 = vmatpush1.msra.mxu0 %v1093
        %1557 = vmatprep.subr.mxu0 %v1112
        %1558 = vmatpush1.msra.mxu0 %v1111
        %1559 = vmatprep.subr.mxu0 %v1130
        %1560 = vmatpush1.msra.mxu0 %v1129
        %1561 = vmatprep.subr.mxu0 %v1148
        %1562 = vmatpush1.msra.mxu0 %v1147
        %1563 = vmatprep.subr.mxu0 %v1166
        %1564 = vmatpush1.msra.mxu0 %v1165
        %1565 = vmatprep.subr.mxu0 %v1184
        %1566 = vmatpush1.msra.mxu0 %v1183
        %1567 = vmatprep.subr.mxu0 %v1202
        %1568 = vmatpush1.msra.mxu0 %v1201
        %1569 = vmatprep.subr.mxu0 %v1220
        %1570 = vmatpush1.msra.mxu0 %v1219
        %1571 = vmatprep.subr.mxu0 %v1238
        %1572 = vmatpush1.msra.mxu0 %v1237
        %1573 = vmatprep.subr.mxu0 %v1256
        %1574 = vmatpush1.msra.mxu0 %v1255
        %1575 = vmatprep.subr.mxu0 %v1274
        %1576 = vmatpush1.msra.mxu0 %v1273
        %1577 = vmatprep.subr.mxu0 0.0
        %1578 = vmatpush1.msra.mxu0 0.0
        %1579 = vmatprep.subr.mxu0 0.0
        %1580 = vmatpush1.msra.mxu0 0.0
        %1581 = vmatprep.subr.mxu0 0.0
        %1582 = vmatpush1.msra.mxu0 0.0
        %1583 = vmatprep.subr.mxu0 0.0
        %1584 = vmatpush1.msra.mxu0 0.0
        %1585 = vmatprep.subr.mxu0 0.0
        %1586 = vmatpush1.msra.mxu0 0.0
        %1587 = vmatprep.mubr.f32.mxu0 %v1387
        %1588 = vmatmul.mubr.f32.gmra.mrb[0].mxu0 %v786
        %v1589 = vpop.f32.mrb[0].mxu0
        %v1590 = vadd.f32 %v1306, %v1589
        %v1591 = vpop.f32.mrb[0].mxu0
        %v1592 = vadd.f32 %v1310, %v1591
        %1593 = vmatprep.mubr.f32.mxu0 %v1390
        %1594 = vmatmul.mubr.f32.gmra.mrb[0].mxu0 %v787
        %v1595 = vpop.f32.mrb[0].mxu0
        %v1596 = vadd.f32 %v1306, %v1595
        %v1597 = vpop.f32.mrb[0].mxu0
        %v1598 = vadd.f32 %v1310, %v1597
        %1599 = vmatprep.mubr.f32.mxu0 %v1393
        %1600 = vmatmul.mubr.f32.gmra.mrb[0].mxu0 %v788
        %v1601 = vpop.f32.mrb[0].mxu0
        %v1602 = vadd.f32 %v1306, %v1601
        %v1603 = vpop.f32.mrb[0].mxu0
        %v1604 = vadd.f32 %v1310, %v1603
        %1605 = vmatprep.mubr.f32.mxu0 %v1396
        %1606 = vmatmul.mubr.f32.gmra.mrb[0].mxu0 %v789
        %v1607 = vpop.f32.mrb[0].mxu0
        %v1608 = vadd.f32 %v1306, %v1607
        %v1609 = vpop.f32.mrb[0].mxu0
        %v1610 = vadd.f32 %v1310, %v1609
        %1611 = vmatprep.mubr.f32.mxu0 %v1399
        %1612 = vmatmul.mubr.f32.gmra.mrb[0].mxu0 %v790
        %v1613 = vpop.f32.mrb[0].mxu0
        %v1614 = vadd.f32 %v1306, %v1613
        %v1615 = vpop.f32.mrb[0].mxu0
        %v1616 = vadd.f32 %v1310, %v1615
        %1617 = vmatprep.mubr.f32.mxu0 %v1402
        %1618 = vmatmul.mubr.f32.gmra.mrb[0].mxu0 %v791
        %v1619 = vpop.f32.mrb[0].mxu0
        %v1620 = vadd.f32 %v1306, %v1619
        %v1621 = vpop.f32.mrb[0].mxu0
        %v1622 = vadd.f32 %v1310, %v1621
        %1623 = vmatprep.mubr.f32.mxu0 %v1405
        %1624 = vmatmul.mubr.f32.gmra.mrb[0].mxu0 %v792
        %v1625 = vpop.f32.mrb[0].mxu0
        %v1626 = vadd.f32 %v1306, %v1625
        %v1627 = vpop.f32.mrb[0].mxu0
        %v1628 = vadd.f32 %v1310, %v1627
        %1629 = vmatprep.mubr.f32.mxu0 %v1408
        %1630 = vmatmul.mubr.f32.gmra.mrb[0].mxu0 %v793
        %v1631 = vpop.f32.mrb[0].mxu0
        %v1632 = vadd.f32 %v1306, %v1631
        %v1633 = vpop.f32.mrb[0].mxu0
        %v1634 = vadd.f32 %v1310, %v1633
        %1635 = vdwg.mxu0
        %1636 = vmatprep.subr.mxu0 %v808
        %1637 = vmatpush1.msra.mxu0 %v807
        %1638 = vmatprep.subr.mxu0 %v826
        %1639 = vmatpush1.msra.mxu0 %v825
        %1640 = vmatprep.subr.mxu0 %v844
        %1641 = vmatpush1.msra.mxu0 %v843
        %1642 = vmatprep.subr.mxu0 %v862
        %1643 = vmatpush1.msra.mxu0 %v861
        %1644 = vmatprep.subr.mxu0 %v880
        %1645 = vmatpush1.msra.mxu0 %v879
        %1646 = vmatprep.subr.mxu0 %v898
        %1647 = vmatpush1.msra.mxu0 %v897
        %1648 = vmatprep.subr.mxu0 %v916
        %1649 = vmatpush1.msra.mxu0 %v915
        %1650 = vmatprep.subr.mxu0 %v934
        %1651 = vmatpush1.msra.mxu0 %v933
        %1652 = vmatprep.subr.mxu0 %v952
        %1653 = vmatpush1.msra.mxu0 %v951
        %1654 = vmatprep.subr.mxu0 %v970
        %1655 = vmatpush1.msra.mxu0 %v969
        %1656 = vmatprep.subr.mxu0 %v988
        %1657 = vmatpush1.msra.mxu0 %v987
        %1658 = vmatprep.subr.mxu0 %v1006
        %1659 = vmatpush1.msra.mxu0 %v1005
        %1660 = vmatprep.subr.mxu0 %v1024
        %1661 = vmatpush1.msra.mxu0 %v1023
        %1662 = vmatprep.subr.mxu0 %v1042
        %1663 = vmatpush1.msra.mxu0 %v1041
        %1664 = vmatprep.subr.mxu0 %v1060
        %1665 = vmatpush1.msra.mxu0 %v1059
        %1666 = vmatprep.subr.mxu0 %v1078
        %1667 = vmatpush1.msra.mxu0 %v1077
        %1668 = vmatprep.subr.mxu0 %v1096
        %1669 = vmatpush1.msra.mxu0 %v1095
        %1670 = vmatprep.subr.mxu0 %v1114
        %1671 = vmatpush1.msra.mxu0 %v1113
        %1672 = vmatprep.subr.mxu0 %v1132
        %1673 = vmatpush1.msra.mxu0 %v1131
        %1674 = vmatprep.subr.mxu0 %v1150
        %1675 = vmatpush1.msra.mxu0 %v1149
        %1676 = vmatprep.subr.mxu0 %v1168
        %1677 = vmatpush1.msra.mxu0 %v1167
        %1678 = vmatprep.subr.mxu0 %v1186
        %1679 = vmatpush1.msra.mxu0 %v1185
        %1680 = vmatprep.subr.mxu0 %v1204
        %1681 = vmatpush1.msra.mxu0 %v1203
        %1682 = vmatprep.subr.mxu0 %v1222
        %1683 = vmatpush1.msra.mxu0 %v1221
        %1684 = vmatprep.subr.mxu0 %v1240
        %1685 = vmatpush1.msra.mxu0 %v1239
        %1686 = vmatprep.subr.mxu0 %v1258
        %1687 = vmatpush1.msra.mxu0 %v1257
        %1688 = vmatprep.subr.mxu0 %v1276
        %1689 = vmatpush1.msra.mxu0 %v1275
        %1690 = vmatprep.subr.mxu0 0.0
        %1691 = vmatpush1.msra.mxu0 0.0
        %1692 = vmatprep.subr.mxu0 0.0
        %1693 = vmatpush1.msra.mxu0 0.0
        %1694 = vmatprep.subr.mxu0 0.0
        %1695 = vmatpush1.msra.mxu0 0.0
        %1696 = vmatprep.subr.mxu0 0.0
        %1697 = vmatpush1.msra.mxu0 0.0
        %1698 = vmatprep.subr.mxu0 0.0
        %1699 = vmatpush1.msra.mxu0 0.0
        %1700 = vmatprep.mubr.f32.mxu0 %v1387
        %1701 = vmatmul.mubr.f32.gmra.mrb[0].mxu0 %v786
        %v1702 = vpop.f32.mrb[0].mxu0
        %v1703 = vadd.f32 %v1314, %v1702
        %v1704 = vpop.f32.mrb[0].mxu0
        %v1705 = vadd.f32 %v1318, %v1704
        %1706 = vmatprep.mubr.f32.mxu0 %v1390
        %1707 = vmatmul.mubr.f32.gmra.mrb[0].mxu0 %v787
        %v1708 = vpop.f32.mrb[0].mxu0
        %v1709 = vadd.f32 %v1314, %v1708
        %v1710 = vpop.f32.mrb[0].mxu0
        %v1711 = vadd.f32 %v1318, %v1710
        %1712 = vmatprep.mubr.f32.mxu0 %v1393
        %1713 = vmatmul.mubr.f32.gmra.mrb[0].mxu0 %v788
        %v1714 = vpop.f32.mrb[0].mxu0
        %v1715 = vadd.f32 %v1314, %v1714
        %v1716 = vpop.f32.mrb[0].mxu0
        %v1717 = vadd.f32 %v1318, %v1716
        %1718 = vmatprep.mubr.f32.mxu0 %v1396
        %1719 = vmatmul.mubr.f32.gmra.mrb[0].mxu0 %v789
        %v1720 = vpop.f32.mrb[0].mxu0
        %v1721 = vadd.f32 %v1314, %v1720
        %v1722 = vpop.f32.mrb[0].mxu0
        %v1723 = vadd.f32 %v1318, %v1722
        %1724 = vmatprep.mubr.f32.mxu0 %v1399
        %1725 = vmatmul.mubr.f32.gmra.mrb[0].mxu0 %v790
        %v1726 = vpop.f32.mrb[0].mxu0
        %v1727 = vadd.f32 %v1314, %v1726
        %v1728 = vpop.f32.mrb[0].mxu0
        %v1729 = vadd.f32 %v1318, %v1728
        %1730 = vmatprep.mubr.f32.mxu0 %v1402
        %1731 = vmatmul.mubr.f32.gmra.mrb[0].mxu0 %v791
        %v1732 = vpop.f32.mrb[0].mxu0
        %v1733 = vadd.f32 %v1314, %v1732
        %v1734 = vpop.f32.mrb[0].mxu0
        %v1735 = vadd.f32 %v1318, %v1734
        %1736 = vmatprep.mubr.f32.mxu0 %v1405
        %1737 = vmatmul.mubr.f32.gmra.mrb[0].mxu0 %v792
        %v1738 = vpop.f32.mrb[0].mxu0
        %v1739 = vadd.f32 %v1314, %v1738
        %v1740 = vpop.f32.mrb[0].mxu0
        %v1741 = vadd.f32 %v1318, %v1740
        %1742 = vmatprep.mubr.f32.mxu0 %v1408
        %1743 = vmatmul.mubr.f32.gmra.mrb[0].mxu0 %v793
        %v1744 = vpop.f32.mrb[0].mxu0
        %v1745 = vadd.f32 %v1314, %v1744
        %v1746 = vpop.f32.mrb[0].mxu0
        %v1747 = vadd.f32 %v1318, %v1746
        %1748 = vdwg.mxu0
        %1749 = vmatprep.subr.mxu0 %v810
        %1750 = vmatpush1.msra.mxu0 %v809
        %1751 = vmatprep.subr.mxu0 %v828
        %1752 = vmatpush1.msra.mxu0 %v827
        %1753 = vmatprep.subr.mxu0 %v846
        %1754 = vmatpush1.msra.mxu0 %v845
        %1755 = vmatprep.subr.mxu0 %v864
        %1756 = vmatpush1.msra.mxu0 %v863
        %1757 = vmatprep.subr.mxu0 %v882
        %1758 = vmatpush1.msra.mxu0 %v881
        %1759 = vmatprep.subr.mxu0 %v900
        %1760 = vmatpush1.msra.mxu0 %v899
        %1761 = vmatprep.subr.mxu0 %v918
        %1762 = vmatpush1.msra.mxu0 %v917
        %1763 = vmatprep.subr.mxu0 %v936
        %1764 = vmatpush1.msra.mxu0 %v935
        %1765 = vmatprep.subr.mxu0 %v954
        %1766 = vmatpush1.msra.mxu0 %v953
        %1767 = vmatprep.subr.mxu0 %v972
        %1768 = vmatpush1.msra.mxu0 %v971
        %1769 = vmatprep.subr.mxu0 %v990
        %1770 = vmatpush1.msra.mxu0 %v989
        %1771 = vmatprep.subr.mxu0 %v1008
        %1772 = vmatpush1.msra.mxu0 %v1007
        %1773 = vmatprep.subr.mxu0 %v1026
        %1774 = vmatpush1.msra.mxu0 %v1025
        %1775 = vmatprep.subr.mxu0 %v1044
        %1776 = vmatpush1.msra.mxu0 %v1043
        %1777 = vmatprep.subr.mxu0 %v1062
        %1778 = vmatpush1.msra.mxu0 %v1061
        %1779 = vmatprep.subr.mxu0 %v1080
        %1780 = vmatpush1.msra.mxu0 %v1079
        %1781 = vmatprep.subr.mxu0 %v1098
        %1782 = vmatpush1.msra.mxu0 %v1097
        %1783 = vmatprep.subr.mxu0 %v1116
        %1784 = vmatpush1.msra.mxu0 %v1115
        %1785 = vmatprep.subr.mxu0 %v1134
        %1786 = vmatpush1.msra.mxu0 %v1133
        %1787 = vmatprep.subr.mxu0 %v1152
        %1788 = vmatpush1.msra.mxu0 %v1151
        %1789 = vmatprep.subr.mxu0 %v1170
        %1790 = vmatpush1.msra.mxu0 %v1169
        %1791 = vmatprep.subr.mxu0 %v1188
        %1792 = vmatpush1.msra.mxu0 %v1187
        %1793 = vmatprep.subr.mxu0 %v1206
        %1794 = vmatpush1.msra.mxu0 %v1205
        %1795 = vmatprep.subr.mxu0 %v1224
        %1796 = vmatpush1.msra.mxu0 %v1223
        %1797 = vmatprep.subr.mxu0 %v1242
        %1798 = vmatpush1.msra.mxu0 %v1241
        %1799 = vmatprep.subr.mxu0 %v1260
        %1800 = vmatpush1.msra.mxu0 %v1259
        %1801 = vmatprep.subr.mxu0 %v1278
        %1802 = vmatpush1.msra.mxu0 %v1277
        %1803 = vmatprep.subr.mxu0 0.0
        %1804 = vmatpush1.msra.mxu0 0.0
        %1805 = vmatprep.subr.mxu0 0.0
        %1806 = vmatpush1.msra.mxu0 0.0
        %1807 = vmatprep.subr.mxu0 0.0
        %1808 = vmatpush1.msra.mxu0 0.0
        %1809 = vmatprep.subr.mxu0 0.0
        %1810 = vmatpush1.msra.mxu0 0.0
        %1811 = vmatprep.subr.mxu0 0.0
        %1812 = vmatpush1.msra.mxu0 0.0
        %1813 = vmatprep.mubr.f32.mxu0 %v1387
        %1814 = vmatmul.mubr.f32.gmra.mrb[0].mxu0 %v786
        %v1815 = vpop.f32.mrb[0].mxu0
        %v1816 = vadd.f32 %v1322, %v1815
        %v1817 = vpop.f32.mrb[0].mxu0
        %v1818 = vadd.f32 %v1326, %v1817
        %1819 = vmatprep.mubr.f32.mxu0 %v1390
        %1820 = vmatmul.mubr.f32.gmra.mrb[0].mxu0 %v787
        %v1821 = vpop.f32.mrb[0].mxu0
        %v1822 = vadd.f32 %v1322, %v1821
        %v1823 = vpop.f32.mrb[0].mxu0
        %v1824 = vadd.f32 %v1326, %v1823
        %1825 = vmatprep.mubr.f32.mxu0 %v1393
        %1826 = vmatmul.mubr.f32.gmra.mrb[0].mxu0 %v788
        %v1827 = vpop.f32.mrb[0].mxu0
        %v1828 = vadd.f32 %v1322, %v1827
        %v1829 = vpop.f32.mrb[0].mxu0
        %v1830 = vadd.f32 %v1326, %v1829
        %1831 = vmatprep.mubr.f32.mxu0 %v1396
        %1832 = vmatmul.mubr.f32.gmra.mrb[0].mxu0 %v789
        %v1833 = vpop.f32.mrb[0].mxu0
        %v1834 = vadd.f32 %v1322, %v1833
        %v1835 = vpop.f32.mrb[0].mxu0
        %v1836 = vadd.f32 %v1326, %v1835
        %1837 = vmatprep.mubr.f32.mxu0 %v1399
        %1838 = vmatmul.mubr.f32.gmra.mrb[0].mxu0 %v790
        %v1839 = vpop.f32.mrb[0].mxu0
        %v1840 = vadd.f32 %v1322, %v1839
        %v1841 = vpop.f32.mrb[0].mxu0
        %v1842 = vadd.f32 %v1326, %v1841
        %1843 = vmatprep.mubr.f32.mxu0 %v1402
        %1844 = vmatmul.mubr.f32.gmra.mrb[0].mxu0 %v791
        %v1845 = vpop.f32.mrb[0].mxu0
        %v1846 = vadd.f32 %v1322, %v1845
        %v1847 = vpop.f32.mrb[0].mxu0
        %v1848 = vadd.f32 %v1326, %v1847
        %1849 = vmatprep.mubr.f32.mxu0 %v1405
        %1850 = vmatmul.mubr.f32.gmra.mrb[0].mxu0 %v792
        %v1851 = vpop.f32.mrb[0].mxu0
        %v1852 = vadd.f32 %v1322, %v1851
        %v1853 = vpop.f32.mrb[0].mxu0
        %v1854 = vadd.f32 %v1326, %v1853
        %1855 = vmatprep.mubr.f32.mxu0 %v1408
        %1856 = vmatmul.mubr.f32.gmra.mrb[0].mxu0 %v793
        %v1857 = vpop.f32.mrb[0].mxu0
        %v1858 = vadd.f32 %v1322, %v1857
        %v1859 = vpop.f32.mrb[0].mxu0
        %v1860 = vadd.f32 %v1326, %v1859
        %1861 = vdwg.mxu0
        %1862 = vmatprep.subr.mxu0 %v812
        %1863 = vmatpush1.msra.mxu0 %v811
        %1864 = vmatprep.subr.mxu0 %v830
        %1865 = vmatpush1.msra.mxu0 %v829
        %1866 = vmatprep.subr.mxu0 %v848
        %1867 = vmatpush1.msra.mxu0 %v847
        %1868 = vmatprep.subr.mxu0 %v866
        %1869 = vmatpush1.msra.mxu0 %v865
        %1870 = vmatprep.subr.mxu0 %v884
        %1871 = vmatpush1.msra.mxu0 %v883
        %1872 = vmatprep.subr.mxu0 %v902
        %1873 = vmatpush1.msra.mxu0 %v901
        %1874 = vmatprep.subr.mxu0 %v920
        %1875 = vmatpush1.msra.mxu0 %v919
        %1876 = vmatprep.subr.mxu0 %v938
        %1877 = vmatpush1.msra.mxu0 %v937
        %1878 = vmatprep.subr.mxu0 %v956
        %1879 = vmatpush1.msra.mxu0 %v955
        %1880 = vmatprep.subr.mxu0 %v974
        %1881 = vmatpush1.msra.mxu0 %v973
        %1882 = vmatprep.subr.mxu0 %v992
        %1883 = vmatpush1.msra.mxu0 %v991
        %1884 = vmatprep.subr.mxu0 %v1010
        %1885 = vmatpush1.msra.mxu0 %v1009
        %1886 = vmatprep.subr.mxu0 %v1028
        %1887 = vmatpush1.msra.mxu0 %v1027
        %1888 = vmatprep.subr.mxu0 %v1046
        %1889 = vmatpush1.msra.mxu0 %v1045
        %1890 = vmatprep.subr.mxu0 %v1064
        %1891 = vmatpush1.msra.mxu0 %v1063
        %1892 = vmatprep.subr.mxu0 %v1082
        %1893 = vmatpush1.msra.mxu0 %v1081
        %1894 = vmatprep.subr.mxu0 %v1100
        %1895 = vmatpush1.msra.mxu0 %v1099
        %1896 = vmatprep.subr.mxu0 %v1118
        %1897 = vmatpush1.msra.mxu0 %v1117
        %1898 = vmatprep.subr.mxu0 %v1136
        %1899 = vmatpush1.msra.mxu0 %v1135
        %1900 = vmatprep.subr.mxu0 %v1154
        %1901 = vmatpush1.msra.mxu0 %v1153
        %1902 = vmatprep.subr.mxu0 %v1172
        %1903 = vmatpush1.msra.mxu0 %v1171
        %1904 = vmatprep.subr.mxu0 %v1190
        %1905 = vmatpush1.msra.mxu0 %v1189
        %1906 = vmatprep.subr.mxu0 %v1208
        %1907 = vmatpush1.msra.mxu0 %v1207
        %1908 = vmatprep.subr.mxu0 %v1226
        %1909 = vmatpush1.msra.mxu0 %v1225
        %1910 = vmatprep.subr.mxu0 %v1244
        %1911 = vmatpush1.msra.mxu0 %v1243
        %1912 = vmatprep.subr.mxu0 %v1262
        %1913 = vmatpush1.msra.mxu0 %v1261
        %1914 = vmatprep.subr.mxu0 %v1280
        %1915 = vmatpush1.msra.mxu0 %v1279
        %1916 = vmatprep.subr.mxu0 0.0
        %1917 = vmatpush1.msra.mxu0 0.0
        %1918 = vmatprep.subr.mxu0 0.0
        %1919 = vmatpush1.msra.mxu0 0.0
        %1920 = vmatprep.subr.mxu0 0.0
        %1921 = vmatpush1.msra.mxu0 0.0
        %1922 = vmatprep.subr.mxu0 0.0
        %1923 = vmatpush1.msra.mxu0 0.0
        %1924 = vmatprep.subr.mxu0 0.0
        %1925 = vmatpush1.msra.mxu0 0.0
        %1926 = vmatprep.mubr.f32.mxu0 %v1387
        %1927 = vmatmul.mubr.f32.gmra.mrb[0].mxu0 %v786
        %v1928 = vpop.f32.mrb[0].mxu0
        %v1929 = vadd.f32 %v1330, %v1928
        %v1930 = vpop.f32.mrb[0].mxu0
        %v1931 = vadd.f32 %v1334, %v1930
        %1932 = vmatprep.mubr.f32.mxu0 %v1390
        %1933 = vmatmul.mubr.f32.gmra.mrb[0].mxu0 %v787
        %v1934 = vpop.f32.mrb[0].mxu0
        %v1935 = vadd.f32 %v1330, %v1934
        %v1936 = vpop.f32.mrb[0].mxu0
        %v1937 = vadd.f32 %v1334, %v1936
        %1938 = vmatprep.mubr.f32.mxu0 %v1393
        %1939 = vmatmul.mubr.f32.gmra.mrb[0].mxu0 %v788
        %v1940 = vpop.f32.mrb[0].mxu0
        %v1941 = vadd.f32 %v1330, %v1940
        %v1942 = vpop.f32.mrb[0].mxu0
        %v1943 = vadd.f32 %v1334, %v1942
        %1944 = vmatprep.mubr.f32.mxu0 %v1396
        %1945 = vmatmul.mubr.f32.gmra.mrb[0].mxu0 %v789
        %v1946 = vpop.f32.mrb[0].mxu0
        %v1947 = vadd.f32 %v1330, %v1946
        %v1948 = vpop.f32.mrb[0].mxu0
        %v1949 = vadd.f32 %v1334, %v1948
        %1950 = vmatprep.mubr.f32.mxu0 %v1399
        %1951 = vmatmul.mubr.f32.gmra.mrb[0].mxu0 %v790
        %v1952 = vpop.f32.mrb[0].mxu0
        %v1953 = vadd.f32 %v1330, %v1952
        %v1954 = vpop.f32.mrb[0].mxu0
        %v1955 = vadd.f32 %v1334, %v1954
        %1956 = vmatprep.mubr.f32.mxu0 %v1402
        %1957 = vmatmul.mubr.f32.gmra.mrb[0].mxu0 %v791
        %v1958 = vpop.f32.mrb[0].mxu0
        %v1959 = vadd.f32 %v1330, %v1958
        %v1960 = vpop.f32.mrb[0].mxu0
        %v1961 = vadd.f32 %v1334, %v1960
        %1962 = vmatprep.mubr.f32.mxu0 %v1405
        %1963 = vmatmul.mubr.f32.gmra.mrb[0].mxu0 %v792
        %v1964 = vpop.f32.mrb[0].mxu0
        %v1965 = vadd.f32 %v1330, %v1964
        %v1966 = vpop.f32.mrb[0].mxu0
        %v1967 = vadd.f32 %v1334, %v1966
        %1968 = vmatprep.mubr.f32.mxu0 %v1408
        %1969 = vmatmul.mubr.f32.gmra.mrb[0].mxu0 %v793
        %v1970 = vpop.f32.mrb[0].mxu0
        %v1971 = vadd.f32 %v1330, %v1970
        %v1972 = vpop.f32.mrb[0].mxu0
        %v1973 = vadd.f32 %v1334, %v1972
        %1974 = vdwg.mxu0
        %1975 = vmatprep.subr.mxu0 %v814
        %1976 = vmatpush1.msra.mxu0 %v813
        %1977 = vmatprep.subr.mxu0 %v832
        %1978 = vmatpush1.msra.mxu0 %v831
        %1979 = vmatprep.subr.mxu0 %v850
        %1980 = vmatpush1.msra.mxu0 %v849
        %1981 = vmatprep.subr.mxu0 %v868
        %1982 = vmatpush1.msra.mxu0 %v867
        %1983 = vmatprep.subr.mxu0 %v886
        %1984 = vmatpush1.msra.mxu0 %v885
        %1985 = vmatprep.subr.mxu0 %v904
        %1986 = vmatpush1.msra.mxu0 %v903
        %1987 = vmatprep.subr.mxu0 %v922
        %1988 = vmatpush1.msra.mxu0 %v921
        %1989 = vmatprep.subr.mxu0 %v940
        %1990 = vmatpush1.msra.mxu0 %v939
        %1991 = vmatprep.subr.mxu0 %v958
        %1992 = vmatpush1.msra.mxu0 %v957
        %1993 = vmatprep.subr.mxu0 %v976
        %1994 = vmatpush1.msra.mxu0 %v975
        %1995 = vmatprep.subr.mxu0 %v994
        %1996 = vmatpush1.msra.mxu0 %v993
        %1997 = vmatprep.subr.mxu0 %v1012
        %1998 = vmatpush1.msra.mxu0 %v1011
        %1999 = vmatprep.subr.mxu0 %v1030
        %2000 = vmatpush1.msra.mxu0 %v1029
        %2001 = vmatprep.subr.mxu0 %v1048
        %2002 = vmatpush1.msra.mxu0 %v1047
        %2003 = vmatprep.subr.mxu0 %v1066
        %2004 = vmatpush1.msra.mxu0 %v1065
        %2005 = vmatprep.subr.mxu0 %v1084
        %2006 = vmatpush1.msra.mxu0 %v1083
        %2007 = vmatprep.subr.mxu0 %v1102
        %2008 = vmatpush1.msra.mxu0 %v1101
        %2009 = vmatprep.subr.mxu0 %v1120
        %2010 = vmatpush1.msra.mxu0 %v1119
        %2011 = vmatprep.subr.mxu0 %v1138
        %2012 = vmatpush1.msra.mxu0 %v1137
        %2013 = vmatprep.subr.mxu0 %v1156
        %2014 = vmatpush1.msra.mxu0 %v1155
        %2015 = vmatprep.subr.mxu0 %v1174
        %2016 = vmatpush1.msra.mxu0 %v1173
        %2017 = vmatprep.subr.mxu0 %v1192
        %2018 = vmatpush1.msra.mxu0 %v1191
        %2019 = vmatprep.subr.mxu0 %v1210
        %2020 = vmatpush1.msra.mxu0 %v1209
        %2021 = vmatprep.subr.mxu0 %v1228
        %2022 = vmatpush1.msra.mxu0 %v1227
        %2023 = vmatprep.subr.mxu0 %v1246
        %2024 = vmatpush1.msra.mxu0 %v1245
        %2025 = vmatprep.subr.mxu0 %v1264
        %2026 = vmatpush1.msra.mxu0 %v1263
        %2027 = vmatprep.subr.mxu0 %v1282
        %2028 = vmatpush1.msra.mxu0 %v1281
        %2029 = vmatprep.subr.mxu0 0.0
        %2030 = vmatpush1.msra.mxu0 0.0
        %2031 = vmatprep.subr.mxu0 0.0
        %2032 = vmatpush1.msra.mxu0 0.0
        %2033 = vmatprep.subr.mxu0 0.0
        %2034 = vmatpush1.msra.mxu0 0.0
        %2035 = vmatprep.subr.mxu0 0.0
        %2036 = vmatpush1.msra.mxu0 0.0
        %2037 = vmatprep.subr.mxu0 0.0
        %2038 = vmatpush1.msra.mxu0 0.0
        %2039 = vmatprep.mubr.f32.mxu0 %v1387
        %2040 = vmatmul.mubr.f32.gmra.mrb[0].mxu0 %v786
        %v2041 = vpop.f32.mrb[0].mxu0
        %v2042 = vadd.f32 %v1338, %v2041
        %v2043 = vpop.f32.mrb[0].mxu0
        %v2044 = vadd.f32 %v1342, %v2043
        %2045 = vmatprep.mubr.f32.mxu0 %v1390
        %2046 = vmatmul.mubr.f32.gmra.mrb[0].mxu0 %v787
        %v2047 = vpop.f32.mrb[0].mxu0
        %v2048 = vadd.f32 %v1338, %v2047
        %v2049 = vpop.f32.mrb[0].mxu0
        %v2050 = vadd.f32 %v1342, %v2049
        %2051 = vmatprep.mubr.f32.mxu0 %v1393
        %2052 = vmatmul.mubr.f32.gmra.mrb[0].mxu0 %v788
        %v2053 = vpop.f32.mrb[0].mxu0
        %v2054 = vadd.f32 %v1338, %v2053
        %v2055 = vpop.f32.mrb[0].mxu0
        %v2056 = vadd.f32 %v1342, %v2055
        %2057 = vmatprep.mubr.f32.mxu0 %v1396
        %2058 = vmatmul.mubr.f32.gmra.mrb[0].mxu0 %v789
        %v2059 = vpop.f32.mrb[0].mxu0
        %v2060 = vadd.f32 %v1338, %v2059
        %v2061 = vpop.f32.mrb[0].mxu0
        %v2062 = vadd.f32 %v1342, %v2061
        %2063 = vmatprep.mubr.f32.mxu0 %v1399
        %2064 = vmatmul.mubr.f32.gmra.mrb[0].mxu0 %v790
        %v2065 = vpop.f32.mrb[0].mxu0
        %v2066 = vadd.f32 %v1338, %v2065
        %v2067 = vpop.f32.mrb[0].mxu0
        %v2068 = vadd.f32 %v1342, %v2067
        %2069 = vmatprep.mubr.f32.mxu0 %v1402
        %2070 = vmatmul.mubr.f32.gmra.mrb[0].mxu0 %v791
        %v2071 = vpop.f32.mrb[0].mxu0
        %v2072 = vadd.f32 %v1338, %v2071
        %v2073 = vpop.f32.mrb[0].mxu0
        %v2074 = vadd.f32 %v1342, %v2073
        %2075 = vmatprep.mubr.f32.mxu0 %v1405
        %2076 = vmatmul.mubr.f32.gmra.mrb[0].mxu0 %v792
        %v2077 = vpop.f32.mrb[0].mxu0
        %v2078 = vadd.f32 %v1338, %v2077
        %v2079 = vpop.f32.mrb[0].mxu0
        %v2080 = vadd.f32 %v1342, %v2079
        %2081 = vmatprep.mubr.f32.mxu0 %v1408
        %2082 = vmatmul.mubr.f32.gmra.mrb[0].mxu0 %v793
        %v2083 = vpop.f32.mrb[0].mxu0
        %v2084 = vadd.f32 %v1338, %v2083
        %v2085 = vpop.f32.mrb[0].mxu0
        %v2086 = vadd.f32 %v1342, %v2085
        %2087 = vdwg.mxu0
        %2088 = vmatprep.subr.mxu0 %v816
        %2089 = vmatpush1.msra.mxu0 %v815
        %2090 = vmatprep.subr.mxu0 %v834
        %2091 = vmatpush1.msra.mxu0 %v833
        %2092 = vmatprep.subr.mxu0 %v852
        %2093 = vmatpush1.msra.mxu0 %v851
        %2094 = vmatprep.subr.mxu0 %v870
        %2095 = vmatpush1.msra.mxu0 %v869
        %2096 = vmatprep.subr.mxu0 %v888
        %2097 = vmatpush1.msra.mxu0 %v887
        %2098 = vmatprep.subr.mxu0 %v906
        %2099 = vmatpush1.msra.mxu0 %v905
        %2100 = vmatprep.subr.mxu0 %v924
        %2101 = vmatpush1.msra.mxu0 %v923
        %2102 = vmatprep.subr.mxu0 %v942
        %2103 = vmatpush1.msra.mxu0 %v941
        %2104 = vmatprep.subr.mxu0 %v960
        %2105 = vmatpush1.msra.mxu0 %v959
        %2106 = vmatprep.subr.mxu0 %v978
        %2107 = vmatpush1.msra.mxu0 %v977
        %2108 = vmatprep.subr.mxu0 %v996
        %2109 = vmatpush1.msra.mxu0 %v995
        %2110 = vmatprep.subr.mxu0 %v1014
        %2111 = vmatpush1.msra.mxu0 %v1013
        %2112 = vmatprep.subr.mxu0 %v1032
        %2113 = vmatpush1.msra.mxu0 %v1031
        %2114 = vmatprep.subr.mxu0 %v1050
        %2115 = vmatpush1.msra.mxu0 %v1049
        %2116 = vmatprep.subr.mxu0 %v1068
        %2117 = vmatpush1.msra.mxu0 %v1067
        %2118 = vmatprep.subr.mxu0 %v1086
        %2119 = vmatpush1.msra.mxu0 %v1085
        %2120 = vmatprep.subr.mxu0 %v1104
        %2121 = vmatpush1.msra.mxu0 %v1103
        %2122 = vmatprep.subr.mxu0 %v1122
        %2123 = vmatpush1.msra.mxu0 %v1121
        %2124 = vmatprep.subr.mxu0 %v1140
        %2125 = vmatpush1.msra.mxu0 %v1139
        %2126 = vmatprep.subr.mxu0 %v1158
        %2127 = vmatpush1.msra.mxu0 %v1157
        %2128 = vmatprep.subr.mxu0 %v1176
        %2129 = vmatpush1.msra.mxu0 %v1175
        %2130 = vmatprep.subr.mxu0 %v1194
        %2131 = vmatpush1.msra.mxu0 %v1193
        %2132 = vmatprep.subr.mxu0 %v1212
        %2133 = vmatpush1.msra.mxu0 %v1211
        %2134 = vmatprep.subr.mxu0 %v1230
        %2135 = vmatpush1.msra.mxu0 %v1229
        %2136 = vmatprep.subr.mxu0 %v1248
        %2137 = vmatpush1.msra.mxu0 %v1247
        %2138 = vmatprep.subr.mxu0 %v1266
        %2139 = vmatpush1.msra.mxu0 %v1265
        %2140 = vmatprep.subr.mxu0 %v1284
        %2141 = vmatpush1.msra.mxu0 %v1283
        %2142 = vmatprep.subr.mxu0 0.0
        %2143 = vmatpush1.msra.mxu0 0.0
        %2144 = vmatprep.subr.mxu0 0.0
        %2145 = vmatpush1.msra.mxu0 0.0
        %2146 = vmatprep.subr.mxu0 0.0
        %2147 = vmatpush1.msra.mxu0 0.0
        %2148 = vmatprep.subr.mxu0 0.0
        %2149 = vmatpush1.msra.mxu0 0.0
        %2150 = vmatprep.subr.mxu0 0.0
        %2151 = vmatpush1.msra.mxu0 0.0
        %2152 = vmatprep.mubr.f32.mxu0 %v1387
        %2153 = vmatmul.mubr.f32.gmra.mrb[0].mxu0 %v786
        %v2154 = vpop.f32.mrb[0].mxu0
        %v2155 = vadd.f32 %v1346, %v2154
        %v2156 = vpop.f32.mrb[0].mxu0
        %v2157 = vadd.f32 %v1350, %v2156
        %2158 = vmatprep.mubr.f32.mxu0 %v1390
        %2159 = vmatmul.mubr.f32.gmra.mrb[0].mxu0 %v787
        %v2160 = vpop.f32.mrb[0].mxu0
        %v2161 = vadd.f32 %v1346, %v2160
        %v2162 = vpop.f32.mrb[0].mxu0
        %v2163 = vadd.f32 %v1350, %v2162
        %2164 = vmatprep.mubr.f32.mxu0 %v1393
        %2165 = vmatmul.mubr.f32.gmra.mrb[0].mxu0 %v788
        %v2166 = vpop.f32.mrb[0].mxu0
        %v2167 = vadd.f32 %v1346, %v2166
        %v2168 = vpop.f32.mrb[0].mxu0
        %v2169 = vadd.f32 %v1350, %v2168
        %2170 = vmatprep.mubr.f32.mxu0 %v1396
        %2171 = vmatmul.mubr.f32.gmra.mrb[0].mxu0 %v789
        %v2172 = vpop.f32.mrb[0].mxu0
        %v2173 = vadd.f32 %v1346, %v2172
        %v2174 = vpop.f32.mrb[0].mxu0
        %v2175 = vadd.f32 %v1350, %v2174
        %2176 = vmatprep.mubr.f32.mxu0 %v1399
        %2177 = vmatmul.mubr.f32.gmra.mrb[0].mxu0 %v790
        %v2178 = vpop.f32.mrb[0].mxu0
        %v2179 = vadd.f32 %v1346, %v2178
        %v2180 = vpop.f32.mrb[0].mxu0
        %v2181 = vadd.f32 %v1350, %v2180
        %2182 = vmatprep.mubr.f32.mxu0 %v1402
        %2183 = vmatmul.mubr.f32.gmra.mrb[0].mxu0 %v791
        %v2184 = vpop.f32.mrb[0].mxu0
        %v2185 = vadd.f32 %v1346, %v2184
        %v2186 = vpop.f32.mrb[0].mxu0
        %v2187 = vadd.f32 %v1350, %v2186
        %2188 = vmatprep.mubr.f32.mxu0 %v1405
        %2189 = vmatmul.mubr.f32.gmra.mrb[0].mxu0 %v792
        %v2190 = vpop.f32.mrb[0].mxu0
        %v2191 = vadd.f32 %v1346, %v2190
        %v2192 = vpop.f32.mrb[0].mxu0
        %v2193 = vadd.f32 %v1350, %v2192
        %2194 = vmatprep.mubr.f32.mxu0 %v1408
        %2195 = vmatmul.mubr.f32.gmra.mrb[0].mxu0 %v793
        %v2196 = vpop.f32.mrb[0].mxu0
        %v2197 = vadd.f32 %v1346, %v2196
        %v2198 = vpop.f32.mrb[0].mxu0
        %v2199 = vadd.f32 %v1350, %v2198
        %2200 = vdwg.mxu0
        %2201 = vmatprep.subr.mxu0 %v818
        %2202 = vmatpush1.msra.mxu0 %v817
        %2203 = vmatprep.subr.mxu0 %v836
        %2204 = vmatpush1.msra.mxu0 %v835
        %2205 = vmatprep.subr.mxu0 %v854
        %2206 = vmatpush1.msra.mxu0 %v853
        %2207 = vmatprep.subr.mxu0 %v872
        %2208 = vmatpush1.msra.mxu0 %v871
        %2209 = vmatprep.subr.mxu0 %v890
        %2210 = vmatpush1.msra.mxu0 %v889
        %2211 = vmatprep.subr.mxu0 %v908
        %2212 = vmatpush1.msra.mxu0 %v907
        %2213 = vmatprep.subr.mxu0 %v926
        %2214 = vmatpush1.msra.mxu0 %v925
        %2215 = vmatprep.subr.mxu0 %v944
        %2216 = vmatpush1.msra.mxu0 %v943
        %2217 = vmatprep.subr.mxu0 %v962
        %2218 = vmatpush1.msra.mxu0 %v961
        %2219 = vmatprep.subr.mxu0 %v980
        %2220 = vmatpush1.msra.mxu0 %v979
        %2221 = vmatprep.subr.mxu0 %v998
        %2222 = vmatpush1.msra.mxu0 %v997
        %2223 = vmatprep.subr.mxu0 %v1016
        %2224 = vmatpush1.msra.mxu0 %v1015
        %2225 = vmatprep.subr.mxu0 %v1034
        %2226 = vmatpush1.msra.mxu0 %v1033
        %2227 = vmatprep.subr.mxu0 %v1052
        %2228 = vmatpush1.msra.mxu0 %v1051
        %2229 = vmatprep.subr.mxu0 %v1070
        %2230 = vmatpush1.msra.mxu0 %v1069
        %2231 = vmatprep.subr.mxu0 %v1088
        %2232 = vmatpush1.msra.mxu0 %v1087
        %2233 = vmatprep.subr.mxu0 %v1106
        %2234 = vmatpush1.msra.mxu0 %v1105
        %2235 = vmatprep.subr.mxu0 %v1124
        %2236 = vmatpush1.msra.mxu0 %v1123
        %2237 = vmatprep.subr.mxu0 %v1142
        %2238 = vmatpush1.msra.mxu0 %v1141
        %2239 = vmatprep.subr.mxu0 %v1160
        %2240 = vmatpush1.msra.mxu0 %v1159
        %2241 = vmatprep.subr.mxu0 %v1178
        %2242 = vmatpush1.msra.mxu0 %v1177
        %2243 = vmatprep.subr.mxu0 %v1196
        %2244 = vmatpush1.msra.mxu0 %v1195
        %2245 = vmatprep.subr.mxu0 %v1214
        %2246 = vmatpush1.msra.mxu0 %v1213
        %2247 = vmatprep.subr.mxu0 %v1232
        %2248 = vmatpush1.msra.mxu0 %v1231
        %2249 = vmatprep.subr.mxu0 %v1250
        %2250 = vmatpush1.msra.mxu0 %v1249
        %2251 = vmatprep.subr.mxu0 %v1268
        %2252 = vmatpush1.msra.mxu0 %v1267
        %2253 = vmatprep.subr.mxu0 %v1286
        %2254 = vmatpush1.msra.mxu0 %v1285
        %2255 = vmatprep.subr.mxu0 0.0
        %2256 = vmatpush1.msra.mxu0 0.0
        %2257 = vmatprep.subr.mxu0 0.0
        %2258 = vmatpush1.msra.mxu0 0.0
        %2259 = vmatprep.subr.mxu0 0.0
        %2260 = vmatpush1.msra.mxu0 0.0
        %2261 = vmatprep.subr.mxu0 0.0
        %2262 = vmatpush1.msra.mxu0 0.0
        %2263 = vmatprep.subr.mxu0 0.0
        %2264 = vmatpush1.msra.mxu0 0.0
        %2265 = vmatprep.mubr.f32.mxu0 %v1387
        %2266 = vmatmul.mubr.f32.gmra.mrb[0].mxu0 %v786
        %v2267 = vpop.f32.mrb[0].mxu0
        %v2268 = vadd.f32 %v1354, %v2267
        %v2269 = vpop.f32.mrb[0].mxu0
        %v2270 = vadd.f32 %v1358, %v2269
        %2271 = vmatprep.mubr.f32.mxu0 %v1390
        %2272 = vmatmul.mubr.f32.gmra.mrb[0].mxu0 %v787
        %v2273 = vpop.f32.mrb[0].mxu0
        %v2274 = vadd.f32 %v1354, %v2273
        %v2275 = vpop.f32.mrb[0].mxu0
        %v2276 = vadd.f32 %v1358, %v2275
        %2277 = vmatprep.mubr.f32.mxu0 %v1393
        %2278 = vmatmul.mubr.f32.gmra.mrb[0].mxu0 %v788
        %v2279 = vpop.f32.mrb[0].mxu0
        %v2280 = vadd.f32 %v1354, %v2279
        %v2281 = vpop.f32.mrb[0].mxu0
        %v2282 = vadd.f32 %v1358, %v2281
        %2283 = vmatprep.mubr.f32.mxu0 %v1396
        %2284 = vmatmul.mubr.f32.gmra.mrb[0].mxu0 %v789
        %v2285 = vpop.f32.mrb[0].mxu0
        %v2286 = vadd.f32 %v1354, %v2285
        %v2287 = vpop.f32.mrb[0].mxu0
        %v2288 = vadd.f32 %v1358, %v2287
        %2289 = vmatprep.mubr.f32.mxu0 %v1399
        %2290 = vmatmul.mubr.f32.gmra.mrb[0].mxu0 %v790
        %v2291 = vpop.f32.mrb[0].mxu0
        %v2292 = vadd.f32 %v1354, %v2291
        %v2293 = vpop.f32.mrb[0].mxu0
        %v2294 = vadd.f32 %v1358, %v2293
        %2295 = vmatprep.mubr.f32.mxu0 %v1402
        %2296 = vmatmul.mubr.f32.gmra.mrb[0].mxu0 %v791
        %v2297 = vpop.f32.mrb[0].mxu0
        %v2298 = vadd.f32 %v1354, %v2297
        %v2299 = vpop.f32.mrb[0].mxu0
        %v2300 = vadd.f32 %v1358, %v2299
        %2301 = vmatprep.mubr.f32.mxu0 %v1405
        %2302 = vmatmul.mubr.f32.gmra.mrb[0].mxu0 %v792
        %v2303 = vpop.f32.mrb[0].mxu0
        %v2304 = vadd.f32 %v1354, %v2303
        %v2305 = vpop.f32.mrb[0].mxu0
        %v2306 = vadd.f32 %v1358, %v2305
        %2307 = vmatprep.mubr.f32.mxu0 %v1408
        %2308 = vmatmul.mubr.f32.gmra.mrb[0].mxu0 %v793
        %v2309 = vpop.f32.mrb[0].mxu0
        %v2310 = vadd.f32 %v1354, %v2309
        %v2311 = vpop.f32.mrb[0].mxu0
        %v2312 = vadd.f32 %v1358, %v2311
        %2313 = vdwg.mxu0
        %2314 = vmatprep.subr.mxu0 %v820
        %2315 = vmatpush1.msra.mxu0 %v819
        %2316 = vmatprep.subr.mxu0 %v838
        %2317 = vmatpush1.msra.mxu0 %v837
        %2318 = vmatprep.subr.mxu0 %v856
        %2319 = vmatpush1.msra.mxu0 %v855
        %2320 = vmatprep.subr.mxu0 %v874
        %2321 = vmatpush1.msra.mxu0 %v873
        %2322 = vmatprep.subr.mxu0 %v892
        %2323 = vmatpush1.msra.mxu0 %v891
        %2324 = vmatprep.subr.mxu0 %v910
        %2325 = vmatpush1.msra.mxu0 %v909
        %2326 = vmatprep.subr.mxu0 %v928
        %2327 = vmatpush1.msra.mxu0 %v927
        %2328 = vmatprep.subr.mxu0 %v946
        %2329 = vmatpush1.msra.mxu0 %v945
        %2330 = vmatprep.subr.mxu0 %v964
        %2331 = vmatpush1.msra.mxu0 %v963
        %2332 = vmatprep.subr.mxu0 %v982
        %2333 = vmatpush1.msra.mxu0 %v981
        %2334 = vmatprep.subr.mxu0 %v1000
        %2335 = vmatpush1.msra.mxu0 %v999
        %2336 = vmatprep.subr.mxu0 %v1018
        %2337 = vmatpush1.msra.mxu0 %v1017
        %2338 = vmatprep.subr.mxu0 %v1036
        %2339 = vmatpush1.msra.mxu0 %v1035
        %2340 = vmatprep.subr.mxu0 %v1054
        %2341 = vmatpush1.msra.mxu0 %v1053
        %2342 = vmatprep.subr.mxu0 %v1072
        %2343 = vmatpush1.msra.mxu0 %v1071
        %2344 = vmatprep.subr.mxu0 %v1090
        %2345 = vmatpush1.msra.mxu0 %v1089
        %2346 = vmatprep.subr.mxu0 %v1108
        %2347 = vmatpush1.msra.mxu0 %v1107
        %2348 = vmatprep.subr.mxu0 %v1126
        %2349 = vmatpush1.msra.mxu0 %v1125
        %2350 = vmatprep.subr.mxu0 %v1144
        %2351 = vmatpush1.msra.mxu0 %v1143
        %2352 = vmatprep.subr.mxu0 %v1162
        %2353 = vmatpush1.msra.mxu0 %v1161
        %2354 = vmatprep.subr.mxu0 %v1180
        %2355 = vmatpush1.msra.mxu0 %v1179
        %2356 = vmatprep.subr.mxu0 %v1198
        %2357 = vmatpush1.msra.mxu0 %v1197
        %2358 = vmatprep.subr.mxu0 %v1216
        %2359 = vmatpush1.msra.mxu0 %v1215
        %2360 = vmatprep.subr.mxu0 %v1234
        %2361 = vmatpush1.msra.mxu0 %v1233
        %2362 = vmatprep.subr.mxu0 %v1252
        %2363 = vmatpush1.msra.mxu0 %v1251
        %2364 = vmatprep.subr.mxu0 %v1270
        %2365 = vmatpush1.msra.mxu0 %v1269
        %2366 = vmatprep.subr.mxu0 %v1288
        %2367 = vmatpush1.msra.mxu0 %v1287
        %2368 = vmatprep.subr.mxu0 0.0
        %2369 = vmatpush1.msra.mxu0 0.0
        %2370 = vmatprep.subr.mxu0 0.0
        %2371 = vmatpush1.msra.mxu0 0.0
        %2372 = vmatprep.subr.mxu0 0.0
        %2373 = vmatpush1.msra.mxu0 0.0
        %2374 = vmatprep.subr.mxu0 0.0
        %2375 = vmatpush1.msra.mxu0 0.0
        %2376 = vmatprep.subr.mxu0 0.0
        %2377 = vmatpush1.msra.mxu0 0.0
        %2378 = vmatprep.mubr.f32.mxu0 %v1387
        %2379 = vmatmul.mubr.f32.gmra.mrb[0].mxu0 %v786
        %v2380 = vpop.f32.mrb[0].mxu0
        %v2381 = vadd.f32 %v1362, %v2380
        %v2382 = vpop.f32.mrb[0].mxu0
        %v2383 = vadd.f32 %v1366, %v2382
        %2384 = vmatprep.mubr.f32.mxu0 %v1390
        %2385 = vmatmul.mubr.f32.gmra.mrb[0].mxu0 %v787
        %v2386 = vpop.f32.mrb[0].mxu0
        %v2387 = vadd.f32 %v1362, %v2386
        %v2388 = vpop.f32.mrb[0].mxu0
        %v2389 = vadd.f32 %v1366, %v2388
        %2390 = vmatprep.mubr.f32.mxu0 %v1393
        %2391 = vmatmul.mubr.f32.gmra.mrb[0].mxu0 %v788
        %v2392 = vpop.f32.mrb[0].mxu0
        %v2393 = vadd.f32 %v1362, %v2392
        %v2394 = vpop.f32.mrb[0].mxu0
        %v2395 = vadd.f32 %v1366, %v2394
        %2396 = vmatprep.mubr.f32.mxu0 %v1396
        %2397 = vmatmul.mubr.f32.gmra.mrb[0].mxu0 %v789
        %v2398 = vpop.f32.mrb[0].mxu0
        %v2399 = vadd.f32 %v1362, %v2398
        %v2400 = vpop.f32.mrb[0].mxu0
        %v2401 = vadd.f32 %v1366, %v2400
        %2402 = vmatprep.mubr.f32.mxu0 %v1399
        %2403 = vmatmul.mubr.f32.gmra.mrb[0].mxu0 %v790
        %v2404 = vpop.f32.mrb[0].mxu0
        %v2405 = vadd.f32 %v1362, %v2404
        %v2406 = vpop.f32.mrb[0].mxu0
        %v2407 = vadd.f32 %v1366, %v2406
        %2408 = vmatprep.mubr.f32.mxu0 %v1402
        %2409 = vmatmul.mubr.f32.gmra.mrb[0].mxu0 %v791
        %v2410 = vpop.f32.mrb[0].mxu0
        %v2411 = vadd.f32 %v1362, %v2410
        %v2412 = vpop.f32.mrb[0].mxu0
        %v2413 = vadd.f32 %v1366, %v2412
        %2414 = vmatprep.mubr.f32.mxu0 %v1405
        %2415 = vmatmul.mubr.f32.gmra.mrb[0].mxu0 %v792
        %v2416 = vpop.f32.mrb[0].mxu0
        %v2417 = vadd.f32 %v1362, %v2416
        %v2418 = vpop.f32.mrb[0].mxu0
        %v2419 = vadd.f32 %v1366, %v2418
        %2420 = vmatprep.mubr.f32.mxu0 %v1408
        %2421 = vmatmul.mubr.f32.gmra.mrb[0].mxu0 %v793
        %v2422 = vpop.f32.mrb[0].mxu0
        %v2423 = vadd.f32 %v1362, %v2422
        %v2424 = vpop.f32.mrb[0].mxu0
        %v2425 = vadd.f32 %v1366, %v2424
        %2426 = vdwg.mxu0
        %v2427 = vmax.f32 %v1477, 0.0
        %v2428 = vmax.f32 %v1479, 0.0
        %v2429 = vmax.f32 %v1590, 0.0
        %v2430 = vmax.f32 %v1592, 0.0
        %v2431 = vmax.f32 %v1703, 0.0
        %v2432 = vmax.f32 %v1705, 0.0
        %v2433 = vmax.f32 %v1816, 0.0
        %v2434 = vmax.f32 %v1818, 0.0
        %v2435 = vmax.f32 %v1929, 0.0
        %v2436 = vmax.f32 %v1931, 0.0
        %v2437 = vmax.f32 %v2042, 0.0
        %v2438 = vmax.f32 %v2044, 0.0
        %v2439 = vmax.f32 %v2155, 0.0
        %v2440 = vmax.f32 %v2157, 0.0
        %v2441 = vmax.f32 %v2268, 0.0
        %v2442 = vmax.f32 %v2270, 0.0
        %v2443 = vmax.f32 %v2381, 0.0
        %v2444 = vmax.f32 %v2383, 0.0
        %v2445 = vmax.f32 %v1483, 0.0
        %v2446 = vmax.f32 %v1485, 0.0
        %v2447 = vmax.f32 %v1596, 0.0
        %v2448 = vmax.f32 %v1598, 0.0
        %v2449 = vmax.f32 %v1709, 0.0
        %v2450 = vmax.f32 %v1711, 0.0
        %v2451 = vmax.f32 %v1822, 0.0
        %v2452 = vmax.f32 %v1824, 0.0
        %v2453 = vmax.f32 %v1935, 0.0
        %v2454 = vmax.f32 %v1937, 0.0
        %v2455 = vmax.f32 %v2048, 0.0
        %v2456 = vmax.f32 %v2050, 0.0
        %v2457 = vmax.f32 %v2161, 0.0
        %v2458 = vmax.f32 %v2163, 0.0
        %v2459 = vmax.f32 %v2274, 0.0
        %v2460 = vmax.f32 %v2276, 0.0
        %v2461 = vmax.f32 %v2387, 0.0
        %v2462 = vmax.f32 %v2389, 0.0
        %v2463 = vmax.f32 %v1489, 0.0
        %v2464 = vmax.f32 %v1491, 0.0
        %v2465 = vmax.f32 %v1602, 0.0
        %v2466 = vmax.f32 %v1604, 0.0
        %v2467 = vmax.f32 %v1715, 0.0
        %v2468 = vmax.f32 %v1717, 0.0
        %v2469 = vmax.f32 %v1828, 0.0
        %v2470 = vmax.f32 %v1830, 0.0
        %v2471 = vmax.f32 %v1941, 0.0
        %v2472 = vmax.f32 %v1943, 0.0
        %v2473 = vmax.f32 %v2054, 0.0
        %v2474 = vmax.f32 %v2056, 0.0
        %v2475 = vmax.f32 %v2167, 0.0
        %v2476 = vmax.f32 %v2169, 0.0
        %v2477 = vmax.f32 %v2280, 0.0
        %v2478 = vmax.f32 %v2282, 0.0
        %v2479 = vmax.f32 %v2393, 0.0
        %v2480 = vmax.f32 %v2395, 0.0
        %v2481 = vmax.f32 %v1495, 0.0
        %v2482 = vmax.f32 %v1497, 0.0
        %v2483 = vmax.f32 %v1608, 0.0
        %v2484 = vmax.f32 %v1610, 0.0
        %v2485 = vmax.f32 %v1721, 0.0
        %v2486 = vmax.f32 %v1723, 0.0
        %v2487 = vmax.f32 %v1834, 0.0
        %v2488 = vmax.f32 %v1836, 0.0
        %v2489 = vmax.f32 %v1947, 0.0
        %v2490 = vmax.f32 %v1949, 0.0
        %v2491 = vmax.f32 %v2060, 0.0
        %v2492 = vmax.f32 %v2062, 0.0
        %v2493 = vmax.f32 %v2173, 0.0
        %v2494 = vmax.f32 %v2175, 0.0
        %v2495 = vmax.f32 %v2286, 0.0
        %v2496 = vmax.f32 %v2288, 0.0
        %v2497 = vmax.f32 %v2399, 0.0
        %v2498 = vmax.f32 %v2401, 0.0
        %v2499 = vmax.f32 %v1501, 0.0
        %v2500 = vmax.f32 %v1503, 0.0
        %v2501 = vmax.f32 %v1614, 0.0
        %v2502 = vmax.f32 %v1616, 0.0
        %v2503 = vmax.f32 %v1727, 0.0
        %v2504 = vmax.f32 %v1729, 0.0
        %v2505 = vmax.f32 %v1840, 0.0
        %v2506 = vmax.f32 %v1842, 0.0
        %v2507 = vmax.f32 %v1953, 0.0
        %v2508 = vmax.f32 %v1955, 0.0
        %v2509 = vmax.f32 %v2066, 0.0
        %v2510 = vmax.f32 %v2068, 0.0
        %v2511 = vmax.f32 %v2179, 0.0
        %v2512 = vmax.f32 %v2181, 0.0
        %v2513 = vmax.f32 %v2292, 0.0
        %v2514 = vmax.f32 %v2294, 0.0
        %v2515 = vmax.f32 %v2405, 0.0
        %v2516 = vmax.f32 %v2407, 0.0
        %v2517 = vmax.f32 %v1507, 0.0
        %v2518 = vmax.f32 %v1509, 0.0
        %v2519 = vmax.f32 %v1620, 0.0
        %v2520 = vmax.f32 %v1622, 0.0
        %v2521 = vmax.f32 %v1733, 0.0
        %v2522 = vmax.f32 %v1735, 0.0
        %v2523 = vmax.f32 %v1846, 0.0
        %v2524 = vmax.f32 %v1848, 0.0
        %v2525 = vmax.f32 %v1959, 0.0
        %v2526 = vmax.f32 %v1961, 0.0
        %v2527 = vmax.f32 %v2072, 0.0
        %v2528 = vmax.f32 %v2074, 0.0
        %v2529 = vmax.f32 %v2185, 0.0
        %v2530 = vmax.f32 %v2187, 0.0
        %v2531 = vmax.f32 %v2298, 0.0
        %v2532 = vmax.f32 %v2300, 0.0
        %v2533 = vmax.f32 %v2411, 0.0
        %v2534 = vmax.f32 %v2413, 0.0
        %v2535 = vmax.f32 %v1513, 0.0
        %v2536 = vmax.f32 %v1515, 0.0
        %v2537 = vmax.f32 %v1626, 0.0
        %v2538 = vmax.f32 %v1628, 0.0
        %v2539 = vmax.f32 %v1739, 0.0
        %v2540 = vmax.f32 %v1741, 0.0
        %v2541 = vmax.f32 %v1852, 0.0
        %v2542 = vmax.f32 %v1854, 0.0
        %v2543 = vmax.f32 %v1965, 0.0
        %v2544 = vmax.f32 %v1967, 0.0
        %v2545 = vmax.f32 %v2078, 0.0
        %v2546 = vmax.f32 %v2080, 0.0
        %v2547 = vmax.f32 %v2191, 0.0
        %v2548 = vmax.f32 %v2193, 0.0
        %v2549 = vmax.f32 %v2304, 0.0
        %v2550 = vmax.f32 %v2306, 0.0
        %v2551 = vmax.f32 %v2417, 0.0
        %v2552 = vmax.f32 %v2419, 0.0
        %v2553 = vmax.f32 %v1519, 0.0
        %v2554 = vmax.f32 %v1521, 0.0
        %v2555 = vmax.f32 %v1632, 0.0
        %v2556 = vmax.f32 %v1634, 0.0
        %v2557 = vmax.f32 %v1745, 0.0
        %v2558 = vmax.f32 %v1747, 0.0
        %v2559 = vmax.f32 %v1858, 0.0
        %v2560 = vmax.f32 %v1860, 0.0
        %v2561 = vmax.f32 %v1971, 0.0
        %v2562 = vmax.f32 %v1973, 0.0
        %v2563 = vmax.f32 %v2084, 0.0
        %v2564 = vmax.f32 %v2086, 0.0
        %v2565 = vmax.f32 %v2197, 0.0
        %v2566 = vmax.f32 %v2199, 0.0
        %v2567 = vmax.f32 %v2310, 0.0
        %v2568 = vmax.f32 %v2312, 0.0
        %v2569 = vmax.f32 %v2423, 0.0
        %v2570 = vmax.f32 %v2425, 0.0
        %v2571 = vld [vmem:[%s4] sm:$0xff]
        %v2572 = vld [vmem:[%s4 + $0x8] sm:$0xff]
        %v2573 = vld [vmem:[%s4 + $0x10] sm:$0xff]
        %v2574 = vld [vmem:[%s4 + $0x18] sm:$0xff]
        %v2575 = vld [vmem:[%s4 + $0x20] sm:$0xff]
        %v2576 = vld [vmem:[%s4 + $0x28] sm:$0xff]
        %v2577 = vld [vmem:[%s4 + $0x30] sm:$0xff]
        %v2578 = vld [vmem:[%s4 + $0x38] sm:$0xff]
        %v2579 = vld [vmem:[%s4 + $0x40] sm:$0xff]
        %v2580 = vld [vmem:[%s4 + $0x48] sm:$0xff]
        %v2581 = vld [vmem:[%s4 + $0x50] sm:$0xff]
        %v2582 = vld [vmem:[%s4 + $0x58] sm:$0xff]
        %v2583 = vld [vmem:[%s4 + $0x60] sm:$0xff]
        %v2584 = vld [vmem:[%s4 + $0x68] sm:$0xff]
        %v2585 = vld [vmem:[%s4 + $0x70] sm:$0xff]
        %v2586 = vld [vmem:[%s4 + $0x78] sm:$0xff]
        %v2587 = vld [vmem:[%s4 + $0x80] sm:$0xff]
        %v2588 = vld [vmem:[%s4 + $0x88] sm:$0xff]
        %v2589 = vld [vmem:[%s4 + $0x90] sm:$0xff]
        %v2590 = vld [vmem:[%s4 + $0x98] sm:$0xff]
        %v2591 = vld [vmem:[%s4 + $0xa0] sm:$0xff]
        %v2592 = vld [vmem:[%s4 + $0xa8] sm:$0xff]
        %v2593 = vld [vmem:[%s4 + $0xb0] sm:$0xff]
        %v2594 = vld [vmem:[%s4 + $0xb8] sm:$0xff]
        %v2595 = vld [vmem:[%s4 + $0xc0] sm:$0xff]
        %v2596 = vld [vmem:[%s4 + $0xc8] sm:$0xff]
        %v2597 = vld [vmem:[%s4 + $0xd0] sm:$0xff]
        %v2598 = vld [vmem:[%s4 + $0xd8] sm:$0xff]
        %v2599 = vld [vmem:[%s4 + $0xe0] sm:$0xff]
        %v2600 = vld [vmem:[%s4 + $0xe8] sm:$0xff]
        %v2601 = vld [vmem:[%s4 + $0xf0] sm:$0xff]
        %v2602 = vld [vmem:[%s4 + $0xf8] sm:$0xff]
        %v2603 = vld [vmem:[%s4 + $0x100] sm:$0xff]
        %v2604 = vld [vmem:[%s4 + $0x108] sm:$0xff]
        %v2605 = vld [vmem:[%s4 + $0x110] sm:$0xff]
        %v2606 = vld [vmem:[%s4 + $0x118] sm:$0xff]
        %v2607 = vld [vmem:[%s4 + $0x120] sm:$0xff]
        %v2608 = vld [vmem:[%s4 + $0x128] sm:$0xff]
        %v2609 = vld [vmem:[%s4 + $0x130] sm:$0xff]
        %v2610 = vld [vmem:[%s4 + $0x138] sm:$0xff]
        %v2611 = vld [vmem:[%s4 + $0x140] sm:$0xff]
        %v2612 = vld [vmem:[%s4 + $0x148] sm:$0xff]
        %v2613 = vld [vmem:[%s4 + $0x150] sm:$0xff]
        %v2614 = vld [vmem:[%s4 + $0x158] sm:$0xff]
        %v2615 = vld [vmem:[%s4 + $0x160] sm:$0xff]
        %v2616 = vld [vmem:[%s4 + $0x168] sm:$0xff]
        %v2617 = vld [vmem:[%s4 + $0x170] sm:$0xff]
        %v2618 = vld [vmem:[%s4 + $0x178] sm:$0xff]
        %v2619 = vld [vmem:[%s4 + $0x180] sm:$0xff]
        %v2620 = vld [vmem:[%s4 + $0x188] sm:$0xff]
        %v2621 = vld [vmem:[%s4 + $0x190] sm:$0xff]
        %v2622 = vld [vmem:[%s4 + $0x198] sm:$0xff]
        %v2623 = vld [vmem:[%s4 + $0x1a0] sm:$0xff]
        %v2624 = vld [vmem:[%s4 + $0x1a8] sm:$0xff]
        %v2625 = vld [vmem:[%s4 + $0x1b0] sm:$0xff]
        %v2626 = vld [vmem:[%s4 + $0x1b8] sm:$0xff]
        %v2627 = vld [vmem:[%s4 + $0x1c0] sm:$0xff]
        %v2628 = vld [vmem:[%s4 + $0x1c8] sm:$0xff]
        %v2629 = vld [vmem:[%s4 + $0x1d0] sm:$0xff]
        %v2630 = vld [vmem:[%s4 + $0x1d8] sm:$0xff]
        %v2631 = vld [vmem:[%s4 + $0x1e0] sm:$0xff]
        %v2632 = vld [vmem:[%s4 + $0x1e8] sm:$0xff]
        %v2633 = vld [vmem:[%s4 + $0x1f0] sm:$0xff]
        %v2634 = vld [vmem:[%s4 + $0x1f8] sm:$0xff]
        %v2635 = vld [vmem:[%s4 + $0x200] sm:$0xff]
        %v2636 = vld [vmem:[%s4 + $0x208] sm:$0xff]
        %v2637 = vld [vmem:[%s4 + $0x210] sm:$0xff]
        %v2638 = vld [vmem:[%s4 + $0x218] sm:$0xff]
        %v2639 = vld [vmem:[%s4 + $0x220] sm:$0xff]
        %v2640 = vld [vmem:[%s4 + $0x228] sm:$0xff]
        %v2641 = vld [vmem:[%s4 + $0x230] sm:$0xff]
        %v2642 = vld [vmem:[%s4 + $0x238] sm:$0xff]
        %v2643 = vld [vmem:[%s4 + $0x240] sm:$0xff]
        %v2644 = vld [vmem:[%s4 + $0x248] sm:$0xff]
        %v2645 = vld [vmem:[%s4 + $0x250] sm:$0xff]
        %v2646 = vld [vmem:[%s4 + $0x258] sm:$0xff]
        %v2647 = vld [vmem:[%s4 + $0x260] sm:$0xff]
        %v2648 = vld [vmem:[%s4 + $0x268] sm:$0xff]
        %v2649 = vld [vmem:[%s4 + $0x270] sm:$0xff]
        %v2650 = vld [vmem:[%s4 + $0x278] sm:$0xff]
        %v2651 = vld [vmem:[%s4 + $0x280] sm:$0xff]
        %v2652 = vld [vmem:[%s4 + $0x288] sm:$0xff]
        %v2653 = vld [vmem:[%s4 + $0x290] sm:$0xff]
        %v2654 = vld [vmem:[%s4 + $0x298] sm:$0xff]
        %v2655 = vld [vmem:[%s4 + $0x2a0] sm:$0xff]
        %v2656 = vld [vmem:[%s4 + $0x2a8] sm:$0xff]
        %v2657 = vld [vmem:[%s4 + $0x2b0] sm:$0xff]
        %v2658 = vld [vmem:[%s4 + $0x2b8] sm:$0xff]
        %v2659 = vld [vmem:[%s4 + $0x2c0] sm:$0xff]
        %v2660 = vld [vmem:[%s4 + $0x2c8] sm:$0xff]
        %v2661 = vld [vmem:[%s4 + $0x2d0] sm:$0xff]
        %v2662 = vld [vmem:[%s4 + $0x2d8] sm:$0xff]
        %v2663 = vld [vmem:[%s4 + $0x2e0] sm:$0xff]
        %v2664 = vld [vmem:[%s4 + $0x2e8] sm:$0xff]
        %v2665 = vld [vmem:[%s4 + $0x2f0] sm:$0xff]
        %v2666 = vld [vmem:[%s4 + $0x2f8] sm:$0xff]
        %v2667 = vld [vmem:[%s4 + $0x300] sm:$0xff]
        %v2668 = vld [vmem:[%s4 + $0x308] sm:$0xff]
        %v2669 = vld [vmem:[%s4 + $0x310] sm:$0xff]
        %v2670 = vld [vmem:[%s4 + $0x318] sm:$0xff]
        %v2671 = vld [vmem:[%s4 + $0x320] sm:$0xff]
        %v2672 = vld [vmem:[%s4 + $0x328] sm:$0xff]
        %v2673 = vld [vmem:[%s4 + $0x330] sm:$0xff]
        %v2674 = vld [vmem:[%s4 + $0x338] sm:$0xff]
        %v2675 = vld [vmem:[%s4 + $0x340] sm:$0xff]
        %v2676 = vld [vmem:[%s4 + $0x348] sm:$0xff]
        %v2677 = vld [vmem:[%s4 + $0x350] sm:$0xff]
        %v2678 = vld [vmem:[%s4 + $0x358] sm:$0xff]
        %v2679 = vld [vmem:[%s4 + $0x360] sm:$0xff]
        %v2680 = vld [vmem:[%s4 + $0x368] sm:$0xff]
        %v2681 = vld [vmem:[%s4 + $0x370] sm:$0xff]
        %v2682 = vld [vmem:[%s4 + $0x378] sm:$0xff]
        %v2683 = vld [vmem:[%s4 + $0x380] sm:$0xff]
        %v2684 = vld [vmem:[%s4 + $0x388] sm:$0xff]
        %v2685 = vld [vmem:[%s4 + $0x390] sm:$0xff]
        %v2686 = vld [vmem:[%s4 + $0x398] sm:$0xff]
        %v2687 = vld [vmem:[%s4 + $0x3a0] sm:$0xff]
        %v2688 = vld [vmem:[%s4 + $0x3a8] sm:$0xff]
        %v2689 = vld [vmem:[%s4 + $0x3b0] sm:$0xff]
        %v2690 = vld [vmem:[%s4 + $0x3b8] sm:$0xff]
        %v2691 = vld [vmem:[%s4 + $0x3c0] sm:$0xff]
        %v2692 = vld [vmem:[%s4 + $0x3c8] sm:$0xff]
        %v2693 = vld [vmem:[%s4 + $0x3d0] sm:$0xff]
        %v2694 = vld [vmem:[%s4 + $0x3d8] sm:$0xff]
        %v2695 = vld [vmem:[%s4 + $0x3e0] sm:$0xff]
        %v2696 = vld [vmem:[%s4 + $0x3e8] sm:$0xff]
        %v2697 = vld [vmem:[%s4 + $0x3f0] sm:$0xff]
        %v2698 = vld [vmem:[%s4 + $0x3f8] sm:$0xff]
        %v2699 = vld [vmem:[%s4 + $0x400] sm:$0xff]
        %v2700 = vld [vmem:[%s4 + $0x408] sm:$0xff]
        %v2701 = vld [vmem:[%s4 + $0x410] sm:$0xff]
        %v2702 = vld [vmem:[%s4 + $0x418] sm:$0xff]
        %v2703 = vld [vmem:[%s4 + $0x420] sm:$0xff]
        %v2704 = vld [vmem:[%s4 + $0x428] sm:$0xff]
        %v2705 = vld [vmem:[%s4 + $0x430] sm:$0xff]
        %v2706 = vld [vmem:[%s4 + $0x438] sm:$0xff]
        %v2707 = vld [vmem:[%s4 + $0x440] sm:$0xff]
        %v2708 = vld [vmem:[%s4 + $0x448] sm:$0xff]
        %v2709 = vld [vmem:[%s4 + $0x450] sm:$0xff]
        %v2710 = vld [vmem:[%s4 + $0x458] sm:$0xff]
        %v2711 = vld [vmem:[%s4 + $0x460] sm:$0xff]
        %v2712 = vld [vmem:[%s4 + $0x468] sm:$0xff]
        %v2713 = vld [vmem:[%s4 + $0x470] sm:$0xff]
        %v2714 = vld [vmem:[%s4 + $0x478] sm:$0xff]
        %v2715 = vld [vmem:[%s4 + $0x480] sm:$0xff]
        %v2716 = vld [vmem:[%s4 + $0x488] sm:$0xff]
        %v2717 = vld [vmem:[%s4 + $0x490] sm:$0xff]
        %v2718 = vld [vmem:[%s4 + $0x498] sm:$0xff]
        %v2719 = vld [vmem:[%s4 + $0x4a0] sm:$0xff]
        %v2720 = vld [vmem:[%s4 + $0x4a8] sm:$0xff]
        %v2721 = vld [vmem:[%s4 + $0x4b0] sm:$0xff]
        %v2722 = vld [vmem:[%s4 + $0x4b8] sm:$0xff]
        %v2723 = vld [vmem:[%s4 + $0x4c0] sm:$0xff]
        %v2724 = vld [vmem:[%s4 + $0x4c8] sm:$0xff]
        %v2725 = vld [vmem:[%s4 + $0x4d0] sm:$0xff]
        %v2726 = vld [vmem:[%s4 + $0x4d8] sm:$0xff]
        %v2727 = vld [vmem:[%s4 + $0x4e0] sm:$0xff]
        %v2728 = vld [vmem:[%s4 + $0x4e8] sm:$0xff]
        %v2729 = vld [vmem:[%s4 + $0x4f0] sm:$0xff]
        %v2730 = vld [vmem:[%s4 + $0x4f8] sm:$0xff]
        %v2731 = vld [vmem:[%s4 + $0x500] sm:$0xff]
        %v2732 = vld [vmem:[%s4 + $0x508] sm:$0xff]
        %v2733 = vld [vmem:[%s4 + $0x510] sm:$0xff]
        %v2734 = vld [vmem:[%s4 + $0x518] sm:$0xff]
        %v2735 = vld [vmem:[%s4 + $0x520] sm:$0xff]
        %v2736 = vld [vmem:[%s4 + $0x528] sm:$0xff]
        %v2737 = vld [vmem:[%s4 + $0x530] sm:$0xff]
        %v2738 = vld [vmem:[%s4 + $0x538] sm:$0xff]
        %v2739 = vld [vmem:[%s4 + $0x540] sm:$0xff]
        %v2740 = vld [vmem:[%s4 + $0x548] sm:$0xff]
        %v2741 = vld [vmem:[%s4 + $0x550] sm:$0xff]
        %v2742 = vld [vmem:[%s4 + $0x558] sm:$0xff]
        %v2743 = vld [vmem:[%s4 + $0x560] sm:$0xff]
        %v2744 = vld [vmem:[%s4 + $0x568] sm:$0xff]
        %v2745 = vld [vmem:[%s4 + $0x570] sm:$0xff]
        %v2746 = vld [vmem:[%s4 + $0x578] sm:$0xff]
        %v2747 = vld [vmem:[%s4 + $0x580] sm:$0xff]
        %v2748 = vld [vmem:[%s4 + $0x588] sm:$0xff]
        %v2749 = vld [vmem:[%s4 + $0x590] sm:$0xff]
        %v2750 = vld [vmem:[%s4 + $0x598] sm:$0xff]
        %v2751 = vld [vmem:[%s4 + $0x5a0] sm:$0xff]
        %v2752 = vld [vmem:[%s4 + $0x5a8] sm:$0xff]
        %v2753 = vld [vmem:[%s4 + $0x5b0] sm:$0xff]
        %v2754 = vld [vmem:[%s4 + $0x5b8] sm:$0xff]
        %v2755 = vld [vmem:[%s4 + $0x5c0] sm:$0xff]
        %v2756 = vld [vmem:[%s4 + $0x5c8] sm:$0xff]
        %v2757 = vld [vmem:[%s4 + $0x5d0] sm:$0xff]
        %v2758 = vld [vmem:[%s4 + $0x5d8] sm:$0xff]
        %v2759 = vld [vmem:[%s4 + $0x5e0] sm:$0xff]
        %v2760 = vld [vmem:[%s4 + $0x5e8] sm:$0xff]
        %v2761 = vld [vmem:[%s4 + $0x5f0] sm:$0xff]
        %v2762 = vld [vmem:[%s4 + $0x5f8] sm:$0xff]
        %v2763 = vld [vmem:[%s4 + $0x600] sm:$0xff]
        %v2764 = vld [vmem:[%s4 + $0x608] sm:$0xff]
        %v2765 = vld [vmem:[%s4 + $0x610] sm:$0xff]
        %v2766 = vld [vmem:[%s4 + $0x618] sm:$0xff]
        %v2767 = vld [vmem:[%s4 + $0x620] sm:$0xff]
        %v2768 = vld [vmem:[%s4 + $0x628] sm:$0xff]
        %v2769 = vld [vmem:[%s4 + $0x630] sm:$0xff]
        %v2770 = vld [vmem:[%s4 + $0x638] sm:$0xff]
        %v2771 = vld [vmem:[%s4 + $0x640] sm:$0xff]
        %v2772 = vld [vmem:[%s4 + $0x648] sm:$0xff]
        %v2773 = vld [vmem:[%s4 + $0x650] sm:$0xff]
        %v2774 = vld [vmem:[%s4 + $0x658] sm:$0xff]
        %v2775 = vld [vmem:[%s4 + $0x660] sm:$0xff]
        %v2776 = vld [vmem:[%s4 + $0x668] sm:$0xff]
        %v2777 = vld [vmem:[%s4 + $0x670] sm:$0xff]
        %v2778 = vld [vmem:[%s4 + $0x678] sm:$0xff]
        %v2779 = vld [vmem:[%s4 + $0x680] sm:$0xff]
        %v2780 = vld [vmem:[%s4 + $0x688] sm:$0xff]
        %v2781 = vld [vmem:[%s4 + $0x690] sm:$0xff]
        %v2782 = vld [vmem:[%s4 + $0x698] sm:$0xff]
        %v2783 = vld [vmem:[%s4 + $0x6a0] sm:$0xff]
        %v2784 = vld [vmem:[%s4 + $0x6a8] sm:$0xff]
        %v2785 = vld [vmem:[%s4 + $0x6b0] sm:$0xff]
        %v2786 = vld [vmem:[%s4 + $0x6b8] sm:$0xff]
        %v2787 = vld [vmem:[%s4 + $0x6c0] sm:$0xff]
        %v2788 = vld [vmem:[%s4 + $0x6c8] sm:$0xff]
        %v2789 = vld [vmem:[%s4 + $0x6d0] sm:$0xff]
        %v2790 = vld [vmem:[%s4 + $0x6d8] sm:$0xff]
        %v2791 = vld [vmem:[%s4 + $0x6e0] sm:$0xff]
        %v2792 = vld [vmem:[%s4 + $0x6e8] sm:$0xff]
        %v2793 = vld [vmem:[%s4 + $0x6f0] sm:$0xff]
        %v2794 = vld [vmem:[%s4 + $0x6f8] sm:$0xff]
        %v2795 = vld [vmem:[%s4 + $0x700] sm:$0xff]
        %v2796 = vld [vmem:[%s4 + $0x708] sm:$0xff]
        %v2797 = vld [vmem:[%s4 + $0x710] sm:$0xff]
        %v2798 = vld [vmem:[%s4 + $0x718] sm:$0xff]
        %v2799 = vld [vmem:[%s4 + $0x720] sm:$0xff]
        %v2800 = vld [vmem:[%s4 + $0x728] sm:$0xff]
        %v2801 = vld [vmem:[%s4 + $0x730] sm:$0xff]
        %v2802 = vld [vmem:[%s4 + $0x738] sm:$0xff]
        %v2803 = vld [vmem:[%s4 + $0x740] sm:$0xff]
        %v2804 = vld [vmem:[%s4 + $0x748] sm:$0xff]
        %v2805 = vld [vmem:[%s4 + $0x750] sm:$0xff]
        %v2806 = vld [vmem:[%s4 + $0x758] sm:$0xff]
        %v2807 = vld [vmem:[%s4 + $0x760] sm:$0xff]
        %v2808 = vld [vmem:[%s4 + $0x768] sm:$0xff]
        %v2809 = vld [vmem:[%s4 + $0x770] sm:$0xff]
        %v2810 = vld [vmem:[%s4 + $0x778] sm:$0xff]
        %v2811 = vld [vmem:[%s4 + $0x780] sm:$0xff]
        %v2812 = vld [vmem:[%s4 + $0x788] sm:$0xff]
        %v2813 = vld [vmem:[%s4 + $0x790] sm:$0xff]
        %v2814 = vld [vmem:[%s4 + $0x798] sm:$0xff]
        %v2815 = vld [vmem:[%s4 + $0x7a0] sm:$0xff]
        %v2816 = vld [vmem:[%s4 + $0x7a8] sm:$0xff]
        %v2817 = vld [vmem:[%s4 + $0x7b0] sm:$0xff]
        %v2818 = vld [vmem:[%s4 + $0x7b8] sm:$0xff]
        %v2819 = vld [vmem:[%s4 + $0x7c0] sm:$0xff]
        %v2820 = vld [vmem:[%s4 + $0x7c8] sm:$0xff]
        %v2821 = vld [vmem:[%s4 + $0x7d0] sm:$0xff]
        %v2822 = vld [vmem:[%s4 + $0x7d8] sm:$0xff]
        %v2823 = vld [vmem:[%s4 + $0x7e0] sm:$0xff]
        %v2824 = vld [vmem:[%s4 + $0x7e8] sm:$0xff]
        %v2825 = vld [vmem:[%s4 + $0x7f0] sm:$0xff]
        %v2826 = vld [vmem:[%s4 + $0x7f8] sm:$0xff]
        %v2827 = vld [vmem:[%s4 + $0x800] sm:$0xff]
        %v2828 = vld [vmem:[%s4 + $0x808] sm:$0xff]
        %v2829 = vld [vmem:[%s4 + $0x810] sm:$0xff]
        %v2830 = vld [vmem:[%s4 + $0x818] sm:$0xff]
        %v2831 = vld [vmem:[%s4 + $0x820] sm:$0xff]
        %v2832 = vld [vmem:[%s4 + $0x828] sm:$0xff]
        %v2833 = vld [vmem:[%s4 + $0x830] sm:$0xff]
        %v2834 = vld [vmem:[%s4 + $0x838] sm:$0xff]
        %v2835 = vld [vmem:[%s4 + $0x840] sm:$0xff]
        %v2836 = vld [vmem:[%s4 + $0x848] sm:$0xff]
        %v2837 = vld [vmem:[%s4 + $0x850] sm:$0xff]
        %v2838 = vld [vmem:[%s4 + $0x858] sm:$0xff]
        %v2839 = vld [vmem:[%s4 + $0x860] sm:$0xff]
        %v2840 = vld [vmem:[%s4 + $0x868] sm:$0xff]
        %v2841 = vld [vmem:[%s4 + $0x870] sm:$0xff]
        %v2842 = vld [vmem:[%s4 + $0x878] sm:$0xff]
        %v2843 = vld [vmem:[%s4 + $0x880] sm:$0xff]
        %v2844 = vld [vmem:[%s4 + $0x888] sm:$0xff]
        %v2845 = vld [vmem:[%s4 + $0x890] sm:$0xff]
        %v2846 = vld [vmem:[%s4 + $0x898] sm:$0xff]
        %v2847 = vld [vmem:[%s4 + $0x8a0] sm:$0xff]
        %v2848 = vld [vmem:[%s4 + $0x8a8] sm:$0xff]
        %v2849 = vld [vmem:[%s4 + $0x8b0] sm:$0xff]
        %v2850 = vld [vmem:[%s4 + $0x8b8] sm:$0xff]
        %v2851 = vld [vmem:[%s4 + $0x8c0] sm:$0xff]
        %v2852 = vld [vmem:[%s4 + $0x8c8] sm:$0xff]
        %v2853 = vld [vmem:[%s4 + $0x8d0] sm:$0xff]
        %v2854 = vld [vmem:[%s4 + $0x8d8] sm:$0xff]
        %v2855 = vld [vmem:[%s4 + $0x8e0] sm:$0xff]
        %v2856 = vld [vmem:[%s4 + $0x8e8] sm:$0xff]
        %v2857 = vld [vmem:[%s4 + $0x8f0] sm:$0xff]
        %v2858 = vld [vmem:[%s4 + $0x8f8] sm:$0xff]
        %v2859 = vld [vmem:[%s5] sm:$0x1]
        %v2861 = vlaneseq
        %v2862 = vshrl.u32 %v2861, 7
        %v2863 = vsub.s32 0, %v2862
        %v2864 = vrot.slane %v2859, %v2863
        %2866 = vmatprep.subr.mxu0 0.0
        %2867 = vmatpush1.msra.mxu0 %v2571
        %2868 = vmatprep.subr.mxu0 0.0
        %2869 = vmatpush1.msra.mxu0 %v2572
        %2870 = vmatprep.subr.mxu0 0.0
        %2871 = vmatpush1.msra.mxu0 %v2573
        %2872 = vmatprep.subr.mxu0 0.0
        %2873 = vmatpush1.msra.mxu0 %v2574
        %2874 = vmatprep.subr.mxu0 0.0
        %2875 = vmatpush1.msra.mxu0 %v2575
        %2876 = vmatprep.subr.mxu0 0.0
        %2877 = vmatpush1.msra.mxu0 %v2576
        %2878 = vmatprep.subr.mxu0 0.0
        %2879 = vmatpush1.msra.mxu0 %v2577
        %2880 = vmatprep.subr.mxu0 0.0
        %2881 = vmatpush1.msra.mxu0 %v2578
        %2882 = vmatprep.subr.mxu0 0.0
        %2883 = vmatpush1.msra.mxu0 %v2579
        %2884 = vmatprep.subr.mxu0 0.0
        %2885 = vmatpush1.msra.mxu0 %v2580
        %2886 = vmatprep.subr.mxu0 0.0
        %2887 = vmatpush1.msra.mxu0 %v2581
        %2888 = vmatprep.subr.mxu0 0.0
        %2889 = vmatpush1.msra.mxu0 %v2582
        %2890 = vmatprep.subr.mxu0 0.0
        %2891 = vmatpush1.msra.mxu0 %v2583
        %2892 = vmatprep.subr.mxu0 0.0
        %2893 = vmatpush1.msra.mxu0 %v2584
        %2894 = vmatprep.subr.mxu0 0.0
        %2895 = vmatpush1.msra.mxu0 %v2585
        %2896 = vmatprep.subr.mxu0 0.0
        %2897 = vmatpush1.msra.mxu0 %v2586
        %2898 = vmatprep.subr.mxu0 0.0
        %2899 = vmatpush1.msra.mxu0 %v2587
        %2900 = vmatprep.subr.mxu0 0.0
        %2901 = vmatpush1.msra.mxu0 %v2588
        %2902 = vmatprep.subr.mxu0 0.0
        %2903 = vmatpush1.msra.mxu0 %v2589
        %2904 = vmatprep.subr.mxu0 0.0
        %2905 = vmatpush1.msra.mxu0 %v2590
        %2906 = vmatprep.subr.mxu0 0.0
        %2907 = vmatpush1.msra.mxu0 %v2591
        %2908 = vmatprep.subr.mxu0 0.0
        %2909 = vmatpush1.msra.mxu0 %v2592
        %2910 = vmatprep.subr.mxu0 0.0
        %2911 = vmatpush1.msra.mxu0 %v2593
        %2912 = vmatprep.subr.mxu0 0.0
        %2913 = vmatpush1.msra.mxu0 %v2594
        %2914 = vmatprep.subr.mxu0 0.0
        %2915 = vmatpush1.msra.mxu0 %v2595
        %2916 = vmatprep.subr.mxu0 0.0
        %2917 = vmatpush1.msra.mxu0 %v2596
        %2918 = vmatprep.subr.mxu0 0.0
        %2919 = vmatpush1.msra.mxu0 %v2597
        %2920 = vmatprep.subr.mxu0 0.0
        %2921 = vmatpush1.msra.mxu0 %v2598
        %2922 = vmatprep.subr.mxu0 0.0
        %2923 = vmatpush1.msra.mxu0 %v2599
        %2924 = vmatprep.subr.mxu0 0.0
        %2925 = vmatpush1.msra.mxu0 %v2600
        %2926 = vmatprep.subr.mxu0 0.0
        %2927 = vmatpush1.msra.mxu0 %v2601
        %2928 = vmatprep.subr.mxu0 0.0
        %2929 = vmatpush1.msra.mxu0 %v2602
        %2930 = vmatprep.mubr.f32.mxu0 %v2428
        %2931 = vmatmul.mubr.f32.gmra.mrb[0].mxu0 %v2427
        %v2932 = vpop.f32.mrb[0].mxu0
        %v2933 = vadd.f32 %v2864, %v2932
        %v2934 = vpop.f32.mrb[0].mxu0
        %2935 = vmatprep.mubr.f32.mxu0 %v2446
        %2936 = vmatmul.mubr.f32.gmra.mrb[0].mxu0 %v2445
        %v2937 = vpop.f32.mrb[0].mxu0
        %v2938 = vadd.f32 %v2864, %v2937
        %v2939 = vpop.f32.mrb[0].mxu0
        %2940 = vmatprep.mubr.f32.mxu0 %v2464
        %2941 = vmatmul.mubr.f32.gmra.mrb[0].mxu0 %v2463
        %v2942 = vpop.f32.mrb[0].mxu0
        %v2943 = vadd.f32 %v2864, %v2942
        %v2944 = vpop.f32.mrb[0].mxu0
        %2945 = vmatprep.mubr.f32.mxu0 %v2482
        %2946 = vmatmul.mubr.f32.gmra.mrb[0].mxu0 %v2481
        %v2947 = vpop.f32.mrb[0].mxu0
        %v2948 = vadd.f32 %v2864, %v2947
        %v2949 = vpop.f32.mrb[0].mxu0
        %2950 = vmatprep.mubr.f32.mxu0 %v2500
        %2951 = vmatmul.mubr.f32.gmra.mrb[0].mxu0 %v2499
        %v2952 = vpop.f32.mrb[0].mxu0
        %v2953 = vadd.f32 %v2864, %v2952
        %v2954 = vpop.f32.mrb[0].mxu0
        %2955 = vmatprep.mubr.f32.mxu0 %v2518
        %2956 = vmatmul.mubr.f32.gmra.mrb[0].mxu0 %v2517
        %v2957 = vpop.f32.mrb[0].mxu0
        %v2958 = vadd.f32 %v2864, %v2957
        %v2959 = vpop.f32.mrb[0].mxu0
        %2960 = vmatprep.mubr.f32.mxu0 %v2536
        %2961 = vmatmul.mubr.f32.gmra.mrb[0].mxu0 %v2535
        %v2962 = vpop.f32.mrb[0].mxu0
        %v2963 = vadd.f32 %v2864, %v2962
        %v2964 = vpop.f32.mrb[0].mxu0
        %2965 = vmatprep.mubr.f32.mxu0 %v2554
        %2966 = vmatmul.mubr.f32.gmra.mrb[0].mxu0 %v2553
        %v2967 = vpop.f32.mrb[0].mxu0
        %v2968 = vadd.f32 %v2864, %v2967
        %v2969 = vpop.f32.mrb[0].mxu0
        %2970 = vdwg.mxu0
        %2971 = vmatprep.subr.mxu0 0.0
        %2972 = vmatpush1.msra.mxu0 %v2603
        %2973 = vmatprep.subr.mxu0 0.0
        %2974 = vmatpush1.msra.mxu0 %v2604
        %2975 = vmatprep.subr.mxu0 0.0
        %2976 = vmatpush1.msra.mxu0 %v2605
        %2977 = vmatprep.subr.mxu0 0.0
        %2978 = vmatpush1.msra.mxu0 %v2606
        %2979 = vmatprep.subr.mxu0 0.0
        %2980 = vmatpush1.msra.mxu0 %v2607
        %2981 = vmatprep.subr.mxu0 0.0
        %2982 = vmatpush1.msra.mxu0 %v2608
        %2983 = vmatprep.subr.mxu0 0.0
        %2984 = vmatpush1.msra.mxu0 %v2609
        %2985 = vmatprep.subr.mxu0 0.0
        %2986 = vmatpush1.msra.mxu0 %v2610
        %2987 = vmatprep.subr.mxu0 0.0
        %2988 = vmatpush1.msra.mxu0 %v2611
        %2989 = vmatprep.subr.mxu0 0.0
        %2990 = vmatpush1.msra.mxu0 %v2612
        %2991 = vmatprep.subr.mxu0 0.0
        %2992 = vmatpush1.msra.mxu0 %v2613
        %2993 = vmatprep.subr.mxu0 0.0
        %2994 = vmatpush1.msra.mxu0 %v2614
        %2995 = vmatprep.subr.mxu0 0.0
        %2996 = vmatpush1.msra.mxu0 %v2615
        %2997 = vmatprep.subr.mxu0 0.0
        %2998 = vmatpush1.msra.mxu0 %v2616
        %2999 = vmatprep.subr.mxu0 0.0
        %3000 = vmatpush1.msra.mxu0 %v2617
        %3001 = vmatprep.subr.mxu0 0.0
        %3002 = vmatpush1.msra.mxu0 %v2618
        %3003 = vmatprep.subr.mxu0 0.0
        %3004 = vmatpush1.msra.mxu0 %v2619
        %3005 = vmatprep.subr.mxu0 0.0
        %3006 = vmatpush1.msra.mxu0 %v2620
        %3007 = vmatprep.subr.mxu0 0.0
        %3008 = vmatpush1.msra.mxu0 %v2621
        %3009 = vmatprep.subr.mxu0 0.0
        %3010 = vmatpush1.msra.mxu0 %v2622
        %3011 = vmatprep.subr.mxu0 0.0
        %3012 = vmatpush1.msra.mxu0 %v2623
        %3013 = vmatprep.subr.mxu0 0.0
        %3014 = vmatpush1.msra.mxu0 %v2624
        %3015 = vmatprep.subr.mxu0 0.0
        %3016 = vmatpush1.msra.mxu0 %v2625
        %3017 = vmatprep.subr.mxu0 0.0
        %3018 = vmatpush1.msra.mxu0 %v2626
        %3019 = vmatprep.subr.mxu0 0.0
        %3020 = vmatpush1.msra.mxu0 %v2627
        %3021 = vmatprep.subr.mxu0 0.0
        %3022 = vmatpush1.msra.mxu0 %v2628
        %3023 = vmatprep.subr.mxu0 0.0
        %3024 = vmatpush1.msra.mxu0 %v2629
        %3025 = vmatprep.subr.mxu0 0.0
        %3026 = vmatpush1.msra.mxu0 %v2630
        %3027 = vmatprep.subr.mxu0 0.0
        %3028 = vmatpush1.msra.mxu0 %v2631
        %3029 = vmatprep.subr.mxu0 0.0
        %3030 = vmatpush1.msra.mxu0 %v2632
        %3031 = vmatprep.subr.mxu0 0.0
        %3032 = vmatpush1.msra.mxu0 %v2633
        %3033 = vmatprep.subr.mxu0 0.0
        %3034 = vmatpush1.msra.mxu0 %v2634
        %3035 = vmatprep.mubr.f32.mxu0 %v2430
        %3036 = vmatmul.mubr.f32.gmra.mrb[0].mxu0 %v2429
        %v3037 = vpop.f32.mrb[0].mxu0
        %v3038 = vadd.f32 %v2933, %v3037
        %v3039 = vpop.f32.mrb[0].mxu0
        %3040 = vmatprep.mubr.f32.mxu0 %v2448
        %3041 = vmatmul.mubr.f32.gmra.mrb[0].mxu0 %v2447
        %v3042 = vpop.f32.mrb[0].mxu0
        %v3043 = vadd.f32 %v2938, %v3042
        %v3044 = vpop.f32.mrb[0].mxu0
        %3045 = vmatprep.mubr.f32.mxu0 %v2466
        %3046 = vmatmul.mubr.f32.gmra.mrb[0].mxu0 %v2465
        %v3047 = vpop.f32.mrb[0].mxu0
        %v3048 = vadd.f32 %v2943, %v3047
        %v3049 = vpop.f32.mrb[0].mxu0
        %3050 = vmatprep.mubr.f32.mxu0 %v2484
        %3051 = vmatmul.mubr.f32.gmra.mrb[0].mxu0 %v2483
        %v3052 = vpop.f32.mrb[0].mxu0
        %v3053 = vadd.f32 %v2948, %v3052
        %v3054 = vpop.f32.mrb[0].mxu0
        %3055 = vmatprep.mubr.f32.mxu0 %v2502
        %3056 = vmatmul.mubr.f32.gmra.mrb[0].mxu0 %v2501
        %v3057 = vpop.f32.mrb[0].mxu0
        %v3058 = vadd.f32 %v2953, %v3057
        %v3059 = vpop.f32.mrb[0].mxu0
        %3060 = vmatprep.mubr.f32.mxu0 %v2520
        %3061 = vmatmul.mubr.f32.gmra.mrb[0].mxu0 %v2519
        %v3062 = vpop.f32.mrb[0].mxu0
        %v3063 = vadd.f32 %v2958, %v3062
        %v3064 = vpop.f32.mrb[0].mxu0
        %3065 = vmatprep.mubr.f32.mxu0 %v2538
        %3066 = vmatmul.mubr.f32.gmra.mrb[0].mxu0 %v2537
        %v3067 = vpop.f32.mrb[0].mxu0
        %v3068 = vadd.f32 %v2963, %v3067
        %v3069 = vpop.f32.mrb[0].mxu0
        %3070 = vmatprep.mubr.f32.mxu0 %v2556
        %3071 = vmatmul.mubr.f32.gmra.mrb[0].mxu0 %v2555
        %v3072 = vpop.f32.mrb[0].mxu0
        %v3073 = vadd.f32 %v2968, %v3072
        %v3074 = vpop.f32.mrb[0].mxu0
        %3075 = vdwg.mxu0
        %3076 = vmatprep.subr.mxu0 0.0
        %3077 = vmatpush1.msra.mxu0 %v2635
        %3078 = vmatprep.subr.mxu0 0.0
        %3079 = vmatpush1.msra.mxu0 %v2636
        %3080 = vmatprep.subr.mxu0 0.0
        %3081 = vmatpush1.msra.mxu0 %v2637
        %3082 = vmatprep.subr.mxu0 0.0
        %3083 = vmatpush1.msra.mxu0 %v2638
        %3084 = vmatprep.subr.mxu0 0.0
        %3085 = vmatpush1.msra.mxu0 %v2639
        %3086 = vmatprep.subr.mxu0 0.0
        %3087 = vmatpush1.msra.mxu0 %v2640
        %3088 = vmatprep.subr.mxu0 0.0
        %3089 = vmatpush1.msra.mxu0 %v2641
        %3090 = vmatprep.subr.mxu0 0.0
        %3091 = vmatpush1.msra.mxu0 %v2642
        %3092 = vmatprep.subr.mxu0 0.0
        %3093 = vmatpush1.msra.mxu0 %v2643
        %3094 = vmatprep.subr.mxu0 0.0
        %3095 = vmatpush1.msra.mxu0 %v2644
        %3096 = vmatprep.subr.mxu0 0.0
        %3097 = vmatpush1.msra.mxu0 %v2645
        %3098 = vmatprep.subr.mxu0 0.0
        %3099 = vmatpush1.msra.mxu0 %v2646
        %3100 = vmatprep.subr.mxu0 0.0
        %3101 = vmatpush1.msra.mxu0 %v2647
        %3102 = vmatprep.subr.mxu0 0.0
        %3103 = vmatpush1.msra.mxu0 %v2648
        %3104 = vmatprep.subr.mxu0 0.0
        %3105 = vmatpush1.msra.mxu0 %v2649
        %3106 = vmatprep.subr.mxu0 0.0
        %3107 = vmatpush1.msra.mxu0 %v2650
        %3108 = vmatprep.subr.mxu0 0.0
        %3109 = vmatpush1.msra.mxu0 %v2651
        %3110 = vmatprep.subr.mxu0 0.0
        %3111 = vmatpush1.msra.mxu0 %v2652
        %3112 = vmatprep.subr.mxu0 0.0
        %3113 = vmatpush1.msra.mxu0 %v2653
        %3114 = vmatprep.subr.mxu0 0.0
        %3115 = vmatpush1.msra.mxu0 %v2654
        %3116 = vmatprep.subr.mxu0 0.0
        %3117 = vmatpush1.msra.mxu0 %v2655
        %3118 = vmatprep.subr.mxu0 0.0
        %3119 = vmatpush1.msra.mxu0 %v2656
        %3120 = vmatprep.subr.mxu0 0.0
        %3121 = vmatpush1.msra.mxu0 %v2657
        %3122 = vmatprep.subr.mxu0 0.0
        %3123 = vmatpush1.msra.mxu0 %v2658
        %3124 = vmatprep.subr.mxu0 0.0
        %3125 = vmatpush1.msra.mxu0 %v2659
        %3126 = vmatprep.subr.mxu0 0.0
        %3127 = vmatpush1.msra.mxu0 %v2660
        %3128 = vmatprep.subr.mxu0 0.0
        %3129 = vmatpush1.msra.mxu0 %v2661
        %3130 = vmatprep.subr.mxu0 0.0
        %3131 = vmatpush1.msra.mxu0 %v2662
        %3132 = vmatprep.subr.mxu0 0.0
        %3133 = vmatpush1.msra.mxu0 %v2663
        %3134 = vmatprep.subr.mxu0 0.0
        %3135 = vmatpush1.msra.mxu0 %v2664
        %3136 = vmatprep.subr.mxu0 0.0
        %3137 = vmatpush1.msra.mxu0 %v2665
        %3138 = vmatprep.subr.mxu0 0.0
        %3139 = vmatpush1.msra.mxu0 %v2666
        %3140 = vmatprep.mubr.f32.mxu0 %v2432
        %3141 = vmatmul.mubr.f32.gmra.mrb[0].mxu0 %v2431
        %v3142 = vpop.f32.mrb[0].mxu0
        %v3143 = vadd.f32 %v3038, %v3142
        %v3144 = vpop.f32.mrb[0].mxu0
        %3145 = vmatprep.mubr.f32.mxu0 %v2450
        %3146 = vmatmul.mubr.f32.gmra.mrb[0].mxu0 %v2449
        %v3147 = vpop.f32.mrb[0].mxu0
        %v3148 = vadd.f32 %v3043, %v3147
        %v3149 = vpop.f32.mrb[0].mxu0
        %3150 = vmatprep.mubr.f32.mxu0 %v2468
        %3151 = vmatmul.mubr.f32.gmra.mrb[0].mxu0 %v2467
        %v3152 = vpop.f32.mrb[0].mxu0
        %v3153 = vadd.f32 %v3048, %v3152
        %v3154 = vpop.f32.mrb[0].mxu0
        %3155 = vmatprep.mubr.f32.mxu0 %v2486
        %3156 = vmatmul.mubr.f32.gmra.mrb[0].mxu0 %v2485
        %v3157 = vpop.f32.mrb[0].mxu0
        %v3158 = vadd.f32 %v3053, %v3157
        %v3159 = vpop.f32.mrb[0].mxu0
        %3160 = vmatprep.mubr.f32.mxu0 %v2504
        %3161 = vmatmul.mubr.f32.gmra.mrb[0].mxu0 %v2503
        %v3162 = vpop.f32.mrb[0].mxu0
        %v3163 = vadd.f32 %v3058, %v3162
        %v3164 = vpop.f32.mrb[0].mxu0
        %3165 = vmatprep.mubr.f32.mxu0 %v2522
        %3166 = vmatmul.mubr.f32.gmra.mrb[0].mxu0 %v2521
        %v3167 = vpop.f32.mrb[0].mxu0
        %v3168 = vadd.f32 %v3063, %v3167
        %v3169 = vpop.f32.mrb[0].mxu0
        %3170 = vmatprep.mubr.f32.mxu0 %v2540
        %3171 = vmatmul.mubr.f32.gmra.mrb[0].mxu0 %v2539
        %v3172 = vpop.f32.mrb[0].mxu0
        %v3173 = vadd.f32 %v3068, %v3172
        %v3174 = vpop.f32.mrb[0].mxu0
        %3175 = vmatprep.mubr.f32.mxu0 %v2558
        %3176 = vmatmul.mubr.f32.gmra.mrb[0].mxu0 %v2557
        %v3177 = vpop.f32.mrb[0].mxu0
        %v3178 = vadd.f32 %v3073, %v3177
        %v3179 = vpop.f32.mrb[0].mxu0
        %3180 = vdwg.mxu0
        %3181 = vmatprep.subr.mxu0 0.0
        %3182 = vmatpush1.msra.mxu0 %v2667
        %3183 = vmatprep.subr.mxu0 0.0
        %3184 = vmatpush1.msra.mxu0 %v2668
        %3185 = vmatprep.subr.mxu0 0.0
        %3186 = vmatpush1.msra.mxu0 %v2669
        %3187 = vmatprep.subr.mxu0 0.0
        %3188 = vmatpush1.msra.mxu0 %v2670
        %3189 = vmatprep.subr.mxu0 0.0
        %3190 = vmatpush1.msra.mxu0 %v2671
        %3191 = vmatprep.subr.mxu0 0.0
        %3192 = vmatpush1.msra.mxu0 %v2672
        %3193 = vmatprep.subr.mxu0 0.0
        %3194 = vmatpush1.msra.mxu0 %v2673
        %3195 = vmatprep.subr.mxu0 0.0
        %3196 = vmatpush1.msra.mxu0 %v2674
        %3197 = vmatprep.subr.mxu0 0.0
        %3198 = vmatpush1.msra.mxu0 %v2675
        %3199 = vmatprep.subr.mxu0 0.0
        %3200 = vmatpush1.msra.mxu0 %v2676
        %3201 = vmatprep.subr.mxu0 0.0
        %3202 = vmatpush1.msra.mxu0 %v2677
        %3203 = vmatprep.subr.mxu0 0.0
        %3204 = vmatpush1.msra.mxu0 %v2678
        %3205 = vmatprep.subr.mxu0 0.0
        %3206 = vmatpush1.msra.mxu0 %v2679
        %3207 = vmatprep.subr.mxu0 0.0
        %3208 = vmatpush1.msra.mxu0 %v2680
        %3209 = vmatprep.subr.mxu0 0.0
        %3210 = vmatpush1.msra.mxu0 %v2681
        %3211 = vmatprep.subr.mxu0 0.0
        %3212 = vmatpush1.msra.mxu0 %v2682
        %3213 = vmatprep.subr.mxu0 0.0
        %3214 = vmatpush1.msra.mxu0 %v2683
        %3215 = vmatprep.subr.mxu0 0.0
        %3216 = vmatpush1.msra.mxu0 %v2684
        %3217 = vmatprep.subr.mxu0 0.0
        %3218 = vmatpush1.msra.mxu0 %v2685
        %3219 = vmatprep.subr.mxu0 0.0
        %3220 = vmatpush1.msra.mxu0 %v2686
        %3221 = vmatprep.subr.mxu0 0.0
        %3222 = vmatpush1.msra.mxu0 %v2687
        %3223 = vmatprep.subr.mxu0 0.0
        %3224 = vmatpush1.msra.mxu0 %v2688
        %3225 = vmatprep.subr.mxu0 0.0
        %3226 = vmatpush1.msra.mxu0 %v2689
        %3227 = vmatprep.subr.mxu0 0.0
        %3228 = vmatpush1.msra.mxu0 %v2690
        %3229 = vmatprep.subr.mxu0 0.0
        %3230 = vmatpush1.msra.mxu0 %v2691
        %3231 = vmatprep.subr.mxu0 0.0
        %3232 = vmatpush1.msra.mxu0 %v2692
        %3233 = vmatprep.subr.mxu0 0.0
        %3234 = vmatpush1.msra.mxu0 %v2693
        %3235 = vmatprep.subr.mxu0 0.0
        %3236 = vmatpush1.msra.mxu0 %v2694
        %3237 = vmatprep.subr.mxu0 0.0
        %3238 = vmatpush1.msra.mxu0 %v2695
        %3239 = vmatprep.subr.mxu0 0.0
        %3240 = vmatpush1.msra.mxu0 %v2696
        %3241 = vmatprep.subr.mxu0 0.0
        %3242 = vmatpush1.msra.mxu0 %v2697
        %3243 = vmatprep.subr.mxu0 0.0
        %3244 = vmatpush1.msra.mxu0 %v2698
        %3245 = vmatprep.mubr.f32.mxu0 %v2434
        %3246 = vmatmul.mubr.f32.gmra.mrb[0].mxu0 %v2433
        %v3247 = vpop.f32.mrb[0].mxu0
        %v3248 = vadd.f32 %v3143, %v3247
        %v3249 = vpop.f32.mrb[0].mxu0
        %3250 = vmatprep.mubr.f32.mxu0 %v2452
        %3251 = vmatmul.mubr.f32.gmra.mrb[0].mxu0 %v2451
        %v3252 = vpop.f32.mrb[0].mxu0
        %v3253 = vadd.f32 %v3148, %v3252
        %v3254 = vpop.f32.mrb[0].mxu0
        %3255 = vmatprep.mubr.f32.mxu0 %v2470
        %3256 = vmatmul.mubr.f32.gmra.mrb[0].mxu0 %v2469
        %v3257 = vpop.f32.mrb[0].mxu0
        %v3258 = vadd.f32 %v3153, %v3257
        %v3259 = vpop.f32.mrb[0].mxu0
        %3260 = vmatprep.mubr.f32.mxu0 %v2488
        %3261 = vmatmul.mubr.f32.gmra.mrb[0].mxu0 %v2487
        %v3262 = vpop.f32.mrb[0].mxu0
        %v3263 = vadd.f32 %v3158, %v3262
        %v3264 = vpop.f32.mrb[0].mxu0
        %3265 = vmatprep.mubr.f32.mxu0 %v2506
        %3266 = vmatmul.mubr.f32.gmra.mrb[0].mxu0 %v2505
        %v3267 = vpop.f32.mrb[0].mxu0
        %v3268 = vadd.f32 %v3163, %v3267
        %v3269 = vpop.f32.mrb[0].mxu0
        %3270 = vmatprep.mubr.f32.mxu0 %v2524
        %3271 = vmatmul.mubr.f32.gmra.mrb[0].mxu0 %v2523
        %v3272 = vpop.f32.mrb[0].mxu0
        %v3273 = vadd.f32 %v3168, %v3272
        %v3274 = vpop.f32.mrb[0].mxu0
        %3275 = vmatprep.mubr.f32.mxu0 %v2542
        %3276 = vmatmul.mubr.f32.gmra.mrb[0].mxu0 %v2541
        %v3277 = vpop.f32.mrb[0].mxu0
        %v3278 = vadd.f32 %v3173, %v3277
        %v3279 = vpop.f32.mrb[0].mxu0
        %3280 = vmatprep.mubr.f32.mxu0 %v2560
        %3281 = vmatmul.mubr.f32.gmra.mrb[0].mxu0 %v2559
        %v3282 = vpop.f32.mrb[0].mxu0
        %v3283 = vadd.f32 %v3178, %v3282
        %v3284 = vpop.f32.mrb[0].mxu0
        %3285 = vdwg.mxu0
        %3286 = vmatprep.subr.mxu0 0.0
        %3287 = vmatpush1.msra.mxu0 %v2699
        %3288 = vmatprep.subr.mxu0 0.0
        %3289 = vmatpush1.msra.mxu0 %v2700
        %3290 = vmatprep.subr.mxu0 0.0
        %3291 = vmatpush1.msra.mxu0 %v2701
        %3292 = vmatprep.subr.mxu0 0.0
        %3293 = vmatpush1.msra.mxu0 %v2702
        %3294 = vmatprep.subr.mxu0 0.0
        %3295 = vmatpush1.msra.mxu0 %v2703
        %3296 = vmatprep.subr.mxu0 0.0
        %3297 = vmatpush1.msra.mxu0 %v2704
        %3298 = vmatprep.subr.mxu0 0.0
        %3299 = vmatpush1.msra.mxu0 %v2705
        %3300 = vmatprep.subr.mxu0 0.0
        %3301 = vmatpush1.msra.mxu0 %v2706
        %3302 = vmatprep.subr.mxu0 0.0
        %3303 = vmatpush1.msra.mxu0 %v2707
        %3304 = vmatprep.subr.mxu0 0.0
        %3305 = vmatpush1.msra.mxu0 %v2708
        %3306 = vmatprep.subr.mxu0 0.0
        %3307 = vmatpush1.msra.mxu0 %v2709
        %3308 = vmatprep.subr.mxu0 0.0
        %3309 = vmatpush1.msra.mxu0 %v2710
        %3310 = vmatprep.subr.mxu0 0.0
        %3311 = vmatpush1.msra.mxu0 %v2711
        %3312 = vmatprep.subr.mxu0 0.0
        %3313 = vmatpush1.msra.mxu0 %v2712
        %3314 = vmatprep.subr.mxu0 0.0
        %3315 = vmatpush1.msra.mxu0 %v2713
        %3316 = vmatprep.subr.mxu0 0.0
        %3317 = vmatpush1.msra.mxu0 %v2714
        %3318 = vmatprep.subr.mxu0 0.0
        %3319 = vmatpush1.msra.mxu0 %v2715
        %3320 = vmatprep.subr.mxu0 0.0
        %3321 = vmatpush1.msra.mxu0 %v2716
        %3322 = vmatprep.subr.mxu0 0.0
        %3323 = vmatpush1.msra.mxu0 %v2717
        %3324 = vmatprep.subr.mxu0 0.0
        %3325 = vmatpush1.msra.mxu0 %v2718
        %3326 = vmatprep.subr.mxu0 0.0
        %3327 = vmatpush1.msra.mxu0 %v2719
        %3328 = vmatprep.subr.mxu0 0.0
        %3329 = vmatpush1.msra.mxu0 %v2720
        %3330 = vmatprep.subr.mxu0 0.0
        %3331 = vmatpush1.msra.mxu0 %v2721
        %3332 = vmatprep.subr.mxu0 0.0
        %3333 = vmatpush1.msra.mxu0 %v2722
        %3334 = vmatprep.subr.mxu0 0.0
        %3335 = vmatpush1.msra.mxu0 %v2723
        %3336 = vmatprep.subr.mxu0 0.0
        %3337 = vmatpush1.msra.mxu0 %v2724
        %3338 = vmatprep.subr.mxu0 0.0
        %3339 = vmatpush1.msra.mxu0 %v2725
        %3340 = vmatprep.subr.mxu0 0.0
        %3341 = vmatpush1.msra.mxu0 %v2726
        %3342 = vmatprep.subr.mxu0 0.0
        %3343 = vmatpush1.msra.mxu0 %v2727
        %3344 = vmatprep.subr.mxu0 0.0
        %3345 = vmatpush1.msra.mxu0 %v2728
        %3346 = vmatprep.subr.mxu0 0.0
        %3347 = vmatpush1.msra.mxu0 %v2729
        %3348 = vmatprep.subr.mxu0 0.0
        %3349 = vmatpush1.msra.mxu0 %v2730
        %3350 = vmatprep.mubr.f32.mxu0 %v2436
        %3351 = vmatmul.mubr.f32.gmra.mrb[0].mxu0 %v2435
        %v3352 = vpop.f32.mrb[0].mxu0
        %v3353 = vadd.f32 %v3248, %v3352
        %v3354 = vpop.f32.mrb[0].mxu0
        %3355 = vmatprep.mubr.f32.mxu0 %v2454
        %3356 = vmatmul.mubr.f32.gmra.mrb[0].mxu0 %v2453
        %v3357 = vpop.f32.mrb[0].mxu0
        %v3358 = vadd.f32 %v3253, %v3357
        %v3359 = vpop.f32.mrb[0].mxu0
        %3360 = vmatprep.mubr.f32.mxu0 %v2472
        %3361 = vmatmul.mubr.f32.gmra.mrb[0].mxu0 %v2471
        %v3362 = vpop.f32.mrb[0].mxu0
        %v3363 = vadd.f32 %v3258, %v3362
        %v3364 = vpop.f32.mrb[0].mxu0
        %3365 = vmatprep.mubr.f32.mxu0 %v2490
        %3366 = vmatmul.mubr.f32.gmra.mrb[0].mxu0 %v2489
        %v3367 = vpop.f32.mrb[0].mxu0
        %v3368 = vadd.f32 %v3263, %v3367
        %v3369 = vpop.f32.mrb[0].mxu0
        %3370 = vmatprep.mubr.f32.mxu0 %v2508
        %3371 = vmatmul.mubr.f32.gmra.mrb[0].mxu0 %v2507
        %v3372 = vpop.f32.mrb[0].mxu0
        %v3373 = vadd.f32 %v3268, %v3372
        %v3374 = vpop.f32.mrb[0].mxu0
        %3375 = vmatprep.mubr.f32.mxu0 %v2526
        %3376 = vmatmul.mubr.f32.gmra.mrb[0].mxu0 %v2525
        %v3377 = vpop.f32.mrb[0].mxu0
        %v3378 = vadd.f32 %v3273, %v3377
        %v3379 = vpop.f32.mrb[0].mxu0
        %3380 = vmatprep.mubr.f32.mxu0 %v2544
        %3381 = vmatmul.mubr.f32.gmra.mrb[0].mxu0 %v2543
        %v3382 = vpop.f32.mrb[0].mxu0
        %v3383 = vadd.f32 %v3278, %v3382
        %v3384 = vpop.f32.mrb[0].mxu0
        %3385 = vmatprep.mubr.f32.mxu0 %v2562
        %3386 = vmatmul.mubr.f32.gmra.mrb[0].mxu0 %v2561
        %v3387 = vpop.f32.mrb[0].mxu0
        %v3388 = vadd.f32 %v3283, %v3387
        %v3389 = vpop.f32.mrb[0].mxu0
        %3390 = vdwg.mxu0
        %3391 = vmatprep.subr.mxu0 0.0
        %3392 = vmatpush1.msra.mxu0 %v2731
        %3393 = vmatprep.subr.mxu0 0.0
        %3394 = vmatpush1.msra.mxu0 %v2732
        %3395 = vmatprep.subr.mxu0 0.0
        %3396 = vmatpush1.msra.mxu0 %v2733
        %3397 = vmatprep.subr.mxu0 0.0
        %3398 = vmatpush1.msra.mxu0 %v2734
        %3399 = vmatprep.subr.mxu0 0.0
        %3400 = vmatpush1.msra.mxu0 %v2735
        %3401 = vmatprep.subr.mxu0 0.0
        %3402 = vmatpush1.msra.mxu0 %v2736
        %3403 = vmatprep.subr.mxu0 0.0
        %3404 = vmatpush1.msra.mxu0 %v2737
        %3405 = vmatprep.subr.mxu0 0.0
        %3406 = vmatpush1.msra.mxu0 %v2738
        %3407 = vmatprep.subr.mxu0 0.0
        %3408 = vmatpush1.msra.mxu0 %v2739
        %3409 = vmatprep.subr.mxu0 0.0
        %3410 = vmatpush1.msra.mxu0 %v2740
        %3411 = vmatprep.subr.mxu0 0.0
        %3412 = vmatpush1.msra.mxu0 %v2741
        %3413 = vmatprep.subr.mxu0 0.0
        %3414 = vmatpush1.msra.mxu0 %v2742
        %3415 = vmatprep.subr.mxu0 0.0
        %3416 = vmatpush1.msra.mxu0 %v2743
        %3417 = vmatprep.subr.mxu0 0.0
        %3418 = vmatpush1.msra.mxu0 %v2744
        %3419 = vmatprep.subr.mxu0 0.0
        %3420 = vmatpush1.msra.mxu0 %v2745
        %3421 = vmatprep.subr.mxu0 0.0
        %3422 = vmatpush1.msra.mxu0 %v2746
        %3423 = vmatprep.subr.mxu0 0.0
        %3424 = vmatpush1.msra.mxu0 %v2747
        %3425 = vmatprep.subr.mxu0 0.0
        %3426 = vmatpush1.msra.mxu0 %v2748
        %3427 = vmatprep.subr.mxu0 0.0
        %3428 = vmatpush1.msra.mxu0 %v2749
        %3429 = vmatprep.subr.mxu0 0.0
        %3430 = vmatpush1.msra.mxu0 %v2750
        %3431 = vmatprep.subr.mxu0 0.0
        %3432 = vmatpush1.msra.mxu0 %v2751
        %3433 = vmatprep.subr.mxu0 0.0
        %3434 = vmatpush1.msra.mxu0 %v2752
        %3435 = vmatprep.subr.mxu0 0.0
        %3436 = vmatpush1.msra.mxu0 %v2753
        %3437 = vmatprep.subr.mxu0 0.0
        %3438 = vmatpush1.msra.mxu0 %v2754
        %3439 = vmatprep.subr.mxu0 0.0
        %3440 = vmatpush1.msra.mxu0 %v2755
        %3441 = vmatprep.subr.mxu0 0.0
        %3442 = vmatpush1.msra.mxu0 %v2756
        %3443 = vmatprep.subr.mxu0 0.0
        %3444 = vmatpush1.msra.mxu0 %v2757
        %3445 = vmatprep.subr.mxu0 0.0
        %3446 = vmatpush1.msra.mxu0 %v2758
        %3447 = vmatprep.subr.mxu0 0.0
        %3448 = vmatpush1.msra.mxu0 %v2759
        %3449 = vmatprep.subr.mxu0 0.0
        %3450 = vmatpush1.msra.mxu0 %v2760
        %3451 = vmatprep.subr.mxu0 0.0
        %3452 = vmatpush1.msra.mxu0 %v2761
        %3453 = vmatprep.subr.mxu0 0.0
        %3454 = vmatpush1.msra.mxu0 %v2762
        %3455 = vmatprep.mubr.f32.mxu0 %v2438
        %3456 = vmatmul.mubr.f32.gmra.mrb[0].mxu0 %v2437
        %v3457 = vpop.f32.mrb[0].mxu0
        %v3458 = vadd.f32 %v3353, %v3457
        %v3459 = vpop.f32.mrb[0].mxu0
        %3460 = vmatprep.mubr.f32.mxu0 %v2456
        %3461 = vmatmul.mubr.f32.gmra.mrb[0].mxu0 %v2455
        %v3462 = vpop.f32.mrb[0].mxu0
        %v3463 = vadd.f32 %v3358, %v3462
        %v3464 = vpop.f32.mrb[0].mxu0
        %3465 = vmatprep.mubr.f32.mxu0 %v2474
        %3466 = vmatmul.mubr.f32.gmra.mrb[0].mxu0 %v2473
        %v3467 = vpop.f32.mrb[0].mxu0
        %v3468 = vadd.f32 %v3363, %v3467
        %v3469 = vpop.f32.mrb[0].mxu0
        %3470 = vmatprep.mubr.f32.mxu0 %v2492
        %3471 = vmatmul.mubr.f32.gmra.mrb[0].mxu0 %v2491
        %v3472 = vpop.f32.mrb[0].mxu0
        %v3473 = vadd.f32 %v3368, %v3472
        %v3474 = vpop.f32.mrb[0].mxu0
        %3475 = vmatprep.mubr.f32.mxu0 %v2510
        %3476 = vmatmul.mubr.f32.gmra.mrb[0].mxu0 %v2509
        %v3477 = vpop.f32.mrb[0].mxu0
        %v3478 = vadd.f32 %v3373, %v3477
        %v3479 = vpop.f32.mrb[0].mxu0
        %3480 = vmatprep.mubr.f32.mxu0 %v2528
        %3481 = vmatmul.mubr.f32.gmra.mrb[0].mxu0 %v2527
        %v3482 = vpop.f32.mrb[0].mxu0
        %v3483 = vadd.f32 %v3378, %v3482
        %v3484 = vpop.f32.mrb[0].mxu0
        %3485 = vmatprep.mubr.f32.mxu0 %v2546
        %3486 = vmatmul.mubr.f32.gmra.mrb[0].mxu0 %v2545
        %v3487 = vpop.f32.mrb[0].mxu0
        %v3488 = vadd.f32 %v3383, %v3487
        %v3489 = vpop.f32.mrb[0].mxu0
        %3490 = vmatprep.mubr.f32.mxu0 %v2564
        %3491 = vmatmul.mubr.f32.gmra.mrb[0].mxu0 %v2563
        %v3492 = vpop.f32.mrb[0].mxu0
        %v3493 = vadd.f32 %v3388, %v3492
        %v3494 = vpop.f32.mrb[0].mxu0
        %3495 = vdwg.mxu0
        %3496 = vmatprep.subr.mxu0 0.0
        %3497 = vmatpush1.msra.mxu0 %v2763
        %3498 = vmatprep.subr.mxu0 0.0
        %3499 = vmatpush1.msra.mxu0 %v2764
        %3500 = vmatprep.subr.mxu0 0.0
        %3501 = vmatpush1.msra.mxu0 %v2765
        %3502 = vmatprep.subr.mxu0 0.0
        %3503 = vmatpush1.msra.mxu0 %v2766
        %3504 = vmatprep.subr.mxu0 0.0
        %3505 = vmatpush1.msra.mxu0 %v2767
        %3506 = vmatprep.subr.mxu0 0.0
        %3507 = vmatpush1.msra.mxu0 %v2768
        %3508 = vmatprep.subr.mxu0 0.0
        %3509 = vmatpush1.msra.mxu0 %v2769
        %3510 = vmatprep.subr.mxu0 0.0
        %3511 = vmatpush1.msra.mxu0 %v2770
        %3512 = vmatprep.subr.mxu0 0.0
        %3513 = vmatpush1.msra.mxu0 %v2771
        %3514 = vmatprep.subr.mxu0 0.0
        %3515 = vmatpush1.msra.mxu0 %v2772
        %3516 = vmatprep.subr.mxu0 0.0
        %3517 = vmatpush1.msra.mxu0 %v2773
        %3518 = vmatprep.subr.mxu0 0.0
        %3519 = vmatpush1.msra.mxu0 %v2774
        %3520 = vmatprep.subr.mxu0 0.0
        %3521 = vmatpush1.msra.mxu0 %v2775
        %3522 = vmatprep.subr.mxu0 0.0
        %3523 = vmatpush1.msra.mxu0 %v2776
        %3524 = vmatprep.subr.mxu0 0.0
        %3525 = vmatpush1.msra.mxu0 %v2777
        %3526 = vmatprep.subr.mxu0 0.0
        %3527 = vmatpush1.msra.mxu0 %v2778
        %3528 = vmatprep.subr.mxu0 0.0
        %3529 = vmatpush1.msra.mxu0 %v2779
        %3530 = vmatprep.subr.mxu0 0.0
        %3531 = vmatpush1.msra.mxu0 %v2780
        %3532 = vmatprep.subr.mxu0 0.0
        %3533 = vmatpush1.msra.mxu0 %v2781
        %3534 = vmatprep.subr.mxu0 0.0
        %3535 = vmatpush1.msra.mxu0 %v2782
        %3536 = vmatprep.subr.mxu0 0.0
        %3537 = vmatpush1.msra.mxu0 %v2783
        %3538 = vmatprep.subr.mxu0 0.0
        %3539 = vmatpush1.msra.mxu0 %v2784
        %3540 = vmatprep.subr.mxu0 0.0
        %3541 = vmatpush1.msra.mxu0 %v2785
        %3542 = vmatprep.subr.mxu0 0.0
        %3543 = vmatpush1.msra.mxu0 %v2786
        %3544 = vmatprep.subr.mxu0 0.0
        %3545 = vmatpush1.msra.mxu0 %v2787
        %3546 = vmatprep.subr.mxu0 0.0
        %3547 = vmatpush1.msra.mxu0 %v2788
        %3548 = vmatprep.subr.mxu0 0.0
        %3549 = vmatpush1.msra.mxu0 %v2789
        %3550 = vmatprep.subr.mxu0 0.0
        %3551 = vmatpush1.msra.mxu0 %v2790
        %3552 = vmatprep.subr.mxu0 0.0
        %3553 = vmatpush1.msra.mxu0 %v2791
        %3554 = vmatprep.subr.mxu0 0.0
        %3555 = vmatpush1.msra.mxu0 %v2792
        %3556 = vmatprep.subr.mxu0 0.0
        %3557 = vmatpush1.msra.mxu0 %v2793
        %3558 = vmatprep.subr.mxu0 0.0
        %3559 = vmatpush1.msra.mxu0 %v2794
        %3560 = vmatprep.mubr.f32.mxu0 %v2440
        %3561 = vmatmul.mubr.f32.gmra.mrb[0].mxu0 %v2439
        %v3562 = vpop.f32.mrb[0].mxu0
        %v3563 = vadd.f32 %v3458, %v3562
        %v3564 = vpop.f32.mrb[0].mxu0
        %3565 = vmatprep.mubr.f32.mxu0 %v2458
        %3566 = vmatmul.mubr.f32.gmra.mrb[0].mxu0 %v2457
        %v3567 = vpop.f32.mrb[0].mxu0
        %v3568 = vadd.f32 %v3463, %v3567
        %v3569 = vpop.f32.mrb[0].mxu0
        %3570 = vmatprep.mubr.f32.mxu0 %v2476
        %3571 = vmatmul.mubr.f32.gmra.mrb[0].mxu0 %v2475
        %v3572 = vpop.f32.mrb[0].mxu0
        %v3573 = vadd.f32 %v3468, %v3572
        %v3574 = vpop.f32.mrb[0].mxu0
        %3575 = vmatprep.mubr.f32.mxu0 %v2494
        %3576 = vmatmul.mubr.f32.gmra.mrb[0].mxu0 %v2493
        %v3577 = vpop.f32.mrb[0].mxu0
        %v3578 = vadd.f32 %v3473, %v3577
        %v3579 = vpop.f32.mrb[0].mxu0
        %3580 = vmatprep.mubr.f32.mxu0 %v2512
        %3581 = vmatmul.mubr.f32.gmra.mrb[0].mxu0 %v2511
        %v3582 = vpop.f32.mrb[0].mxu0
        %v3583 = vadd.f32 %v3478, %v3582
        %v3584 = vpop.f32.mrb[0].mxu0
        %3585 = vmatprep.mubr.f32.mxu0 %v2530
        %3586 = vmatmul.mubr.f32.gmra.mrb[0].mxu0 %v2529
        %v3587 = vpop.f32.mrb[0].mxu0
        %v3588 = vadd.f32 %v3483, %v3587
        %v3589 = vpop.f32.mrb[0].mxu0
        %3590 = vmatprep.mubr.f32.mxu0 %v2548
        %3591 = vmatmul.mubr.f32.gmra.mrb[0].mxu0 %v2547
        %v3592 = vpop.f32.mrb[0].mxu0
        %v3593 = vadd.f32 %v3488, %v3592
        %v3594 = vpop.f32.mrb[0].mxu0
        %3595 = vmatprep.mubr.f32.mxu0 %v2566
        %3596 = vmatmul.mubr.f32.gmra.mrb[0].mxu0 %v2565
        %v3597 = vpop.f32.mrb[0].mxu0
        %v3598 = vadd.f32 %v3493, %v3597
        %v3599 = vpop.f32.mrb[0].mxu0
        %3600 = vdwg.mxu0
        %3601 = vmatprep.subr.mxu0 0.0
        %3602 = vmatpush1.msra.mxu0 %v2795
        %3603 = vmatprep.subr.mxu0 0.0
        %3604 = vmatpush1.msra.mxu0 %v2796
        %3605 = vmatprep.subr.mxu0 0.0
        %3606 = vmatpush1.msra.mxu0 %v2797
        %3607 = vmatprep.subr.mxu0 0.0
        %3608 = vmatpush1.msra.mxu0 %v2798
        %3609 = vmatprep.subr.mxu0 0.0
        %3610 = vmatpush1.msra.mxu0 %v2799
        %3611 = vmatprep.subr.mxu0 0.0
        %3612 = vmatpush1.msra.mxu0 %v2800
        %3613 = vmatprep.subr.mxu0 0.0
        %3614 = vmatpush1.msra.mxu0 %v2801
        %3615 = vmatprep.subr.mxu0 0.0
        %3616 = vmatpush1.msra.mxu0 %v2802
        %3617 = vmatprep.subr.mxu0 0.0
        %3618 = vmatpush1.msra.mxu0 %v2803
        %3619 = vmatprep.subr.mxu0 0.0
        %3620 = vmatpush1.msra.mxu0 %v2804
        %3621 = vmatprep.subr.mxu0 0.0
        %3622 = vmatpush1.msra.mxu0 %v2805
        %3623 = vmatprep.subr.mxu0 0.0
        %3624 = vmatpush1.msra.mxu0 %v2806
        %3625 = vmatprep.subr.mxu0 0.0
        %3626 = vmatpush1.msra.mxu0 %v2807
        %3627 = vmatprep.subr.mxu0 0.0
        %3628 = vmatpush1.msra.mxu0 %v2808
        %3629 = vmatprep.subr.mxu0 0.0
        %3630 = vmatpush1.msra.mxu0 %v2809
        %3631 = vmatprep.subr.mxu0 0.0
        %3632 = vmatpush1.msra.mxu0 %v2810
        %3633 = vmatprep.subr.mxu0 0.0
        %3634 = vmatpush1.msra.mxu0 %v2811
        %3635 = vmatprep.subr.mxu0 0.0
        %3636 = vmatpush1.msra.mxu0 %v2812
        %3637 = vmatprep.subr.mxu0 0.0
        %3638 = vmatpush1.msra.mxu0 %v2813
        %3639 = vmatprep.subr.mxu0 0.0
        %3640 = vmatpush1.msra.mxu0 %v2814
        %3641 = vmatprep.subr.mxu0 0.0
        %3642 = vmatpush1.msra.mxu0 %v2815
        %3643 = vmatprep.subr.mxu0 0.0
        %3644 = vmatpush1.msra.mxu0 %v2816
        %3645 = vmatprep.subr.mxu0 0.0
        %3646 = vmatpush1.msra.mxu0 %v2817
        %3647 = vmatprep.subr.mxu0 0.0
        %3648 = vmatpush1.msra.mxu0 %v2818
        %3649 = vmatprep.subr.mxu0 0.0
        %3650 = vmatpush1.msra.mxu0 %v2819
        %3651 = vmatprep.subr.mxu0 0.0
        %3652 = vmatpush1.msra.mxu0 %v2820
        %3653 = vmatprep.subr.mxu0 0.0
        %3654 = vmatpush1.msra.mxu0 %v2821
        %3655 = vmatprep.subr.mxu0 0.0
        %3656 = vmatpush1.msra.mxu0 %v2822
        %3657 = vmatprep.subr.mxu0 0.0
        %3658 = vmatpush1.msra.mxu0 %v2823
        %3659 = vmatprep.subr.mxu0 0.0
        %3660 = vmatpush1.msra.mxu0 %v2824
        %3661 = vmatprep.subr.mxu0 0.0
        %3662 = vmatpush1.msra.mxu0 %v2825
        %3663 = vmatprep.subr.mxu0 0.0
        %3664 = vmatpush1.msra.mxu0 %v2826
        %3665 = vmatprep.mubr.f32.mxu0 %v2442
        %3666 = vmatmul.mubr.f32.gmra.mrb[0].mxu0 %v2441
        %v3667 = vpop.f32.mrb[0].mxu0
        %v3668 = vadd.f32 %v3563, %v3667
        %v3669 = vpop.f32.mrb[0].mxu0
        %3670 = vmatprep.mubr.f32.mxu0 %v2460
        %3671 = vmatmul.mubr.f32.gmra.mrb[0].mxu0 %v2459
        %v3672 = vpop.f32.mrb[0].mxu0
        %v3673 = vadd.f32 %v3568, %v3672
        %v3674 = vpop.f32.mrb[0].mxu0
        %3675 = vmatprep.mubr.f32.mxu0 %v2478
        %3676 = vmatmul.mubr.f32.gmra.mrb[0].mxu0 %v2477
        %v3677 = vpop.f32.mrb[0].mxu0
        %v3678 = vadd.f32 %v3573, %v3677
        %v3679 = vpop.f32.mrb[0].mxu0
        %3680 = vmatprep.mubr.f32.mxu0 %v2496
        %3681 = vmatmul.mubr.f32.gmra.mrb[0].mxu0 %v2495
        %v3682 = vpop.f32.mrb[0].mxu0
        %v3683 = vadd.f32 %v3578, %v3682
        %v3684 = vpop.f32.mrb[0].mxu0
        %3685 = vmatprep.mubr.f32.mxu0 %v2514
        %3686 = vmatmul.mubr.f32.gmra.mrb[0].mxu0 %v2513
        %v3687 = vpop.f32.mrb[0].mxu0
        %v3688 = vadd.f32 %v3583, %v3687
        %v3689 = vpop.f32.mrb[0].mxu0
        %3690 = vmatprep.mubr.f32.mxu0 %v2532
        %3691 = vmatmul.mubr.f32.gmra.mrb[0].mxu0 %v2531
        %v3692 = vpop.f32.mrb[0].mxu0
        %v3693 = vadd.f32 %v3588, %v3692
        %v3694 = vpop.f32.mrb[0].mxu0
        %3695 = vmatprep.mubr.f32.mxu0 %v2550
        %3696 = vmatmul.mubr.f32.gmra.mrb[0].mxu0 %v2549
        %v3697 = vpop.f32.mrb[0].mxu0
        %v3698 = vadd.f32 %v3593, %v3697
        %v3699 = vpop.f32.mrb[0].mxu0
        %3700 = vmatprep.mubr.f32.mxu0 %v2568
        %3701 = vmatmul.mubr.f32.gmra.mrb[0].mxu0 %v2567
        %v3702 = vpop.f32.mrb[0].mxu0
        %v3703 = vadd.f32 %v3598, %v3702
        %v3704 = vpop.f32.mrb[0].mxu0
        %3705 = vdwg.mxu0
        %3706 = vmatprep.subr.mxu0 0.0
        %3707 = vmatpush1.msra.mxu0 %v2827
        %3708 = vmatprep.subr.mxu0 0.0
        %3709 = vmatpush1.msra.mxu0 %v2828
        %3710 = vmatprep.subr.mxu0 0.0
        %3711 = vmatpush1.msra.mxu0 %v2829
        %3712 = vmatprep.subr.mxu0 0.0
        %3713 = vmatpush1.msra.mxu0 %v2830
        %3714 = vmatprep.subr.mxu0 0.0
        %3715 = vmatpush1.msra.mxu0 %v2831
        %3716 = vmatprep.subr.mxu0 0.0
        %3717 = vmatpush1.msra.mxu0 %v2832
        %3718 = vmatprep.subr.mxu0 0.0
        %3719 = vmatpush1.msra.mxu0 %v2833
        %3720 = vmatprep.subr.mxu0 0.0
        %3721 = vmatpush1.msra.mxu0 %v2834
        %3722 = vmatprep.subr.mxu0 0.0
        %3723 = vmatpush1.msra.mxu0 %v2835
        %3724 = vmatprep.subr.mxu0 0.0
        %3725 = vmatpush1.msra.mxu0 %v2836
        %3726 = vmatprep.subr.mxu0 0.0
        %3727 = vmatpush1.msra.mxu0 %v2837
        %3728 = vmatprep.subr.mxu0 0.0
        %3729 = vmatpush1.msra.mxu0 %v2838
        %3730 = vmatprep.subr.mxu0 0.0
        %3731 = vmatpush1.msra.mxu0 %v2839
        %3732 = vmatprep.subr.mxu0 0.0
        %3733 = vmatpush1.msra.mxu0 %v2840
        %3734 = vmatprep.subr.mxu0 0.0
        %3735 = vmatpush1.msra.mxu0 %v2841
        %3736 = vmatprep.subr.mxu0 0.0
        %3737 = vmatpush1.msra.mxu0 %v2842
        %3738 = vmatprep.subr.mxu0 0.0
        %3739 = vmatpush1.msra.mxu0 %v2843
        %3740 = vmatprep.subr.mxu0 0.0
        %3741 = vmatpush1.msra.mxu0 %v2844
        %3742 = vmatprep.subr.mxu0 0.0
        %3743 = vmatpush1.msra.mxu0 %v2845
        %3744 = vmatprep.subr.mxu0 0.0
        %3745 = vmatpush1.msra.mxu0 %v2846
        %3746 = vmatprep.subr.mxu0 0.0
        %3747 = vmatpush1.msra.mxu0 %v2847
        %3748 = vmatprep.subr.mxu0 0.0
        %3749 = vmatpush1.msra.mxu0 %v2848
        %3750 = vmatprep.subr.mxu0 0.0
        %3751 = vmatpush1.msra.mxu0 %v2849
        %3752 = vmatprep.subr.mxu0 0.0
        %3753 = vmatpush1.msra.mxu0 %v2850
        %3754 = vmatprep.subr.mxu0 0.0
        %3755 = vmatpush1.msra.mxu0 %v2851
        %3756 = vmatprep.subr.mxu0 0.0
        %3757 = vmatpush1.msra.mxu0 %v2852
        %3758 = vmatprep.subr.mxu0 0.0
        %3759 = vmatpush1.msra.mxu0 %v2853
        %3760 = vmatprep.subr.mxu0 0.0
        %3761 = vmatpush1.msra.mxu0 %v2854
        %3762 = vmatprep.subr.mxu0 0.0
        %3763 = vmatpush1.msra.mxu0 %v2855
        %3764 = vmatprep.subr.mxu0 0.0
        %3765 = vmatpush1.msra.mxu0 %v2856
        %3766 = vmatprep.subr.mxu0 0.0
        %3767 = vmatpush1.msra.mxu0 %v2857
        %3768 = vmatprep.subr.mxu0 0.0
        %3769 = vmatpush1.msra.mxu0 %v2858
        %3770 = vmatprep.mubr.f32.mxu0 %v2444
        %3771 = vmatmul.mubr.f32.gmra.mrb[0].mxu0 %v2443
        %v3772 = vpop.f32.mrb[0].mxu0
        %v3773 = vadd.f32 %v3668, %v3772
        %v3774 = vpop.f32.mrb[0].mxu0
        %3775 = vmatprep.mubr.f32.mxu0 %v2462
        %3776 = vmatmul.mubr.f32.gmra.mrb[0].mxu0 %v2461
        %v3777 = vpop.f32.mrb[0].mxu0
        %v3778 = vadd.f32 %v3673, %v3777
        %v3779 = vpop.f32.mrb[0].mxu0
        %3780 = vmatprep.mubr.f32.mxu0 %v2480
        %3781 = vmatmul.mubr.f32.gmra.mrb[0].mxu0 %v2479
        %v3782 = vpop.f32.mrb[0].mxu0
        %v3783 = vadd.f32 %v3678, %v3782
        %v3784 = vpop.f32.mrb[0].mxu0
        %3785 = vmatprep.mubr.f32.mxu0 %v2498
        %3786 = vmatmul.mubr.f32.gmra.mrb[0].mxu0 %v2497
        %v3787 = vpop.f32.mrb[0].mxu0
        %v3788 = vadd.f32 %v3683, %v3787
        %v3789 = vpop.f32.mrb[0].mxu0
        %3790 = vmatprep.mubr.f32.mxu0 %v2516
        %3791 = vmatmul.mubr.f32.gmra.mrb[0].mxu0 %v2515
        %v3792 = vpop.f32.mrb[0].mxu0
        %v3793 = vadd.f32 %v3688, %v3792
        %v3794 = vpop.f32.mrb[0].mxu0
        %3795 = vmatprep.mubr.f32.mxu0 %v2534
        %3796 = vmatmul.mubr.f32.gmra.mrb[0].mxu0 %v2533
        %v3797 = vpop.f32.mrb[0].mxu0
        %v3798 = vadd.f32 %v3693, %v3797
        %v3799 = vpop.f32.mrb[0].mxu0
        %3800 = vmatprep.mubr.f32.mxu0 %v2552
        %3801 = vmatmul.mubr.f32.gmra.mrb[0].mxu0 %v2551
        %v3802 = vpop.f32.mrb[0].mxu0
        %v3803 = vadd.f32 %v3698, %v3802
        %v3804 = vpop.f32.mrb[0].mxu0
        %3805 = vmatprep.mubr.f32.mxu0 %v2570
        %3806 = vmatmul.mubr.f32.gmra.mrb[0].mxu0 %v2569
        %v3807 = vpop.f32.mrb[0].mxu0
        %v3808 = vadd.f32 %v3703, %v3807
        %v3809 = vpop.f32.mrb[0].mxu0
        %3810 = vdwg.mxu0
        %v3811 = vxor.u32 %v3773, 2147483648
        %v3812 = vxor.u32 %v3778, 2147483648
        %v3813 = vxor.u32 %v3783, 2147483648
        %v3814 = vxor.u32 %v3788, 2147483648
        %v3815 = vxor.u32 %v3793, 2147483648
        %v3816 = vxor.u32 %v3798, 2147483648
        %v3817 = vxor.u32 %v3803, 2147483648
        %v3818 = vxor.u32 %v3808, 2147483648
        %v3819 = vmul.f32 %v3811, 1.442695
        %v3820 = vpow.pop %v3819
        %v3821 = vmul.f32 %v3812, 1.442695
        %v3822 = vpow.pop %v3821
        %v3823 = vmul.f32 %v3813, 1.442695
        %v3824 = vpow.pop %v3823
        %v3825 = vmul.f32 %v3814, 1.442695
        %v3826 = vpow.pop %v3825
        %v3827 = vmul.f32 %v3815, 1.442695
        %v3828 = vpow.pop %v3827
        %v3829 = vmul.f32 %v3816, 1.442695
        %v3830 = vpow.pop %v3829
        %v3831 = vmul.f32 %v3817, 1.442695
        %v3832 = vpow.pop %v3831
        %v3833 = vmul.f32 %v3818, 1.442695
        %v3834 = vpow.pop %v3833
        %v3835 = vadd.f32 %v3820, 1.0
        %v3836 = vadd.f32 %v3822, 1.0
        %v3837 = vadd.f32 %v3824, 1.0
        %v3838 = vadd.f32 %v3826, 1.0
        %v3839 = vadd.f32 %v3828, 1.0
        %v3840 = vadd.f32 %v3830, 1.0
        %v3841 = vadd.f32 %v3832, 1.0
        %v3842 = vadd.f32 %v3834, 1.0
        %v3843 = vrcp.pop %v3835
        %v3844 = vmul.f32 1.0, %v3843
        %v3845 = vrcp.pop %v3836
        %v3846 = vmul.f32 1.0, %v3845
        %v3847 = vrcp.pop %v3837
        %v3848 = vmul.f32 1.0, %v3847
        %v3849 = vrcp.pop %v3838
        %v3850 = vmul.f32 1.0, %v3849
        %v3851 = vrcp.pop %v3839
        %v3852 = vmul.f32 1.0, %v3851
        %v3853 = vrcp.pop %v3840
        %v3854 = vmul.f32 1.0, %v3853
        %v3855 = vrcp.pop %v3841
        %v3856 = vmul.f32 1.0, %v3855
        %v3857 = vrcp.pop %v3842
        %v3858 = vmul.f32 1.0, %v3857
        %v3859 = vmul.f32 %v3773, %v3844
        %v3860 = vmul.f32 %v3778, %v3846
        %v3861 = vmul.f32 %v3783, %v3848
        %v3862 = vmul.f32 %v3788, %v3850
        %v3863 = vmul.f32 %v3793, %v3852
        %v3864 = vmul.f32 %v3798, %v3854
        %v3865 = vmul.f32 %v3803, %v3856
        %v3866 = vmul.f32 %v3808, %v3858
        %v3867 = vxor.u32 %v3859, 2147483648
        %v3868 = vxor.u32 %v3860, 2147483648
        %v3869 = vxor.u32 %v3861, 2147483648
        %v3870 = vxor.u32 %v3862, 2147483648
        %v3871 = vxor.u32 %v3863, 2147483648
        %v3872 = vxor.u32 %v3864, 2147483648
        %v3873 = vxor.u32 %v3865, 2147483648
        %v3874 = vxor.u32 %v3866, 2147483648
        %v3875 = vmul.f32 %v3867, 1.442695
        %v3876 = vpow.pop %v3875
        %v3877 = vmul.f32 %v3868, 1.442695
        %v3878 = vpow.pop %v3877
        %v3879 = vmul.f32 %v3869, 1.442695
        %v3880 = vpow.pop %v3879
        %v3881 = vmul.f32 %v3870, 1.442695
        %v3882 = vpow.pop %v3881
        %v3883 = vmul.f32 %v3871, 1.442695
        %v3884 = vpow.pop %v3883
        %v3885 = vmul.f32 %v3872, 1.442695
        %v3886 = vpow.pop %v3885
        %v3887 = vmul.f32 %v3873, 1.442695
        %v3888 = vpow.pop %v3887
        %v3889 = vmul.f32 %v3874, 1.442695
        %v3890 = vpow.pop %v3889
        %v3891 = vadd.f32 %v3876, 1.0
        %v3892 = vadd.f32 %v3878, 1.0
        %v3893 = vadd.f32 %v3880, 1.0
        %v3894 = vadd.f32 %v3882, 1.0
        %v3895 = vadd.f32 %v3884, 1.0
        %v3896 = vadd.f32 %v3886, 1.0
        %v3897 = vadd.f32 %v3888, 1.0
        %v3898 = vadd.f32 %v3890, 1.0
        %v3899 = vrcp.pop %v3891
        %v3900 = vmul.f32 1.0, %v3899
        %v3901 = vrcp.pop %v3892
        %v3902 = vmul.f32 1.0, %v3901
        %v3903 = vrcp.pop %v3893
        %v3904 = vmul.f32 1.0, %v3903
        %v3905 = vrcp.pop %v3894
        %v3906 = vmul.f32 1.0, %v3905
        %v3907 = vrcp.pop %v3895
        %v3908 = vmul.f32 1.0, %v3907
        %v3909 = vrcp.pop %v3896
        %v3910 = vmul.f32 1.0, %v3909
        %v3911 = vrcp.pop %v3897
        %v3912 = vmul.f32 1.0, %v3911
        %v3913 = vrcp.pop %v3898
        %v3914 = vmul.f32 1.0, %v3913
        %3923 = vrot.lane.b32.xlu0 %v3900, 72
        %v3924 = vpop.permute.xlu0 %3923
        %3925 = vrot.lane.b32.xlu0 %v3902, 72
        %v3926 = vpop.permute.xlu0 %3925
        %3927 = vrot.lane.b32.xlu0 %v3904, 72
        %v3928 = vpop.permute.xlu0 %3927
        %3929 = vrot.lane.b32.xlu0 %v3906, 72
        %v3930 = vpop.permute.xlu0 %3929
        %3931 = vrot.lane.b32.xlu0 %v3908, 72
        %v3932 = vpop.permute.xlu0 %3931
        %3933 = vrot.lane.b32.xlu0 %v3910, 72
        %v3934 = vpop.permute.xlu0 %3933
        %3935 = vrot.lane.b32.xlu0 %v3912, 72
        %v3936 = vpop.permute.xlu0 %3935
        %3937 = vrot.lane.b32.xlu0 %v3914, 72
        %v3938 = vpop.permute.xlu0 %3937
        %v3947 = vsel %vm785, %v3900, %v3924
        %v3948 = vsel %vm785, %v3902, %v3926
        %v3949 = vsel %vm785, %v3904, %v3928
        %v3950 = vsel %vm785, %v3906, %v3930
        %v3951 = vsel %vm785, %v3908, %v3932
        %v3952 = vsel %vm785, %v3910, %v3934
        %v3953 = vsel %vm785, %v3912, %v3936
        %v3954 = vsel %vm785, %v3914, %v3938
        %v3955 = vmul.f32 %v514, %v3947
        %v3956 = vmul.f32 %v516, %v3924
        %v3957 = vmul.f32 %v520, %v3948
        %v3958 = vmul.f32 %v522, %v3926
        %v3959 = vmul.f32 %v526, %v3949
        %v3960 = vmul.f32 %v528, %v3928
        %v3961 = vmul.f32 %v532, %v3950
        %v3962 = vmul.f32 %v534, %v3930
        %v3963 = vmul.f32 %v538, %v3951
        %v3964 = vmul.f32 %v540, %v3932
        %v3965 = vmul.f32 %v544, %v3952
        %v3966 = vmul.f32 %v546, %v3934
        %v3967 = vmul.f32 %v550, %v3953
        %v3968 = vmul.f32 %v552, %v3936
        %v3969 = vmul.f32 %v556, %v3954
        %v3970 = vmul.f32 %v558, %v3938
        %v3971 = vld [vmem:[#allocation7] sm:$0xff]
        %v3972 = vld [vmem:[#allocation7 + $0x8] sm:$0xff]
        %v3973 = vld [vmem:[#allocation7 + $0x10] sm:$0xff]
        %v3974 = vld [vmem:[#allocation7 + $0x18] sm:$0xff]
        %v3975 = vld [vmem:[#allocation7 + $0x20] sm:$0xff]
        %v3976 = vld [vmem:[#allocation7 + $0x28] sm:$0xff]
        %v3977 = vld [vmem:[#allocation7 + $0x30] sm:$0xff]
        %v3978 = vld [vmem:[#allocation7 + $0x38] sm:$0xff]
        %v3979 = vld [vmem:[#allocation7 + $0x40] sm:$0xff]
        %v3980 = vld [vmem:[#allocation7 + $0x48] sm:$0xff]
        %v3981 = vld [vmem:[#allocation7 + $0x50] sm:$0xff]
        %v3982 = vld [vmem:[#allocation7 + $0x58] sm:$0xff]
        %v3983 = vld [vmem:[#allocation7 + $0x60] sm:$0xff]
        %v3984 = vld [vmem:[#allocation7 + $0x68] sm:$0xff]
        %v3985 = vld [vmem:[#allocation7 + $0x70] sm:$0xff]
        %v3986 = vld [vmem:[#allocation7 + $0x78] sm:$0xff]
        %v3987 = vld [vmem:[#allocation7 + $0x80] sm:$0xff]
        %v3988 = vld [vmem:[#allocation7 + $0x88] sm:$0xff]
        %v3990 = vsel %vm794, %v3956, 0
        %v3993 = vsel %vm794, %v3958, 0
        %v3996 = vsel %vm794, %v3960, 0
        %v3999 = vsel %vm794, %v3962, 0
        %v4002 = vsel %vm794, %v3964, 0
        %v4005 = vsel %vm794, %v3966, 0
        %v4008 = vsel %vm794, %v3968, 0
        %v4011 = vsel %vm794, %v3970, 0
        %4013 = vmatprep.subr.mxu0 0.0
        %4014 = vmatpush1.msra.mxu0 %v3971
        %4015 = vmatprep.subr.mxu0 0.0
        %4016 = vmatpush1.msra.mxu0 %v3972
        %4017 = vmatprep.subr.mxu0 0.0
        %4018 = vmatpush1.msra.mxu0 %v3973
        %4019 = vmatprep.subr.mxu0 0.0
        %4020 = vmatpush1.msra.mxu0 %v3974
        %4021 = vmatprep.subr.mxu0 0.0
        %4022 = vmatpush1.msra.mxu0 %v3975
        %4023 = vmatprep.subr.mxu0 0.0
        %4024 = vmatpush1.msra.mxu0 %v3976
        %4025 = vmatprep.subr.mxu0 0.0
        %4026 = vmatpush1.msra.mxu0 %v3977
        %4027 = vmatprep.subr.mxu0 0.0
        %4028 = vmatpush1.msra.mxu0 %v3978
        %4029 = vmatprep.subr.mxu0 0.0
        %4030 = vmatpush1.msra.mxu0 %v3979
        %4031 = vmatprep.subr.mxu0 0.0
        %4032 = vmatpush1.msra.mxu0 %v3980
        %4033 = vmatprep.subr.mxu0 0.0
        %4034 = vmatpush1.msra.mxu0 %v3981
        %4035 = vmatprep.subr.mxu0 0.0
        %4036 = vmatpush1.msra.mxu0 %v3982
        %4037 = vmatprep.subr.mxu0 0.0
        %4038 = vmatpush1.msra.mxu0 %v3983
        %4039 = vmatprep.subr.mxu0 0.0
        %4040 = vmatpush1.msra.mxu0 %v3984
        %4041 = vmatprep.subr.mxu0 0.0
        %4042 = vmatpush1.msra.mxu0 %v3985
        %4043 = vmatprep.subr.mxu0 0.0
        %4044 = vmatpush1.msra.mxu0 %v3986
        %4045 = vmatprep.subr.mxu0 0.0
        %4046 = vmatpush1.msra.mxu0 %v3987
        %4047 = vmatprep.subr.mxu0 0.0
        %4048 = vmatpush1.msra.mxu0 %v3988
        %4049 = vmatprep.subr.mxu0 0.0
        %4050 = vmatpush1.msra.mxu0 0.0
        %4051 = vmatprep.subr.mxu0 0.0
        %4052 = vmatpush1.msra.mxu0 0.0
        %4053 = vmatprep.subr.mxu0 0.0
        %4054 = vmatpush1.msra.mxu0 0.0
        %4055 = vmatprep.subr.mxu0 0.0
        %4056 = vmatpush1.msra.mxu0 0.0
        %4057 = vmatprep.subr.mxu0 0.0
        %4058 = vmatpush1.msra.mxu0 0.0
        %4059 = vmatprep.subr.mxu0 0.0
        %4060 = vmatpush1.msra.mxu0 0.0
        %4061 = vmatprep.subr.mxu0 0.0
        %4062 = vmatpush1.msra.mxu0 0.0
        %4063 = vmatprep.subr.mxu0 0.0
        %4064 = vmatpush1.msra.mxu0 0.0
        %4065 = vmatprep.subr.mxu0 0.0
        %4066 = vmatpush1.msra.mxu0 0.0
        %4067 = vmatprep.subr.mxu0 0.0
        %4068 = vmatpush1.msra.mxu0 0.0
        %4069 = vmatprep.subr.mxu0 0.0
        %4070 = vmatpush1.msra.mxu0 0.0
        %4071 = vmatprep.subr.mxu0 0.0
        %4072 = vmatpush1.msra.mxu0 0.0
        %4073 = vmatprep.subr.mxu0 0.0
        %4074 = vmatpush1.msra.mxu0 0.0
        %4075 = vmatprep.subr.mxu0 0.0
        %4076 = vmatpush1.msra.mxu0 0.0
        %4077 = vmatprep.mubr.f32.mxu0 %v3990
        %4078 = vmatmul.mubr.f32.gmra.mrb[0].mxu0 %v3955
        %v4079 = vpop.f32.mrb[0].mxu0
        %v4080 = vadd.f32 %v407, %v4079
        %v4081 = vpop.f32.mrb[0].mxu0
        %4082 = vmatprep.mubr.f32.mxu0 %v3993
        %4083 = vmatmul.mubr.f32.gmra.mrb[0].mxu0 %v3957
        %v4084 = vpop.f32.mrb[0].mxu0
        %v4085 = vadd.f32 %v408, %v4084
        %v4086 = vpop.f32.mrb[0].mxu0
        %4087 = vmatprep.mubr.f32.mxu0 %v3996
        %4088 = vmatmul.mubr.f32.gmra.mrb[0].mxu0 %v3959
        %v4089 = vpop.f32.mrb[0].mxu0
        %v4090 = vadd.f32 %v409, %v4089
        %v4091 = vpop.f32.mrb[0].mxu0
        %4092 = vmatprep.mubr.f32.mxu0 %v3999
        %4093 = vmatmul.mubr.f32.gmra.mrb[0].mxu0 %v3961
        %v4094 = vpop.f32.mrb[0].mxu0
        %v4095 = vadd.f32 %v410, %v4094
        %v4096 = vpop.f32.mrb[0].mxu0
        %4097 = vmatprep.mubr.f32.mxu0 %v4002
        %4098 = vmatmul.mubr.f32.gmra.mrb[0].mxu0 %v3963
        %v4099 = vpop.f32.mrb[0].mxu0
        %v4100 = vadd.f32 %v411, %v4099
        %v4101 = vpop.f32.mrb[0].mxu0
        %4102 = vmatprep.mubr.f32.mxu0 %v4005
        %4103 = vmatmul.mubr.f32.gmra.mrb[0].mxu0 %v3965
        %v4104 = vpop.f32.mrb[0].mxu0
        %v4105 = vadd.f32 %v412, %v4104
        %v4106 = vpop.f32.mrb[0].mxu0
        %4107 = vmatprep.mubr.f32.mxu0 %v4008
        %4108 = vmatmul.mubr.f32.gmra.mrb[0].mxu0 %v3967
        %v4109 = vpop.f32.mrb[0].mxu0
        %v4110 = vadd.f32 %v413, %v4109
        %v4111 = vpop.f32.mrb[0].mxu0
        %4112 = vmatprep.mubr.f32.mxu0 %v4011
        %4113 = vmatmul.mubr.f32.gmra.mrb[0].mxu0 %v3969
        %v4114 = vpop.f32.mrb[0].mxu0
        %v4115 = vadd.f32 %v414, %v4114
        %v4116 = vpop.f32.mrb[0].mxu0
        %4117 = vdwg.mxu0
        %v4118 = vld [vmem:[%s7] sm:$0xff]
        %v4119 = vld [vmem:[%s7 + $0x8] sm:$0xff]
        %v4120 = vld [vmem:[%s7 + $0x10] sm:$0xff]
        %v4121 = vld [vmem:[%s7 + $0x18] sm:$0xff]
        %v4122 = vld [vmem:[%s7 + $0x20] sm:$0xff]
        %v4123 = vld [vmem:[%s7 + $0x28] sm:$0xff]
        %v4124 = vld [vmem:[%s7 + $0x30] sm:$0xff]
        %v4125 = vld [vmem:[%s7 + $0x38] sm:$0xff]
        %v4126 = vld [vmem:[%s7 + $0x40] sm:$0xff]
        %v4127 = vld [vmem:[%s7 + $0x48] sm:$0xff]
        %v4128 = vld [vmem:[%s7 + $0x50] sm:$0xff]
        %v4129 = vld [vmem:[%s7 + $0x58] sm:$0xff]
        %v4130 = vld [vmem:[%s7 + $0x60] sm:$0xff]
        %v4131 = vld [vmem:[%s7 + $0x68] sm:$0xff]
        %v4132 = vld [vmem:[%s7 + $0x70] sm:$0xff]
        %v4133 = vld [vmem:[%s7 + $0x78] sm:$0xff]
        %4134 = vmatprep.subr.mxu0 0.0
        %4135 = vmatpush1.msra.mxu0 %v4118
        %4136 = vmatprep.subr.mxu0 0.0
        %4137 = vmatpush1.msra.mxu0 %v4119
        %4138 = vmatprep.subr.mxu0 0.0
        %4139 = vmatpush1.msra.mxu0 %v4120
        %4140 = vmatprep.subr.mxu0 0.0
        %4141 = vmatpush1.msra.mxu0 %v4121
        %4142 = vmatprep.subr.mxu0 0.0
        %4143 = vmatpush1.msra.mxu0 %v4122
        %4144 = vmatprep.subr.mxu0 0.0
        %4145 = vmatpush1.msra.mxu0 %v4123
        %4146 = vmatprep.subr.mxu0 0.0
        %4147 = vmatpush1.msra.mxu0 %v4124
        %4148 = vmatprep.subr.mxu0 0.0
        %4149 = vmatpush1.msra.mxu0 %v4125
        %4150 = vmatprep.subr.mxu0 0.0
        %4151 = vmatpush1.msra.mxu0 %v4126
        %4152 = vmatprep.subr.mxu0 0.0
        %4153 = vmatpush1.msra.mxu0 %v4127
        %4154 = vmatprep.subr.mxu0 0.0
        %4155 = vmatpush1.msra.mxu0 %v4128
        %4156 = vmatprep.subr.mxu0 0.0
        %4157 = vmatpush1.msra.mxu0 %v4129
        %4158 = vmatprep.subr.mxu0 0.0
        %4159 = vmatpush1.msra.mxu0 %v4130
        %4160 = vmatprep.subr.mxu0 0.0
        %4161 = vmatpush1.msra.mxu0 %v4131
        %4162 = vmatprep.subr.mxu0 0.0
        %4163 = vmatpush1.msra.mxu0 %v4132
        %4164 = vmatprep.subr.mxu0 0.0
        %4165 = vmatpush1.msra.mxu0 %v4133
        %4166 = vmatprep.subr.mxu0 0.0
        %4167 = vmatpush1.msra.mxu0 0.0
        %4168 = vmatprep.subr.mxu0 0.0
        %4169 = vmatpush1.msra.mxu0 0.0
        %4170 = vmatprep.subr.mxu0 0.0
        %4171 = vmatpush1.msra.mxu0 0.0
        %4172 = vmatprep.subr.mxu0 0.0
        %4173 = vmatpush1.msra.mxu0 0.0
        %4174 = vmatprep.subr.mxu0 0.0
        %4175 = vmatpush1.msra.mxu0 0.0
        %4176 = vmatprep.subr.mxu0 0.0
        %4177 = vmatpush1.msra.mxu0 0.0
        %4178 = vmatprep.subr.mxu0 0.0
        %4179 = vmatpush1.msra.mxu0 0.0
        %4180 = vmatprep.subr.mxu0 0.0
        %4181 = vmatpush1.msra.mxu0 0.0
        %4182 = vmatprep.subr.mxu0 0.0
        %4183 = vmatpush1.msra.mxu0 0.0
        %4184 = vmatprep.subr.mxu0 0.0
        %4185 = vmatpush1.msra.mxu0 0.0
        %4186 = vmatprep.subr.mxu0 0.0
        %4187 = vmatpush1.msra.mxu0 0.0
        %4188 = vmatprep.subr.mxu0 0.0
        %4189 = vmatpush1.msra.mxu0 0.0
        %4190 = vmatprep.subr.mxu0 0.0
        %4191 = vmatpush1.msra.mxu0 0.0
        %4192 = vmatprep.subr.mxu0 0.0
        %4193 = vmatpush1.msra.mxu0 0.0
        %4194 = vmatprep.subr.mxu0 0.0
        %4195 = vmatpush1.msra.mxu0 0.0
        %4196 = vmatprep.subr.mxu0 0.0
        %4197 = vmatpush1.msra.mxu0 0.0
        %4198 = vmatprep.mubr.f32.mxu0 0.0
        %4199 = vmatmul.mubr.f32.gmra.mrb[0].mxu0 %v4080
        %v4200 = vpop.f32.mrb[0].mxu0
        %v4201 = vadd.f32 0.0, %v4200
        %v4202 = vpop.f32.mrb[0].mxu0
        %4203 = vmatprep.mubr.f32.mxu0 0.0
        %4204 = vmatmul.mubr.f32.gmra.mrb[0].mxu0 %v4085
        %v4205 = vpop.f32.mrb[0].mxu0
        %v4206 = vadd.f32 0.0, %v4205
        %v4207 = vpop.f32.mrb[0].mxu0
        %4208 = vmatprep.mubr.f32.mxu0 0.0
        %4209 = vmatmul.mubr.f32.gmra.mrb[0].mxu0 %v4090
        %v4210 = vpop.f32.mrb[0].mxu0
        %v4211 = vadd.f32 0.0, %v4210
        %v4212 = vpop.f32.mrb[0].mxu0
        %4213 = vmatprep.mubr.f32.mxu0 0.0
        %4214 = vmatmul.mubr.f32.gmra.mrb[0].mxu0 %v4095
        %v4215 = vpop.f32.mrb[0].mxu0
        %v4216 = vadd.f32 0.0, %v4215
        %v4217 = vpop.f32.mrb[0].mxu0
        %4218 = vmatprep.mubr.f32.mxu0 0.0
        %4219 = vmatmul.mubr.f32.gmra.mrb[0].mxu0 %v4100
        %v4220 = vpop.f32.mrb[0].mxu0
        %v4221 = vadd.f32 0.0, %v4220
        %v4222 = vpop.f32.mrb[0].mxu0
        %4223 = vmatprep.mubr.f32.mxu0 0.0
        %4224 = vmatmul.mubr.f32.gmra.mrb[0].mxu0 %v4105
        %v4225 = vpop.f32.mrb[0].mxu0
        %v4226 = vadd.f32 0.0, %v4225
        %v4227 = vpop.f32.mrb[0].mxu0
        %4228 = vmatprep.mubr.f32.mxu0 0.0
        %4229 = vmatmul.mubr.f32.gmra.mrb[0].mxu0 %v4110
        %v4230 = vpop.f32.mrb[0].mxu0
        %v4231 = vadd.f32 0.0, %v4230
        %v4232 = vpop.f32.mrb[0].mxu0
        %4233 = vmatprep.mubr.f32.mxu0 0.0
        %4234 = vmatmul.mubr.f32.gmra.mrb[0].mxu0 %v4115
        %v4235 = vpop.f32.mrb[0].mxu0
        %v4236 = vadd.f32 0.0, %v4235
        %v4237 = vpop.f32.mrb[0].mxu0
        %4238 = vdwg.mxu0
        %v4239 = vsub.f32 %v4080, %v4201
        %v4240 = vsub.f32 %v4085, %v4206
        %v4241 = vsub.f32 %v4090, %v4211
        %v4242 = vsub.f32 %v4095, %v4216
        %v4243 = vsub.f32 %v4100, %v4221
        %v4244 = vsub.f32 %v4105, %v4226
        %v4245 = vsub.f32 %v4110, %v4231
        %v4246 = vsub.f32 %v4115, %v4236
        %v4247 = vmul.f32 %v4239, %v4239
        %v4248 = vmul.f32 %v4240, %v4240
        %v4249 = vmul.f32 %v4241, %v4241
        %v4250 = vmul.f32 %v4242, %v4242
        %v4251 = vmul.f32 %v4243, %v4243
        %v4252 = vmul.f32 %v4244, %v4244
        %v4253 = vmul.f32 %v4245, %v4245
        %v4254 = vmul.f32 %v4246, %v4246
        %4255 = vmatprep.subr.mxu0 0.0
        %4256 = vmatpush1.msra.mxu0 %v4118
        %4257 = vmatprep.subr.mxu0 0.0
        %4258 = vmatpush1.msra.mxu0 %v4119
        %4259 = vmatprep.subr.mxu0 0.0
        %4260 = vmatpush1.msra.mxu0 %v4120
        %4261 = vmatprep.subr.mxu0 0.0
        %4262 = vmatpush1.msra.mxu0 %v4121
        %4263 = vmatprep.subr.mxu0 0.0
        %4264 = vmatpush1.msra.mxu0 %v4122
        %4265 = vmatprep.subr.mxu0 0.0
        %4266 = vmatpush1.msra.mxu0 %v4123
        %4267 = vmatprep.subr.mxu0 0.0
        %4268 = vmatpush1.msra.mxu0 %v4124
        %4269 = vmatprep.subr.mxu0 0.0
        %4270 = vmatpush1.msra.mxu0 %v4125
        %4271 = vmatprep.subr.mxu0 0.0
        %4272 = vmatpush1.msra.mxu0 %v4126
        %4273 = vmatprep.subr.mxu0 0.0
        %4274 = vmatpush1.msra.mxu0 %v4127
        %4275 = vmatprep.subr.mxu0 0.0
        %4276 = vmatpush1.msra.mxu0 %v4128
        %4277 = vmatprep.subr.mxu0 0.0
        %4278 = vmatpush1.msra.mxu0 %v4129
        %4279 = vmatprep.subr.mxu0 0.0
        %4280 = vmatpush1.msra.mxu0 %v4130
        %4281 = vmatprep.subr.mxu0 0.0
        %4282 = vmatpush1.msra.mxu0 %v4131
        %4283 = vmatprep.subr.mxu0 0.0
        %4284 = vmatpush1.msra.mxu0 %v4132
        %4285 = vmatprep.subr.mxu0 0.0
        %4286 = vmatpush1.msra.mxu0 %v4133
        %4287 = vmatprep.subr.mxu0 0.0
        %4288 = vmatpush1.msra.mxu0 0.0
        %4289 = vmatprep.subr.mxu0 0.0
        %4290 = vmatpush1.msra.mxu0 0.0
        %4291 = vmatprep.subr.mxu0 0.0
        %4292 = vmatpush1.msra.mxu0 0.0
        %4293 = vmatprep.subr.mxu0 0.0
        %4294 = vmatpush1.msra.mxu0 0.0
        %4295 = vmatprep.subr.mxu0 0.0
        %4296 = vmatpush1.msra.mxu0 0.0
        %4297 = vmatprep.subr.mxu0 0.0
        %4298 = vmatpush1.msra.mxu0 0.0
        %4299 = vmatprep.subr.mxu0 0.0
        %4300 = vmatpush1.msra.mxu0 0.0
        %4301 = vmatprep.subr.mxu0 0.0
        %4302 = vmatpush1.msra.mxu0 0.0
        %4303 = vmatprep.subr.mxu0 0.0
        %4304 = vmatpush1.msra.mxu0 0.0
        %4305 = vmatprep.subr.mxu0 0.0
        %4306 = vmatpush1.msra.mxu0 0.0
        %4307 = vmatprep.subr.mxu0 0.0
        %4308 = vmatpush1.msra.mxu0 0.0
        %4309 = vmatprep.subr.mxu0 0.0
        %4310 = vmatpush1.msra.mxu0 0.0
        %4311 = vmatprep.subr.mxu0 0.0
        %4312 = vmatpush1.msra.mxu0 0.0
        %4313 = vmatprep.subr.mxu0 0.0
        %4314 = vmatpush1.msra.mxu0 0.0
        %4315 = vmatprep.subr.mxu0 0.0
        %4316 = vmatpush1.msra.mxu0 0.0
        %4317 = vmatprep.subr.mxu0 0.0
        %4318 = vmatpush1.msra.mxu0 0.0
        %4319 = vmatprep.mubr.f32.mxu0 0.0
        %4320 = vmatmul.mubr.f32.gmra.mrb[0].mxu0 %v4247
        %v4321 = vpop.f32.mrb[0].mxu0
        %v4322 = vadd.f32 1e-05, %v4321
        %v4323 = vpop.f32.mrb[0].mxu0
        %4324 = vmatprep.mubr.f32.mxu0 0.0
        %4325 = vmatmul.mubr.f32.gmra.mrb[0].mxu0 %v4248
        %v4326 = vpop.f32.mrb[0].mxu0
        %v4327 = vadd.f32 1e-05, %v4326
        %v4328 = vpop.f32.mrb[0].mxu0
        %4329 = vmatprep.mubr.f32.mxu0 0.0
        %4330 = vmatmul.mubr.f32.gmra.mrb[0].mxu0 %v4249
        %v4331 = vpop.f32.mrb[0].mxu0
        %v4332 = vadd.f32 1e-05, %v4331
        %v4333 = vpop.f32.mrb[0].mxu0
        %4334 = vmatprep.mubr.f32.mxu0 0.0
        %4335 = vmatmul.mubr.f32.gmra.mrb[0].mxu0 %v4250
        %v4336 = vpop.f32.mrb[0].mxu0
        %v4337 = vadd.f32 1e-05, %v4336
        %v4338 = vpop.f32.mrb[0].mxu0
        %4339 = vmatprep.mubr.f32.mxu0 0.0
        %4340 = vmatmul.mubr.f32.gmra.mrb[0].mxu0 %v4251
        %v4341 = vpop.f32.mrb[0].mxu0
        %v4342 = vadd.f32 1e-05, %v4341
        %v4343 = vpop.f32.mrb[0].mxu0
        %4344 = vmatprep.mubr.f32.mxu0 0.0
        %4345 = vmatmul.mubr.f32.gmra.mrb[0].mxu0 %v4252
        %v4346 = vpop.f32.mrb[0].mxu0
        %v4347 = vadd.f32 1e-05, %v4346
        %v4348 = vpop.f32.mrb[0].mxu0
        %4349 = vmatprep.mubr.f32.mxu0 0.0
        %4350 = vmatmul.mubr.f32.gmra.mrb[0].mxu0 %v4253
        %v4351 = vpop.f32.mrb[0].mxu0
        %v4352 = vadd.f32 1e-05, %v4351
        %v4353 = vpop.f32.mrb[0].mxu0
        %4354 = vmatprep.mubr.f32.mxu0 0.0
        %4355 = vmatmul.mubr.f32.gmra.mrb[0].mxu0 %v4254
        %v4356 = vpop.f32.mrb[0].mxu0
        %v4357 = vadd.f32 1e-05, %v4356
        %v4358 = vpop.f32.mrb[0].mxu0
        %4359 = vdwg.mxu0
        %v4360 = vrsqrt.pop %v4322
        %v4361 = vrsqrt.pop %v4327
        %v4362 = vrsqrt.pop %v4332
        %v4363 = vrsqrt.pop %v4337
        %v4364 = vrsqrt.pop %v4342
        %v4365 = vrsqrt.pop %v4347
        %v4366 = vrsqrt.pop %v4352
        %v4367 = vrsqrt.pop %v4357
        %v4368 = vmul.f32 %v4239, %v4360
        %v4369 = vmul.f32 %v4240, %v4361
        %v4370 = vmul.f32 %v4241, %v4362
        %v4371 = vmul.f32 %v4242, %v4363
        %v4372 = vmul.f32 %v4243, %v4364
        %v4373 = vmul.f32 %v4244, %v4365
        %v4374 = vmul.f32 %v4245, %v4366
        %v4375 = vmul.f32 %v4246, %v4367
        %v4376 = vld [vmem:[%s8] sm:$0x1]
        %v4378 = vlaneseq
        %v4379 = vshrl.u32 %v4378, 7
        %v4380 = vsub.s32 0, %v4379
        %v4381 = vrot.slane %v4376, %v4380
        %v4383 = vmul.f32 %v4368, %v4381
        %v4384 = vmul.f32 %v4369, %v4381
        %v4385 = vmul.f32 %v4370, %v4381
        %v4386 = vmul.f32 %v4371, %v4381
        %v4387 = vmul.f32 %v4372, %v4381
        %v4388 = vmul.f32 %v4373, %v4381
        %v4389 = vmul.f32 %v4374, %v4381
        %v4390 = vmul.f32 %v4375, %v4381
        %v4391 = vld [vmem:[%s9] sm:$0x1]
        %v4393 = vlaneseq
        %v4394 = vshrl.u32 %v4393, 7
        %v4395 = vsub.s32 0, %v4394
        %v4396 = vrot.slane %v4391, %v4395
        %v4398 = vadd.f32 %v4383, %v4396
        %v4399 = vadd.f32 %v4384, %v4396
        %v4400 = vadd.f32 %v4385, %v4396
        %v4401 = vadd.f32 %v4386, %v4396
        %v4402 = vadd.f32 %v4387, %v4396
        %v4403 = vadd.f32 %v4388, %v4396
        %v4404 = vadd.f32 %v4389, %v4396
        %v4405 = vadd.f32 %v4390, %v4396
        %4406 = vst [vmem:[%s404] sm:$0xff] %v4398
        %4407 = vst [vmem:[%s404 + $0x8] sm:$0xff] %v4399
        %4408 = vst [vmem:[%s404 + $0x10] sm:$0xff] %v4400
        %4409 = vst [vmem:[%s404 + $0x18] sm:$0xff] %v4401
        %4410 = vst [vmem:[%s404 + $0x20] sm:$0xff] %v4402
        %4411 = vst [vmem:[%s404 + $0x28] sm:$0xff] %v4403
        %4412 = vst [vmem:[%s404 + $0x30] sm:$0xff] %v4404
        %4413 = vst [vmem:[%s404 + $0x38] sm:$0xff] %v4405
        %s4414 = sand.u32 %s251, 1
        %s4415 = scalar_lea.sflag [#allocation4], %s4414
        %s4416 = sand.u32 %s251, 1
        %s4417 = smul.addr %s4416, 64
        %s4418 = scalar_lea.vmem [#allocation8], %s4417
        // Predicated region
        $region73: #{tpu_custom_call.1} parent=59 // pred_check
          %p4419 = pneg %p261
        $region74: #{tpu_custom_call.1} parent=59 // pred_check_branch
          %4421 = sbr.rel (%p4419) target = $region76
        $region75: #{tpu_custom_call.1} parent=59 // pred_region
          %s4422 = smul.u32 8, %s28
          %s4424 = ssub.s32 1024, 1024
          %4425 = vsyncadd %s4415, %s4424
          %s4426 = smul.addr %s4422, 128
          %s4427 = scalar_lea.hbm %s10, %s4426
          %s4428 = sshll.u32 %s4418, 4
          %s4429 = int_to_ptr.vmem [resolvable:$true] %s4428
          %4434 = dma.vmem_to_hbm [thread:$0]  %s4429, 1024, %s4427, %s4415, 128, 128, 8
        $region76: #{tpu_custom_call.1} parent=59 // pred_fallthru
          _
      $region60: #{tpu_custom_call.1} parent=5 // pred_fallthru
        _
      %p4435 = scmp.le.s32.totalorder 2, %s23
      // Predicated region
      $region77: #{tpu_custom_call.1} parent=5 // pred_check
        %p4436 = pneg %p4435
      $region78: #{tpu_custom_call.1} parent=5 // pred_check_branch
        %4438 = sbr.rel (%p4436) target = $region80
      $region79: #{tpu_custom_call.1} parent=5 // pred_region
        %s4439 = ssub.s32 %s23, 2
        // Predicated region
        $region81: #{tpu_custom_call.1} parent=79 // pred_check
          %p4440 = pneg %p267
        $region82: #{tpu_custom_call.1} parent=79 // pred_check_branch
          %4442 = sbr.rel (%p4440) target = $region84
        $region83: #{tpu_custom_call.1} parent=79 // pred_region
          %s4443 = sand.u32 %s252, 1
          %s4444 = scalar_lea.sflag [#allocation4], %s4443
          %s4445 = sand.u32 %s252, 1
          %s4446 = smul.addr %s4445, 64
          %s4447 = scalar_lea.vmem [#allocation8], %s4446
          %4448 = dma.done %s4444, 1024
        $region84: #{tpu_custom_call.1} parent=79 // pred_fallthru
          _
      $region80: #{tpu_custom_call.1} parent=5 // pred_fallthru
        _
    $region6: #{tpu_custom_call.1} parent=1 // loop_footer
      %s27 = sadd.s32 1, %s23
    $region7: #{tpu_custom_call.1} parent=1 // loop_footer_branch
      %22 = sbr.rel target = $region3
    $region8: #{tpu_custom_call.1} parent=1 // loop_exit
      _
    %4449 = vsyncpa [#allocation3], 1
    %s4450 = scalar_lea.sflag [#allocation3], 1
    %4451 = vsyncpa %s4450, 1
    %4452 = vsyncpa [#allocation6], 1
    %4453 = vsyncpa [#allocation4], 1
    %s4454 = scalar_lea.sflag [#allocation4], 1
    %4455 = vsyncpa %s4454, 1

</llo_original>
